<compile_context>
chip_gen: v5e
topology: v5e:2x2
jax: 0.10.0
libtpu: 0.0.40
codegen_flags: <defaults>
</compile_context>

<pallas_src>
import functools

import jax
import jax.numpy as jnp
import numpy as np
from jax.experimental import pallas as pl
from jax.experimental.pallas import tpu as pltpu


def _round_up(x, m):
    return (x + m - 1) // m * m


# ----------------------------------------------------------------------------- kernel
def _gfrl_nfm_kernel(D, FD,
                     emb_ref, linv_ref,
                     wcat_ref, bcat_ref, s2_ref,
                     w1_ref, b1_ref, w2_ref, b2_ref, w3_ref, b3_ref,
                     wo_ref, obias_ref,
                     out_ref):
    eb = emb_ref[...]                                                   # [TB, F*D] bf16

    # ---- fused global gate + block-diagonal local linear: one [TB,128]@[128,256] pass
    gcat = (jnp.dot(eb, wcat_ref[...], preferred_element_type=jnp.float32)
            + bcat_ref[...])                                            # [TB, 2*F*D] f32
    gate = jax.nn.sigmoid(gcat[:, :FD])                                 # [TB, F*D]
    loc = gcat[:, FD:]                                                  # [TB, F*D]
    v = loc * gate                                                      # gated embedding

    # ---- FM bi-interaction: fused field-sum of [v, v*v] via blockdiag(S,S), K=2*FD
    vv = jnp.concatenate([v, v * v], axis=1).astype(jnp.bfloat16)       # [TB, 2*F*D]
    ss = jnp.dot(vv, s2_ref[...], preferred_element_type=jnp.float32)   # [TB, 2*D]
    s = ss[:, :D]                                                       # sum_f v_f
    sq = ss[:, D:]                                                      # sum_f v_f^2
    x_fm = 0.5 * (s * s - sq)                                           # [TB, D]

    # ---- MLP (BatchNorm folded, Dropout = identity); hidden dims padded to 128-multiples
    h = jnp.maximum(jnp.dot(x_fm.astype(jnp.bfloat16), w1_ref[...],
                            preferred_element_type=jnp.float32) + b1_ref[...], 0.0)
    h = jnp.maximum(jnp.dot(h.astype(jnp.bfloat16), w2_ref[...],
                            preferred_element_type=jnp.float32) + b2_ref[...], 0.0)
    h = jnp.maximum(jnp.dot(h.astype(jnp.bfloat16), w3_ref[...],
                            preferred_element_type=jnp.float32) + b3_ref[...], 0.0)

    # ---- N=1 head: VPU multiply + lane reduce instead of an MXU weight pass
    mlp_out = jnp.sum(h * wo_ref[...], axis=-1, keepdims=True)          # [TB, 1]

    # ---- first-order linear term, all scalar biases folded into one add
    lin = jnp.sum(linv_ref[...], axis=1, keepdims=True)                 # [TB, 1]
    out_ref[...] = (lin + mlp_out + obias_ref[...]).astype(out_ref.dtype)


# ----------------------------------------------------------------------------- weight prep (once, at init)
def prepare_kernel_params(params, field_dims, embed_dim):
    """Hoisted out of the forward path: called ONCE, returns kernel-ready operands."""
    F = len(field_dims)
    D = embed_dim
    FD = F * D

    # block-diagonal local weight fused with the global gate weight -> one [FD, 2*FD] matmul
    wbd = jnp.zeros((FD, FD), jnp.float32)
    for f in range(F):
        wbd = wbd.at[f * D:(f + 1) * D, f * D:(f + 1) * D].set(params["wl"][f])
    wcat = jnp.concatenate([params["wg"], wbd], axis=1).astype(jnp.bfloat16)     # [FD, 2FD]
    bcat = jnp.concatenate([params["bg"], params["bl"].reshape(1, FD)], axis=1)  # [1, 2FD] f32

    # fused field-sum matrix for the bi-interaction: blockdiag(S, S), S = tile(eye(D), F)
    s_single = jnp.tile(jnp.eye(D, dtype=jnp.float32), (F, 1))                   # [FD, D]
    s2 = jnp.zeros((2 * FD, 2 * D), jnp.float32)
    s2 = s2.at[:FD, :D].set(s_single).at[FD:, D:].set(s_single)
    s2 = s2.astype(jnp.bfloat16)                                                 # [2FD, 2D]

    def pad_to(a, rows, cols):
        return jnp.pad(a, ((0, rows - a.shape[0]), (0, cols - a.shape[1])))

    h1, h2, h3 = params["w1"].shape[1], params["w2"].shape[1], params["w3"].shape[1]
    hp1, hp2, hp3 = (_round_up(h, 128) for h in (h1, h2, h3))
    w1 = pad_to(params["w1"], D, hp1).astype(jnp.bfloat16)
    b1 = pad_to(params["b1"], 1, hp1)
    w2 = pad_to(params["w2"], hp1, hp2).astype(jnp.bfloat16)
    b2 = pad_to(params["b2"], 1, hp2)
    w3 = pad_to(params["w3"], hp2, hp3).astype(jnp.bfloat16)
    b3 = pad_to(params["b3"], 1, hp3)
    wo_row = pad_to(params["wo"].T, 1, hp3)                 # [1, hp3] f32 (head as lane reduce)
    obias = params["lbias"] + params["bo"]                  # [1, 1]  f32 (lin bias + head bias)

    offsets = jnp.asarray(np.concatenate([[0], np.cumsum(field_dims)[:-1]]), jnp.int32)

    return dict(
        # gather tables (embedding table pre-cast to bf16: halves gather + kernel DMA bytes)
        emb_table=params["emb_table"].astype(jnp.bfloat16),
        lin_table=params["lin_table"],
        offsets=offsets,
        num_fields=F, embed_dim=D,
        # kernel-resident weights
        wcat=wcat, bcat=bcat, s2=s2,
        w1=w1, b1=b1, w2=w2, b2=b2, w3=w3, b3=b3,
        wo_row=wo_row, obias=obias,
    )


# ----------------------------------------------------------------------------- tiling
def _choose_tile_b(B, tile_b):
    if tile_b is None:
        tile_b = 512                     # big tile: amortize ~0.35us/step overhead
    tile_b = max(8, _round_up(min(tile_b, B), 8))
    # guarantee >= 2 grid steps when batch allows -> v7x megacore shards the batch axis
    if B >= 16:
        tile_b = min(tile_b, _round_up(pl.cdiv(B, 2), 8))
    return tile_b


# ----------------------------------------------------------------------------- wrapper
def gfrl_nfm_forward(x, kp, tile_b=None):
    F = kp["num_fields"]
    D = kp["embed_dim"]
    FD = F * D
    B = x.shape[0]

    tile_b = _choose_tile_b(B, tile_b)
    Bp = _round_up(B, tile_b)

    idx = x + kp["offsets"][None, :]                                    # [B, F]

    # glue: embedding gathers (kept in XLA; per-row DMA granularity would be poor)
    emb_flat = kp["emb_table"][idx].reshape(B, FD)                      # [B, F*D] bf16
    lin_vals = kp["lin_table"][idx][..., 0]                             # [B, F]   f32
    if Bp != B:
        emb_flat = jnp.pad(emb_flat, ((0, Bp - B), (0, 0)))
        lin_vals = jnp.pad(lin_vals, ((0, Bp - B), (0, 0)))

    weights = (kp["wcat"], kp["bcat"], kp["s2"],
               kp["w1"], kp["b1"], kp["w2"], kp["b2"], kp["w3"], kp["b3"],
               kp["wo_row"], kp["obias"])

    hp1, hp2, hp3 = kp["w1"].shape[1], kp["w2"].shape[1], kp["w3"].shape[1]
    flops_per_row = 2 * (FD * 2 * FD + 2 * FD * 2 * D + D * hp1
                         + hp1 * hp2 + hp2 * hp3 + hp3)
    weight_bytes = int(sum(int(np.prod(w.shape)) * w.dtype.itemsize for w in weights))
    cost = pl.CostEstimate(
        flops=int(Bp) * int(flops_per_row),
        transcendentals=int(Bp) * int(FD),
        bytes_accessed=int(Bp) * (FD * 2 + F * 4 + 4) + weight_bytes,
    )

    grid = (Bp // tile_b,)
    in_specs = (
        [pl.BlockSpec((tile_b, FD), lambda i: (i, 0)),      # activations: tiled over batch
         pl.BlockSpec((tile_b, F), lambda i: (i, 0))]
        # weights/biases: constant index_map -> resident across grid steps
        + [pl.BlockSpec(w.shape, lambda i: (0, 0)) for w in weights]
    )

    out = pl.pallas_call(
        functools.partial(_gfrl_nfm_kernel, D, FD),
        grid=grid,
        in_specs=in_specs,
        out_specs=pl.BlockSpec((tile_b, 1), lambda i: (i, 0)),
        out_shape=jax.ShapeDtypeStruct((Bp, 1), jnp.float32),
        compiler_params=pltpu.CompilerParams(dimension_semantics=("parallel",)),
        cost_estimate=cost,
    )(emb_flat, lin_vals, *weights)
    return out[:B]


# ----------------------------------------------------------------------------- reference
def reference_forward(x, params, field_dims, embed_dim):
    F = len(field_dims)
    D = embed_dim
    B = x.shape[0]
    offsets = jnp.asarray(np.concatenate([[0], np.cumsum(field_dims)[:-1]]), jnp.int32)
    idx = x + offsets[None, :]
    emb = params["emb_table"][idx]                                      # [B, F, D]
    e_flat = emb.reshape(B, F * D)
    gate = jax.nn.sigmoid(e_flat @ params["wg"] + params["bg"]).reshape(B, F, D)
    loc = jnp.einsum("bfd,fde->bfe", emb, params["wl"]) + params["bl"][None]
    v = loc * gate
    s = v.sum(axis=1)
    sq = (v * v).sum(axis=1)
    x_fm = 0.5 * (s * s - sq)
    h = jnp.maximum(x_fm @ params["w1"] + params["b1"], 0.0)
    h = jnp.maximum(h @ params["w2"] + params["b2"], 0.0)
    h = jnp.maximum(h @ params["w3"] + params["b3"], 0.0)
    mlp_out = h @ params["wo"] + params["bo"]
    lin = params["lin_table"][idx][..., 0].sum(axis=1, keepdims=True) + params["lbias"]
    return lin + mlp_out


# ----------------------------------------------------------------------------- params
def make_params(key, field_dims, embed_dim, mlp_layers):
    F = len(field_dims)
    V = int(sum(field_dims))
    D = embed_dim
    ks = jax.random.split(key, 16)

    def lin_init(k, fan_in, shape):
        return (jax.random.normal(k, shape, jnp.float32) / np.sqrt(fan_in)).astype(jnp.float32)

    p = {}
    p["emb_table"] = 0.1 * jax.random.normal(ks[0], (V, D), jnp.float32)
    p["lin_table"] = 0.1 * jax.random.normal(ks[1], (V, 1), jnp.float32)
    p["lbias"] = jnp.zeros((1, 1), jnp.float32)

    # GFRL: global linear over flattened embeddings + field-wise local linears
    p["wg"] = lin_init(ks[2], F * D, (F * D, F * D))
    p["bg"] = jnp.zeros((1, F * D), jnp.float32)
    p["wl"] = lin_init(ks[3], D, (F, D, D))
    p["bl"] = jnp.zeros((F, D), jnp.float32)

    # MLP (3 hidden layers + output head); fold eval-mode BatchNorm1d (mean=0, var=1)
    bn_scale = jnp.float32(1.0 / np.sqrt(1.0 + 1e-5))
    dims = [D] + list(mlp_layers)
    for i in range(3):
        w = lin_init(ks[4 + i], dims[i], (dims[i], dims[i + 1]))
        b = jnp.zeros((1, dims[i + 1]), jnp.float32)
        p[f"w{i + 1}"] = w * bn_scale
        p[f"b{i + 1}"] = b * bn_scale
    p["wo"] = lin_init(ks[7], dims[-1], (dims[-1], 1))
    p["bo"] = jnp.zeros((1, 1), jnp.float32)
    return p


# ----------------------------------------------------------------------------- main
if __name__ == "__main__":
    field_dims = (13, 7, 11, 19, 5, 17, 23, 29)     # 8 fields -> F*D = 128 (lane-dense)
    embed_dim = 16
    mlp_layers = (400, 400, 400)                    # module defaults (padded to 512 in-kernel)
    B = 40                                          # small demo batch; exercises grid + padding

    key = jax.random.PRNGKey(0)
    pkey, xkey = jax.random.split(key)
    params = make_params(pkey, field_dims, embed_dim, mlp_layers)
    kp = prepare_kernel_params(params, field_dims, embed_dim)   # once, at init (hoisted)

    xkeys = jax.random.split(xkey, len(field_dims))
    x = jnp.stack(
        [jax.random.randint(xkeys[f], (B,), 0, field_dims[f], jnp.int32)
         for f in range(len(field_dims))],
        axis=1,
    )                                               # [B, n_fields] int32

    ref = reference_forward(x, params, field_dims, embed_dim)

    # default tiling (tile_b=None -> 512 capped so grid has >= 2 steps): B=40 -> 2 steps
    out = jax.block_until_ready(gfrl_nfm_forward(x, kp))
    np.testing.assert_allclose(np.asarray(out), np.asarray(ref), rtol=1e-2, atol=1e-2)
    assert out.shape == (B, 1)

    # explicit small tile (grid of 3, padded batch 40 -> 48) to exercise padding path
    out2 = jax.block_until_ready(gfrl_nfm_forward(x, kp, tile_b=16))
    np.testing.assert_allclose(np.asarray(out2), np.asarray(ref), rtol=1e-2, atol=1e-2)

    print("KERNEL_OK")
</pallas_src>

<mosaic_0001>
module attributes {stable_mosaic.version = 11 : i64} {
  func.func @_gfrl_nfm_kernel(%arg0: i32, %arg1: memref<24x128xbf16, #tpu.memory_space<vmem>>, %arg2: memref<24x8xf32, #tpu.memory_space<vmem>>, %arg3: memref<128x256xbf16, #tpu.memory_space<vmem>>, %arg4: memref<1x256xf32, #tpu.memory_space<vmem>>, %arg5: memref<256x32xbf16, #tpu.memory_space<vmem>>, %arg6: memref<16x512xbf16, #tpu.memory_space<vmem>>, %arg7: memref<1x512xf32, #tpu.memory_space<vmem>>, %arg8: memref<512x512xbf16, #tpu.memory_space<vmem>>, %arg9: memref<1x512xf32, #tpu.memory_space<vmem>>, %arg10: memref<512x512xbf16, #tpu.memory_space<vmem>>, %arg11: memref<1x512xf32, #tpu.memory_space<vmem>>, %arg12: memref<1x512xf32, #tpu.memory_space<vmem>>, %arg13: memref<1x1xf32, #tpu.memory_space<vmem>>, %arg14: memref<24x1xf32, #tpu.memory_space<vmem>>) attributes {dimension_semantics = [#tpu.dimension_semantics<parallel>], iteration_bounds = array<i64: 2>, scalar_prefetch = 0 : i64, scratch_operands = 0 : i64, tpu.core_type = #tpu.core_type<tc>, window_params = [{transform_indices = @transform_0, window_bounds = array<i64: 24, 128>}, {transform_indices = @transform_1, window_bounds = array<i64: 24, 8>}, {pipeline_mode = #tpu.pipeline_mode<synchronous>, transform_indices = @transform_2, window_bounds = array<i64: 128, 256>}, {pipeline_mode = #tpu.pipeline_mode<synchronous>, transform_indices = @transform_3, window_bounds = array<i64: 1, 256>}, {pipeline_mode = #tpu.pipeline_mode<synchronous>, transform_indices = @transform_4, window_bounds = array<i64: 256, 32>}, {pipeline_mode = #tpu.pipeline_mode<synchronous>, transform_indices = @transform_5, window_bounds = array<i64: 16, 512>}, {pipeline_mode = #tpu.pipeline_mode<synchronous>, transform_indices = @transform_6, window_bounds = array<i64: 1, 512>}, {pipeline_mode = #tpu.pipeline_mode<synchronous>, transform_indices = @transform_7, window_bounds = array<i64: 512, 512>}, {pipeline_mode = #tpu.pipeline_mode<synchronous>, transform_indices = @transform_8, window_bounds = array<i64: 1, 512>}, {pipeline_mode = #tpu.pipeline_mode<synchronous>, transform_indices = @transform_9, window_bounds = array<i64: 512, 512>}, {pipeline_mode = #tpu.pipeline_mode<synchronous>, transform_indices = @transform_10, window_bounds = array<i64: 1, 512>}, {pipeline_mode = #tpu.pipeline_mode<synchronous>, transform_indices = @transform_11, window_bounds = array<i64: 1, 512>}, {pipeline_mode = #tpu.pipeline_mode<synchronous>, transform_indices = @transform_12, window_bounds = array<i64: 1, 1>}, {transform_indices = @transform_13, window_bounds = array<i64: 24, 1>}]} {
    %c0 = arith.constant 0 : index
    %c0_0 = arith.constant 0 : index
    %0 = vector.load %arg1[%c0, %c0_0] : memref<24x128xbf16, #tpu.memory_space<vmem>>, vector<24x128xbf16>
    %c0_1 = arith.constant 0 : index
    %c0_2 = arith.constant 0 : index
    %1 = vector.load %arg3[%c0_1, %c0_2] : memref<128x256xbf16, #tpu.memory_space<vmem>>, vector<128x256xbf16>
    %cst = arith.constant dense<0.000000e+00> : vector<24x256xf32>
    %2 = tpu.matmul %0, %1, %cst {dimension_numbers = #tpu.dot_dimension_numbers<[1], [0], [0], [1], [0, 0, 1, 1], [], []>} : vector<24x128xbf16>, vector<128x256xbf16>, vector<24x256xf32> -> vector<24x256xf32>
    %c0_3 = arith.constant 0 : index
    %c0_4 = arith.constant 0 : index
    %3 = vector.load %arg4[%c0_3, %c0_4] : memref<1x256xf32, #tpu.memory_space<vmem>>, vector<1x256xf32>
    %4 = vector.broadcast %3 : vector<1x256xf32> to vector<24x256xf32>
    %5 = arith.addf %2, %4 : vector<24x256xf32>
    %6 = vector.extract_strided_slice %5 {offsets = [0, 0], sizes = [24, 128], strides = [1, 1]} : vector<24x256xf32> to vector<24x128xf32>
    %7 = arith.negf %6 : vector<24x128xf32>
    %8 = math.exp %7 : vector<24x128xf32>
    %cst_5 = arith.constant 1.000000e+00 : f32
    %9 = vector.broadcast %cst_5 : f32 to vector<24x128xf32>
    %10 = arith.addf %9, %8 : vector<24x128xf32>
    %11 = arith.divf %9, %10 : vector<24x128xf32>
    %12 = vector.extract_strided_slice %5 {offsets = [0, 128], sizes = [24, 128], strides = [1, 1]} : vector<24x256xf32> to vector<24x128xf32>
    %13 = arith.mulf %12, %11 : vector<24x128xf32>
    %14 = arith.mulf %13, %13 : vector<24x128xf32>
    %15 = tpu.concatenate %13, %14 in 1 : vector<24x128xf32>, vector<24x128xf32> -> vector<24x256xf32>
    %16 = arith.truncf %15 : vector<24x256xf32> to vector<24x256xbf16>
    %c0_6 = arith.constant 0 : index
    %c0_7 = arith.constant 0 : index
    %17 = vector.load %arg5[%c0_6, %c0_7] : memref<256x32xbf16, #tpu.memory_space<vmem>>, vector<256x32xbf16>
    %cst_8 = arith.constant dense<0.000000e+00> : vector<24x32xf32>
    %18 = tpu.matmul %16, %17, %cst_8 {dimension_numbers = #tpu.dot_dimension_numbers<[1], [0], [0], [1], [0, 0, 1, 1], [], []>} : vector<24x256xbf16>, vector<256x32xbf16>, vector<24x32xf32> -> vector<24x32xf32>
    %19 = vector.extract_strided_slice %18 {offsets = [0, 0], sizes = [24, 16], strides = [1, 1]} : vector<24x32xf32> to vector<24x16xf32>
    %20 = vector.extract_strided_slice %18 {offsets = [0, 16], sizes = [24, 16], strides = [1, 1]} : vector<24x32xf32> to vector<24x16xf32>
    %21 = arith.mulf %19, %19 : vector<24x16xf32>
    %22 = arith.subf %21, %20 : vector<24x16xf32>
    %cst_9 = arith.constant 5.000000e-01 : f32
    %23 = vector.broadcast %cst_9 : f32 to vector<24x16xf32>
    %24 = arith.mulf %23, %22 : vector<24x16xf32>
    %25 = arith.truncf %24 : vector<24x16xf32> to vector<24x16xbf16>
    %c0_10 = arith.constant 0 : index
    %c0_11 = arith.constant 0 : index
    %26 = vector.load %arg6[%c0_10, %c0_11] : memref<16x512xbf16, #tpu.memory_space<vmem>>, vector<16x512xbf16>
    %cst_12 = arith.constant dense<0.000000e+00> : vector<24x512xf32>
    %27 = tpu.matmul %25, %26, %cst_12 {dimension_numbers = #tpu.dot_dimension_numbers<[1], [0], [0], [1], [0, 0, 1, 1], [], []>} : vector<24x16xbf16>, vector<16x512xbf16>, vector<24x512xf32> -> vector<24x512xf32>
    %c0_13 = arith.constant 0 : index
    %c0_14 = arith.constant 0 : index
    %28 = vector.load %arg7[%c0_13, %c0_14] : memref<1x512xf32, #tpu.memory_space<vmem>>, vector<1x512xf32>
    %29 = vector.broadcast %28 : vector<1x512xf32> to vector<24x512xf32>
    %30 = arith.addf %27, %29 : vector<24x512xf32>
    %cst_15 = arith.constant 0.000000e+00 : f32
    %31 = vector.broadcast %cst_15 : f32 to vector<24x512xf32>
    %32 = arith.maximumf %30, %31 : vector<24x512xf32>
    %33 = arith.truncf %32 : vector<24x512xf32> to vector<24x512xbf16>
    %c0_16 = arith.constant 0 : index
    %c0_17 = arith.constant 0 : index
    %34 = vector.load %arg8[%c0_16, %c0_17] : memref<512x512xbf16, #tpu.memory_space<vmem>>, vector<512x512xbf16>
    %cst_18 = arith.constant dense<0.000000e+00> : vector<24x512xf32>
    %35 = tpu.matmul %33, %34, %cst_18 {dimension_numbers = #tpu.dot_dimension_numbers<[1], [0], [0], [1], [0, 0, 1, 1], [], []>} : vector<24x512xbf16>, vector<512x512xbf16>, vector<24x512xf32> -> vector<24x512xf32>
    %c0_19 = arith.constant 0 : index
    %c0_20 = arith.constant 0 : index
    %36 = vector.load %arg9[%c0_19, %c0_20] : memref<1x512xf32, #tpu.memory_space<vmem>>, vector<1x512xf32>
    %37 = vector.broadcast %36 : vector<1x512xf32> to vector<24x512xf32>
    %38 = arith.addf %35, %37 : vector<24x512xf32>
    %cst_21 = arith.constant 0.000000e+00 : f32
    %39 = vector.broadcast %cst_21 : f32 to vector<24x512xf32>
    %40 = arith.maximumf %38, %39 : vector<24x512xf32>
    %41 = arith.truncf %40 : vector<24x512xf32> to vector<24x512xbf16>
    %c0_22 = arith.constant 0 : index
    %c0_23 = arith.constant 0 : index
    %42 = vector.load %arg10[%c0_22, %c0_23] : memref<512x512xbf16, #tpu.memory_space<vmem>>, vector<512x512xbf16>
    %cst_24 = arith.constant dense<0.000000e+00> : vector<24x512xf32>
    %43 = tpu.matmul %41, %42, %cst_24 {dimension_numbers = #tpu.dot_dimension_numbers<[1], [0], [0], [1], [0, 0, 1, 1], [], []>} : vector<24x512xbf16>, vector<512x512xbf16>, vector<24x512xf32> -> vector<24x512xf32>
    %c0_25 = arith.constant 0 : index
    %c0_26 = arith.constant 0 : index
    %44 = vector.load %arg11[%c0_25, %c0_26] : memref<1x512xf32, #tpu.memory_space<vmem>>, vector<1x512xf32>
    %45 = vector.broadcast %44 : vector<1x512xf32> to vector<24x512xf32>
    %46 = arith.addf %43, %45 : vector<24x512xf32>
    %cst_27 = arith.constant 0.000000e+00 : f32
    %47 = vector.broadcast %cst_27 : f32 to vector<24x512xf32>
    %48 = arith.maximumf %46, %47 : vector<24x512xf32>
    %c0_28 = arith.constant 0 : index
    %c0_29 = arith.constant 0 : index
    %49 = vector.load %arg12[%c0_28, %c0_29] : memref<1x512xf32, #tpu.memory_space<vmem>>, vector<1x512xf32>
    %50 = vector.broadcast %49 : vector<1x512xf32> to vector<24x512xf32>
    %51 = arith.mulf %48, %50 : vector<24x512xf32>
    %cst_30 = arith.constant dense<0.000000e+00> : vector<24xf32>
    %52 = vector.multi_reduction <add>, %51, %cst_30 [1] : vector<24x512xf32> to vector<24xf32>
    %53 = vector.shape_cast %52 : vector<24xf32> to vector<24x1xf32>
    %c0_31 = arith.constant 0 : index
    %c0_32 = arith.constant 0 : index
    %54 = vector.load %arg2[%c0_31, %c0_32] : memref<24x8xf32, #tpu.memory_space<vmem>>, vector<24x8xf32>
    %cst_33 = arith.constant dense<0.000000e+00> : vector<24xf32>
    %55 = vector.multi_reduction <add>, %54, %cst_33 [1] : vector<24x8xf32> to vector<24xf32>
    %56 = vector.shape_cast %55 : vector<24xf32> to vector<24x1xf32>
    %57 = arith.addf %56, %53 : vector<24x1xf32>
    %c0_34 = arith.constant 0 : index
    %c0_35 = arith.constant 0 : index
    %58 = vector.load %arg13[%c0_34, %c0_35] : memref<1x1xf32, #tpu.memory_space<vmem>>, vector<1x1xf32>
    %59 = vector.broadcast %58 : vector<1x1xf32> to vector<24x1xf32>
    %60 = arith.addf %57, %59 : vector<24x1xf32>
    %c0_36 = arith.constant 0 : index
    %c0_37 = arith.constant 0 : index
    %61 = vector.load %arg14[%c0_36, %c0_37] : memref<24x1xf32, #tpu.memory_space<vmem>>, vector<24x1xf32>
    tpu.vector_store %arg14[%c0_36, %c0_37], %60 {strides = array<i32>} : memref<24x1xf32, #tpu.memory_space<vmem>>, vector<24x1xf32>,
    return
  }
  func.func @transform_0(%arg0: i32) -> (i32, i32) {
    %c0_i32 = arith.constant 0 : i32
    %c0_i32_0 = arith.constant 0 : i32
    return %arg0, %c0_i32 : i32, i32
  }
  func.func @transform_1(%arg0: i32) -> (i32, i32) {
    %c0_i32 = arith.constant 0 : i32
    %c0_i32_0 = arith.constant 0 : i32
    return %arg0, %c0_i32 : i32, i32
  }
  func.func @transform_2(%arg0: i32) -> (i32, i32) {
    %c0_i32 = arith.constant 0 : i32
    %c0_i32_0 = arith.constant 0 : i32
    %c0_i32_1 = arith.constant 0 : i32
    return %c0_i32, %c0_i32_0 : i32, i32
  }
  func.func @transform_3(%arg0: i32) -> (i32, i32) {
    %c0_i32 = arith.constant 0 : i32
    %c0_i32_0 = arith.constant 0 : i32
    %c0_i32_1 = arith.constant 0 : i32
    return %c0_i32, %c0_i32_0 : i32, i32
  }
  func.func @transform_4(%arg0: i32) -> (i32, i32) {
    %c0_i32 = arith.constant 0 : i32
    %c0_i32_0 = arith.constant 0 : i32
    %c0_i32_1 = arith.constant 0 : i32
    return %c0_i32, %c0_i32_0 : i32, i32
  }
  func.func @transform_5(%arg0: i32) -> (i32, i32) {
    %c0_i32 = arith.constant 0 : i32
    %c0_i32_0 = arith.constant 0 : i32
    %c0_i32_1 = arith.constant 0 : i32
    return %c0_i32, %c0_i32_0 : i32, i32
  }
  func.func @transform_6(%arg0: i32) -> (i32, i32) {
    %c0_i32 = arith.constant 0 : i32
    %c0_i32_0 = arith.constant 0 : i32
    %c0_i32_1 = arith.constant 0 : i32
    return %c0_i32, %c0_i32_0 : i32, i32
  }
  func.func @transform_7(%arg0: i32) -> (i32, i32) {
    %c0_i32 = arith.constant 0 : i32
    %c0_i32_0 = arith.constant 0 : i32
    %c0_i32_1 = arith.constant 0 : i32
    return %c0_i32, %c0_i32_0 : i32, i32
  }
  func.func @transform_8(%arg0: i32) -> (i32, i32) {
    %c0_i32 = arith.constant 0 : i32
    %c0_i32_0 = arith.constant 0 : i32
    %c0_i32_1 = arith.constant 0 : i32
    return %c0_i32, %c0_i32_0 : i32, i32
  }
  func.func @transform_9(%arg0: i32) -> (i32, i32) {
    %c0_i32 = arith.constant 0 : i32
    %c0_i32_0 = arith.constant 0 : i32
    %c0_i32_1 = arith.constant 0 : i32
    return %c0_i32, %c0_i32_0 : i32, i32
  }
  func.func @transform_10(%arg0: i32) -> (i32, i32) {
    %c0_i32 = arith.constant 0 : i32
    %c0_i32_0 = arith.constant 0 : i32
    %c0_i32_1 = arith.constant 0 : i32
    return %c0_i32, %c0_i32_0 : i32, i32
  }
  func.func @transform_11(%arg0: i32) -> (i32, i32) {
    %c0_i32 = arith.constant 0 : i32
    %c0_i32_0 = arith.constant 0 : i32
    %c0_i32_1 = arith.constant 0 : i32
    return %c0_i32, %c0_i32_0 : i32, i32
  }
  func.func @transform_12(%arg0: i32) -> (i32, i32) {
    %c0_i32 = arith.constant 0 : i32
    %c0_i32_0 = arith.constant 0 : i32
    %c0_i32_1 = arith.constant 0 : i32
    return %c0_i32, %c0_i32_0 : i32, i32
  }
  func.func @transform_13(%arg0: i32) -> (i32, i32) {
    %c0_i32 = arith.constant 0 : i32
    %c0_i32_0 = arith.constant 0 : i32
    return %arg0, %c0_i32 : i32, i32
  }
}

</mosaic_0001>

<llo_original>
// kernel: tpu_custom_call.1
$region0: #{tpu_custom_call.1}
  #allocation0 [shape = 'u32[]', space=smem, size = 0x4, offset = 0x4, fixed_abs, tag = 'smem constant byte address 0x4 - core index']
  #allocation1 [shape = 'u32[72,128]{1,0:T(1,128)}', space=vmem, size = 0x9000, scoped, tag = 'internal scratch']
  #allocation2 [shape = 'f32[1,1]{1,0:T(1,128)S(1)}', space=vmem, size = 0x200, scoped, tag = 'scoped memory for tpu_custom_call.1']
  %s0 = inlined_call_operand.vmem [shape: bf16[48,128], index: 0, kind: input, shape index: {}]
  %s1 = inlined_call_operand.vmem [shape: f32[48,8], index: 1, kind: input, shape index: {}]
  %s2 = inlined_call_operand.vmem [shape: bf16[128,256], index: 2, kind: input, shape index: {}]
  %s3 = inlined_call_operand.hbm [shape: f32[1,256], index: 3, kind: input, shape index: {}]
  %s4 = inlined_call_operand.vmem [shape: bf16[256,32], index: 4, kind: input, shape index: {}]
  %s5 = inlined_call_operand.vmem [shape: bf16[16,512], index: 5, kind: input, shape index: {}]
  %s6 = inlined_call_operand.vmem [shape: f32[1,512], index: 6, kind: input, shape index: {}]
  %s7 = inlined_call_operand.hbm [shape: bf16[512,512], index: 7, kind: input, shape index: {}]
  %s8 = inlined_call_operand.vmem [shape: f32[1,512], index: 8, kind: input, shape index: {}]
  %s9 = inlined_call_operand.hbm [shape: bf16[512,512], index: 9, kind: input, shape index: {}]
  %s10 = inlined_call_operand.hbm [shape: f32[1,512], index: 10, kind: input, shape index: {}]
  %s11 = inlined_call_operand.hbm [shape: f32[1,512], index: 11, kind: input, shape index: {}]
  %s12 = inlined_call_operand.<no memory space> [shape: f32[1,1], index: 12, kind: input, shape index: {}]
  %s13 = inlined_call_operand.vmem [shape: f32[48,1], index: 13, kind: output, shape index: {}]
  %s14 = sld [smem:[#allocation0]]
  $region105: #{tpu_custom_call.1} parent=0
    _
  %s16 = ssub.s32 1, %s14
  %s17 = scalar_select 0, %s16, %s14
  %v18 = vstv %s12
  %19 = vst [vmem:[#allocation2] sm:$0x1] %v18
  $region1: #{tpu_custom_call.1} parent=0
    #allocation3 [shape = 'u8[1024]{0}', space=vmem, size = 0x400, scoped, tag = 'input window, operand 3, single buffered']
    #allocation4 [shape = 's32[2]{0}', space=sflag, size = 0x8, scoped, tag = 'scoped memory for tpu_custom_call.1']
    #allocation5 [shape = 'u8[524288]{0}', space=vmem, size = 0x80000, scoped, tag = 'input window, operand 7, single buffered']
    #allocation6 [shape = 's32[1]{0}', space=sflag, size = 0x4, scoped, tag = 'scoped memory for tpu_custom_call.1']
    #allocation7 [shape = 'u8[524288]{0}', space=vmem, size = 0x80000, scoped, tag = 'input window, operand 9, single buffered']
    #allocation8 [shape = 'u8[2048]{0}', space=vmem, size = 0x800, scoped, tag = 'input window, operand 10, single buffered']
    #allocation9 [shape = 's32[1]{0}', space=sflag, size = 0x4, scoped, tag = 'scoped memory for tpu_custom_call.1']
    #allocation10 [shape = 'u8[2048]{0}', space=vmem, size = 0x800, scoped, tag = 'input window, operand 11, single buffered']
    %20 = vsyncpa [#allocation4], 0
    %21 = vsyncpa [#allocation6], 0
    %22 = vsyncpa [#allocation9], 0
    loop: start=0, step=1, limit=4
    $region2: #{tpu_custom_call.1} parent=1 // loop_pre_header
      _
    $region3: #{tpu_custom_call.1} parent=1 // loop_header
      %s24 = sphi 0, %s28
      %p25 = scmp.ge.s32.totalorder %s24, 4
      %s34 = sphi 0, %s36
      %s37 = sphi 0, %s34
      %s38 = sphi 0, %s37
      %s54 = sphi 0, %s38
      %s60 = sphi 0, %s62
      %s63 = sphi 0, %s60
      %s64 = sphi 0, %s63
      %s80 = sphi 0, %s64
      %s84 = sphi 0, %s84
      %s86 = sphi 0, %s84
      %s87 = sphi 0, %s86
      %s101 = sphi 0, %s87
      %s105 = sphi 0, %s105
      %s107 = sphi 0, %s105
      %s108 = sphi 0, %s107
      %s122 = sphi 0, %s108
      %s126 = sphi 0, %s126
      %s128 = sphi 0, %s126
      %s129 = sphi 0, %s128
      %s143 = sphi 0, %s129
      %s147 = sphi 0, %s147
      %s149 = sphi 0, %s147
      %s150 = sphi 0, %s149
      %s164 = sphi 0, %s150
      %s168 = sphi 0, %s168
      %s170 = sphi 0, %s168
      %s171 = sphi 0, %s170
      %s185 = sphi 0, %s171
      %s189 = sphi 0, %s189
      %s191 = sphi 0, %s189
      %s192 = sphi 0, %s191
      %s206 = sphi 0, %s192
      %s210 = sphi 0, %s210
      %s212 = sphi 0, %s210
      %s213 = sphi 0, %s212
      %s227 = sphi 0, %s213
      %s231 = sphi 0, %s231
      %s233 = sphi 0, %s231
      %s234 = sphi 0, %s233
      %s248 = sphi 0, %s234
      %s252 = sphi 0, %s252
      %s254 = sphi 0, %s252
      %s255 = sphi 0, %s254
      %s269 = sphi 0, %s255
      %s273 = sphi 0, %s273
      %s275 = sphi 0, %s273
      %s276 = sphi 0, %s275
      %s290 = sphi 0, %s276
      %s294 = sphi 0, %s294
      %s296 = sphi 0, %s294
      %s297 = sphi 0, %s296
      %s311 = sphi 0, %s297
      %s317 = sphi 0, %s319
      %s320 = sphi 0, %s317
      %s321 = sphi 0, %s320
      %s337 = sphi 0, %s321
    $region4: #{tpu_custom_call.1} parent=1 // loop_header_branch
      %27 = sbr.rel (%p25) target = $region8
    $region5: #{tpu_custom_call.1} parent=1 // loop_body
      %s29 = ssub.s32 %s24, 1
      %s30 = ssub.s32 %s24, 2
      %s31 = sadd.s32 %s24, 1
      %s32 = ssub.s32 %s24, %s31
      %p33 = scmp.eq.s32.totalorder %s32, 0
      %s35 = sadd.s32 %s34, 1
      %s36 = scalar_select %p33, %s34, %s35
      %p39 = pneg %p33
      %p40 = scmp.eq.s32.totalorder %s24, 1
      %p41 = por %p39, %p40
      %p42 = scmp.ne.s32.totalorder %s34, %s37
      %p43 = scmp.eq.s32.totalorder %s24, 0
      %p44 = por %p42, %p43
      %p45 = scmp.ne.s32.totalorder %s34, %s37
      %p46 = scmp.eq.s32.totalorder %s29, 1
      %p47 = por %p45, %p46
      %p48 = scmp.ne.s32.totalorder %s37, %s38
      %p49 = scmp.eq.s32.totalorder %s29, 0
      %p50 = por %p48, %p49
      %p51 = scmp.ne.s32.totalorder %s37, %s38
      %p52 = scmp.eq.s32.totalorder %s30, 1
      %p53 = por %p51, %p52
      %p55 = scmp.ne.s32.totalorder %s38, %s54
      %p56 = scmp.eq.s32.totalorder %s30, 0
      %p57 = por %p55, %p56
      %s58 = ssub.s32 %s24, %s31
      %p59 = scmp.eq.s32.totalorder %s58, 0
      %s61 = sadd.s32 %s60, 1
      %s62 = scalar_select %p59, %s60, %s61
      %p65 = pneg %p59
      %p66 = scmp.eq.s32.totalorder %s24, 1
      %p67 = por %p65, %p66
      %p68 = scmp.ne.s32.totalorder %s60, %s63
      %p69 = scmp.eq.s32.totalorder %s24, 0
      %p70 = por %p68, %p69
      %p71 = scmp.ne.s32.totalorder %s60, %s63
      %p72 = scmp.eq.s32.totalorder %s29, 1
      %p73 = por %p71, %p72
      %p74 = scmp.ne.s32.totalorder %s63, %s64
      %p75 = scmp.eq.s32.totalorder %s29, 0
      %p76 = por %p74, %p75
      %p77 = scmp.ne.s32.totalorder %s63, %s64
      %p78 = scmp.eq.s32.totalorder %s30, 1
      %p79 = por %p77, %p78
      %p81 = scmp.ne.s32.totalorder %s64, %s80
      %p82 = scmp.eq.s32.totalorder %s30, 0
      %p83 = por %p81, %p82
      %s85 = sadd.s32 %s84, 1
      %p88 = scmp.eq.s32.totalorder %s24, 1
      %p89 = scmp.ne.s32.totalorder %s84, %s86
      %p90 = scmp.eq.s32.totalorder %s24, 0
      %p91 = por %p89, %p90
      %p92 = scmp.ne.s32.totalorder %s84, %s86
      %p93 = scmp.eq.s32.totalorder %s29, 1
      %p94 = por %p92, %p93
      %p95 = scmp.ne.s32.totalorder %s86, %s87
      %p96 = scmp.eq.s32.totalorder %s29, 0
      %p97 = por %p95, %p96
      %p98 = scmp.ne.s32.totalorder %s86, %s87
      %p99 = scmp.eq.s32.totalorder %s30, 1
      %p100 = por %p98, %p99
      %p102 = scmp.ne.s32.totalorder %s87, %s101
      %p103 = scmp.eq.s32.totalorder %s30, 0
      %p104 = por %p102, %p103
      %s106 = sadd.s32 %s105, 1
      %p109 = scmp.eq.s32.totalorder %s24, 1
      %p110 = scmp.ne.s32.totalorder %s105, %s107
      %p111 = scmp.eq.s32.totalorder %s24, 0
      %p112 = por %p110, %p111
      %p113 = scmp.ne.s32.totalorder %s105, %s107
      %p114 = scmp.eq.s32.totalorder %s29, 1
      %p115 = por %p113, %p114
      %p116 = scmp.ne.s32.totalorder %s107, %s108
      %p117 = scmp.eq.s32.totalorder %s29, 0
      %p118 = por %p116, %p117
      %p119 = scmp.ne.s32.totalorder %s107, %s108
      %p120 = scmp.eq.s32.totalorder %s30, 1
      %p121 = por %p119, %p120
      %p123 = scmp.ne.s32.totalorder %s108, %s122
      %p124 = scmp.eq.s32.totalorder %s30, 0
      %p125 = por %p123, %p124
      %s127 = sadd.s32 %s126, 1
      %p130 = scmp.eq.s32.totalorder %s24, 1
      %p131 = scmp.ne.s32.totalorder %s126, %s128
      %p132 = scmp.eq.s32.totalorder %s24, 0
      %p133 = por %p131, %p132
      %p134 = scmp.ne.s32.totalorder %s126, %s128
      %p135 = scmp.eq.s32.totalorder %s29, 1
      %p136 = por %p134, %p135
      %p137 = scmp.ne.s32.totalorder %s128, %s129
      %p138 = scmp.eq.s32.totalorder %s29, 0
      %p139 = por %p137, %p138
      %p140 = scmp.ne.s32.totalorder %s128, %s129
      %p141 = scmp.eq.s32.totalorder %s30, 1
      %p142 = por %p140, %p141
      %p144 = scmp.ne.s32.totalorder %s129, %s143
      %p145 = scmp.eq.s32.totalorder %s30, 0
      %p146 = por %p144, %p145
      %s148 = sadd.s32 %s147, 1
      %p151 = scmp.eq.s32.totalorder %s24, 1
      %p152 = scmp.ne.s32.totalorder %s147, %s149
      %p153 = scmp.eq.s32.totalorder %s24, 0
      %p154 = por %p152, %p153
      %p155 = scmp.ne.s32.totalorder %s147, %s149
      %p156 = scmp.eq.s32.totalorder %s29, 1
      %p157 = por %p155, %p156
      %p158 = scmp.ne.s32.totalorder %s149, %s150
      %p159 = scmp.eq.s32.totalorder %s29, 0
      %p160 = por %p158, %p159
      %p161 = scmp.ne.s32.totalorder %s149, %s150
      %p162 = scmp.eq.s32.totalorder %s30, 1
      %p163 = por %p161, %p162
      %p165 = scmp.ne.s32.totalorder %s150, %s164
      %p166 = scmp.eq.s32.totalorder %s30, 0
      %p167 = por %p165, %p166
      %s169 = sadd.s32 %s168, 1
      %p172 = scmp.eq.s32.totalorder %s24, 1
      %p173 = scmp.ne.s32.totalorder %s168, %s170
      %p174 = scmp.eq.s32.totalorder %s24, 0
      %p175 = por %p173, %p174
      %p176 = scmp.ne.s32.totalorder %s168, %s170
      %p177 = scmp.eq.s32.totalorder %s29, 1
      %p178 = por %p176, %p177
      %p179 = scmp.ne.s32.totalorder %s170, %s171
      %p180 = scmp.eq.s32.totalorder %s29, 0
      %p181 = por %p179, %p180
      %p182 = scmp.ne.s32.totalorder %s170, %s171
      %p183 = scmp.eq.s32.totalorder %s30, 1
      %p184 = por %p182, %p183
      %p186 = scmp.ne.s32.totalorder %s171, %s185
      %p187 = scmp.eq.s32.totalorder %s30, 0
      %p188 = por %p186, %p187
      %s190 = sadd.s32 %s189, 1
      %p193 = scmp.eq.s32.totalorder %s24, 1
      %p194 = scmp.ne.s32.totalorder %s189, %s191
      %p195 = scmp.eq.s32.totalorder %s24, 0
      %p196 = por %p194, %p195
      %p197 = scmp.ne.s32.totalorder %s189, %s191
      %p198 = scmp.eq.s32.totalorder %s29, 1
      %p199 = por %p197, %p198
      %p200 = scmp.ne.s32.totalorder %s191, %s192
      %p201 = scmp.eq.s32.totalorder %s29, 0
      %p202 = por %p200, %p201
      %p203 = scmp.ne.s32.totalorder %s191, %s192
      %p204 = scmp.eq.s32.totalorder %s30, 1
      %p205 = por %p203, %p204
      %p207 = scmp.ne.s32.totalorder %s192, %s206
      %p208 = scmp.eq.s32.totalorder %s30, 0
      %p209 = por %p207, %p208
      %s211 = sadd.s32 %s210, 1
      %p214 = scmp.eq.s32.totalorder %s24, 1
      %p215 = scmp.ne.s32.totalorder %s210, %s212
      %p216 = scmp.eq.s32.totalorder %s24, 0
      %p217 = por %p215, %p216
      %p218 = scmp.ne.s32.totalorder %s210, %s212
      %p219 = scmp.eq.s32.totalorder %s29, 1
      %p220 = por %p218, %p219
      %p221 = scmp.ne.s32.totalorder %s212, %s213
      %p222 = scmp.eq.s32.totalorder %s29, 0
      %p223 = por %p221, %p222
      %p224 = scmp.ne.s32.totalorder %s212, %s213
      %p225 = scmp.eq.s32.totalorder %s30, 1
      %p226 = por %p224, %p225
      %p228 = scmp.ne.s32.totalorder %s213, %s227
      %p229 = scmp.eq.s32.totalorder %s30, 0
      %p230 = por %p228, %p229
      %s232 = sadd.s32 %s231, 1
      %p235 = scmp.eq.s32.totalorder %s24, 1
      %p236 = scmp.ne.s32.totalorder %s231, %s233
      %p237 = scmp.eq.s32.totalorder %s24, 0
      %p238 = por %p236, %p237
      %p239 = scmp.ne.s32.totalorder %s231, %s233
      %p240 = scmp.eq.s32.totalorder %s29, 1
      %p241 = por %p239, %p240
      %p242 = scmp.ne.s32.totalorder %s233, %s234
      %p243 = scmp.eq.s32.totalorder %s29, 0
      %p244 = por %p242, %p243
      %p245 = scmp.ne.s32.totalorder %s233, %s234
      %p246 = scmp.eq.s32.totalorder %s30, 1
      %p247 = por %p245, %p246
      %p249 = scmp.ne.s32.totalorder %s234, %s248
      %p250 = scmp.eq.s32.totalorder %s30, 0
      %p251 = por %p249, %p250
      %s253 = sadd.s32 %s252, 1
      %p256 = scmp.eq.s32.totalorder %s24, 1
      %p257 = scmp.ne.s32.totalorder %s252, %s254
      %p258 = scmp.eq.s32.totalorder %s24, 0
      %p259 = por %p257, %p258
      %p260 = scmp.ne.s32.totalorder %s252, %s254
      %p261 = scmp.eq.s32.totalorder %s29, 1
      %p262 = por %p260, %p261
      %p263 = scmp.ne.s32.totalorder %s254, %s255
      %p264 = scmp.eq.s32.totalorder %s29, 0
      %p265 = por %p263, %p264
      %p266 = scmp.ne.s32.totalorder %s254, %s255
      %p267 = scmp.eq.s32.totalorder %s30, 1
      %p268 = por %p266, %p267
      %p270 = scmp.ne.s32.totalorder %s255, %s269
      %p271 = scmp.eq.s32.totalorder %s30, 0
      %p272 = por %p270, %p271
      %s274 = sadd.s32 %s273, 1
      %p277 = scmp.eq.s32.totalorder %s24, 1
      %p278 = scmp.ne.s32.totalorder %s273, %s275
      %p279 = scmp.eq.s32.totalorder %s24, 0
      %p280 = por %p278, %p279
      %p281 = scmp.ne.s32.totalorder %s273, %s275
      %p282 = scmp.eq.s32.totalorder %s29, 1
      %p283 = por %p281, %p282
      %p284 = scmp.ne.s32.totalorder %s275, %s276
      %p285 = scmp.eq.s32.totalorder %s29, 0
      %p286 = por %p284, %p285
      %p287 = scmp.ne.s32.totalorder %s275, %s276
      %p288 = scmp.eq.s32.totalorder %s30, 1
      %p289 = por %p287, %p288
      %p291 = scmp.ne.s32.totalorder %s276, %s290
      %p292 = scmp.eq.s32.totalorder %s30, 0
      %p293 = por %p291, %p292
      %s295 = sadd.s32 %s294, 1
      %p298 = scmp.eq.s32.totalorder %s24, 1
      %p299 = scmp.ne.s32.totalorder %s294, %s296
      %p300 = scmp.eq.s32.totalorder %s24, 0
      %p301 = por %p299, %p300
      %p302 = scmp.ne.s32.totalorder %s294, %s296
      %p303 = scmp.eq.s32.totalorder %s29, 1
      %p304 = por %p302, %p303
      %p305 = scmp.ne.s32.totalorder %s296, %s297
      %p306 = scmp.eq.s32.totalorder %s29, 0
      %p307 = por %p305, %p306
      %p308 = scmp.ne.s32.totalorder %s296, %s297
      %p309 = scmp.eq.s32.totalorder %s30, 1
      %p310 = por %p308, %p309
      %p312 = scmp.ne.s32.totalorder %s297, %s311
      %p313 = scmp.eq.s32.totalorder %s30, 0
      %p314 = por %p312, %p313
      %s315 = ssub.s32 %s24, %s31
      %p316 = scmp.eq.s32.totalorder %s315, 0
      %s318 = sadd.s32 %s317, 1
      %s319 = scalar_select %p316, %s317, %s318
      %p322 = pneg %p316
      %p323 = scmp.eq.s32.totalorder %s24, 1
      %p324 = por %p322, %p323
      %p325 = scmp.ne.s32.totalorder %s317, %s320
      %p326 = scmp.eq.s32.totalorder %s24, 0
      %p327 = por %p325, %p326
      %p328 = scmp.ne.s32.totalorder %s317, %s320
      %p329 = scmp.eq.s32.totalorder %s29, 1
      %p330 = por %p328, %p329
      %p331 = scmp.ne.s32.totalorder %s320, %s321
      %p332 = scmp.eq.s32.totalorder %s29, 0
      %p333 = por %p331, %p332
      %p334 = scmp.ne.s32.totalorder %s320, %s321
      %p335 = scmp.eq.s32.totalorder %s30, 1
      %p336 = por %p334, %p335
      %p338 = scmp.ne.s32.totalorder %s321, %s337
      %p339 = scmp.eq.s32.totalorder %s30, 0
      %p340 = por %p338, %p339
      %p341 = scmp.le.s32.totalorder 1, %s24
      %p342 = scmp.lt.s32.totalorder %s24, 3
      %p343 = pnand %p341, %p342
      %p344 = pneg %p343
      // Predicated region
      $region9: #{tpu_custom_call.1} parent=5 // pred_check
        _
      $region10: #{tpu_custom_call.1} parent=5 // pred_check_branch
        %346 = sbr.rel (%p343) target = $region12
      $region11: #{tpu_custom_call.1} parent=5 // pred_region
        %s347 = ssub.s32 %s24, 1
        // Predicated region
        $region13: #{tpu_custom_call.1} parent=11 // pred_check
          %p348 = pneg %p97
        $region14: #{tpu_custom_call.1} parent=11 // pred_check_branch
          %350 = sbr.rel (%p348) target = $region16
        $region15: #{tpu_custom_call.1} parent=11 // pred_region
          _
        $region16: #{tpu_custom_call.1} parent=11 // pred_fallthru
          _
        // Predicated region
        $region17: #{tpu_custom_call.1} parent=11 // pred_check
          %p351 = pneg %p118
        $region18: #{tpu_custom_call.1} parent=11 // pred_check_branch
          %353 = sbr.rel (%p351) target = $region20
        $region19: #{tpu_custom_call.1} parent=11 // pred_region
          %355 = vsyncadd [#allocation4], 0
          %s357 = sshll.u32 %s3, 4
          %s358 = int_to_ptr.hbm [resolvable:$true] %s357
          %s359 = sshll.u32 [#allocation3], 4
          %s360 = int_to_ptr.vmem [resolvable:$true] %s359
          %362 = dma.hbm_to_vmem [thread:$0]  %s358, 32, %s360, [#allocation4]
        $region20: #{tpu_custom_call.1} parent=11 // pred_fallthru
          _
        // Predicated region
        $region21: #{tpu_custom_call.1} parent=11 // pred_check
          %p363 = pneg %p139
        $region22: #{tpu_custom_call.1} parent=11 // pred_check_branch
          %365 = sbr.rel (%p363) target = $region24
        $region23: #{tpu_custom_call.1} parent=11 // pred_region
          _
        $region24: #{tpu_custom_call.1} parent=11 // pred_fallthru
          _
        // Predicated region
        $region25: #{tpu_custom_call.1} parent=11 // pred_check
          %p366 = pneg %p160
        $region26: #{tpu_custom_call.1} parent=11 // pred_check_branch
          %368 = sbr.rel (%p366) target = $region28
        $region27: #{tpu_custom_call.1} parent=11 // pred_region
          _
        $region28: #{tpu_custom_call.1} parent=11 // pred_fallthru
          _
        // Predicated region
        $region29: #{tpu_custom_call.1} parent=11 // pred_check
          %p369 = pneg %p181
        $region30: #{tpu_custom_call.1} parent=11 // pred_check_branch
          %371 = sbr.rel (%p369) target = $region32
        $region31: #{tpu_custom_call.1} parent=11 // pred_region
          _
        $region32: #{tpu_custom_call.1} parent=11 // pred_fallthru
          _
        // Predicated region
        $region33: #{tpu_custom_call.1} parent=11 // pred_check
          %p372 = pneg %p202
        $region34: #{tpu_custom_call.1} parent=11 // pred_check_branch
          %374 = sbr.rel (%p372) target = $region36
        $region35: #{tpu_custom_call.1} parent=11 // pred_region
          %376 = vsyncadd [#allocation6], 0
          %s377 = sshll.u32 %s7, 4
          %s378 = int_to_ptr.hbm [resolvable:$true] %s377
          %s379 = sshll.u32 [#allocation5], 4
          %s380 = int_to_ptr.vmem [resolvable:$true] %s379
          %385 = dma.hbm_to_vmem [thread:$0]  %s378, 16384, %s380, [#allocation6], 256, 256, 16
        $region36: #{tpu_custom_call.1} parent=11 // pred_fallthru
          _
        // Predicated region
        $region37: #{tpu_custom_call.1} parent=11 // pred_check
          %p386 = pneg %p223
        $region38: #{tpu_custom_call.1} parent=11 // pred_check_branch
          %388 = sbr.rel (%p386) target = $region40
        $region39: #{tpu_custom_call.1} parent=11 // pred_region
          _
        $region40: #{tpu_custom_call.1} parent=11 // pred_fallthru
          _
        // Predicated region
        $region41: #{tpu_custom_call.1} parent=11 // pred_check
          %p389 = pneg %p244
        $region42: #{tpu_custom_call.1} parent=11 // pred_check_branch
          %391 = sbr.rel (%p389) target = $region44
        $region43: #{tpu_custom_call.1} parent=11 // pred_region
          %393 = vsyncadd [#allocation6], 0
          %s394 = sshll.u32 %s9, 4
          %s395 = int_to_ptr.hbm [resolvable:$true] %s394
          %s396 = sshll.u32 [#allocation7], 4
          %s397 = int_to_ptr.vmem [resolvable:$true] %s396
          %402 = dma.hbm_to_vmem [thread:$0]  %s395, 16384, %s397, [#allocation6], 256, 256, 16
        $region44: #{tpu_custom_call.1} parent=11 // pred_fallthru
          _
        // Predicated region
        $region45: #{tpu_custom_call.1} parent=11 // pred_check
          %p403 = pneg %p265
        $region46: #{tpu_custom_call.1} parent=11 // pred_check_branch
          %405 = sbr.rel (%p403) target = $region48
        $region47: #{tpu_custom_call.1} parent=11 // pred_region
          %407 = vsyncadd [#allocation9], 0
          %s409 = sshll.u32 %s10, 4
          %s410 = int_to_ptr.hbm [resolvable:$true] %s409
          %s411 = sshll.u32 [#allocation8], 4
          %s412 = int_to_ptr.vmem [resolvable:$true] %s411
          %414 = dma.hbm_to_vmem [thread:$0]  %s410, 64, %s412, [#allocation9]
        $region48: #{tpu_custom_call.1} parent=11 // pred_fallthru
          _
        // Predicated region
        $region49: #{tpu_custom_call.1} parent=11 // pred_check
          %p415 = pneg %p286
        $region50: #{tpu_custom_call.1} parent=11 // pred_check_branch
          %417 = sbr.rel (%p415) target = $region52
        $region51: #{tpu_custom_call.1} parent=11 // pred_region
          %419 = vsyncadd [#allocation9], 0
          %s421 = sshll.u32 %s11, 4
          %s422 = int_to_ptr.hbm [resolvable:$true] %s421
          %s423 = sshll.u32 [#allocation10], 4
          %s424 = int_to_ptr.vmem [resolvable:$true] %s423
          %426 = dma.hbm_to_vmem [thread:$0]  %s422, 64, %s424, [#allocation9]
        $region52: #{tpu_custom_call.1} parent=11 // pred_fallthru
          _
        // Predicated region
        $region53: #{tpu_custom_call.1} parent=11 // pred_check
          %p427 = pneg %p307
        $region54: #{tpu_custom_call.1} parent=11 // pred_check_branch
          %429 = sbr.rel (%p427) target = $region56
        $region55: #{tpu_custom_call.1} parent=11 // pred_region
          _
        $region56: #{tpu_custom_call.1} parent=11 // pred_fallthru
          _
      $region12: #{tpu_custom_call.1} parent=5 // pred_fallthru
        _
      %p430 = scmp.lt.s32.totalorder %s24, 2
      // Predicated region
      $region57: #{tpu_custom_call.1} parent=5 // pred_check
        %p431 = pneg %p430
      $region58: #{tpu_custom_call.1} parent=5 // pred_check_branch
        %433 = sbr.rel (%p431) target = $region60
      $region59: #{tpu_custom_call.1} parent=5 // pred_region
        // Predicated region
        $region61: #{tpu_custom_call.1} parent=59 // pred_check
          %p434 = pneg %p44
        $region62: #{tpu_custom_call.1} parent=59 // pred_check_branch
          %436 = sbr.rel (%p434) target = $region64
        $region63: #{tpu_custom_call.1} parent=59 // pred_region
          %s437 = smul.u32 3, %s24
          %p438 = scmp.lt.s32.totalorder %s437, 5
          %s439 = scalar_select %p438, %s437, 5
          %s440 = smul.addr %s439, 4
          %s441 = scalar_lea.vmem %s0, %s440
          %s442 = smul.u32 3, %s24
        $region64: #{tpu_custom_call.1} parent=59 // pred_fallthru
          _
        // Predicated region
        $region65: #{tpu_custom_call.1} parent=59 // pred_check
          %p443 = pneg %p70
        $region66: #{tpu_custom_call.1} parent=59 // pred_check_branch
          %445 = sbr.rel (%p443) target = $region68
        $region67: #{tpu_custom_call.1} parent=59 // pred_region
          %s446 = smul.u32 3, %s24
          %p447 = scmp.lt.s32.totalorder %s446, 5
          %s448 = scalar_select %p447, %s446, 5
          %s449 = smul.addr %s448, 8
          %s450 = scalar_lea.vmem %s1, %s449
          %s451 = smul.u32 3, %s24
        $region68: #{tpu_custom_call.1} parent=59 // pred_fallthru
          _
      $region60: #{tpu_custom_call.1} parent=5 // pred_fallthru
        _
      %p452 = scmp.le.s32.totalorder 1, %s24
      %p453 = scmp.lt.s32.totalorder %s24, 3
      %p454 = pnand %p452, %p453
      %p455 = pneg %p454
      // Predicated region
      $region69: #{tpu_custom_call.1} parent=5 // pred_check
        _
      $region70: #{tpu_custom_call.1} parent=5 // pred_check_branch
        %457 = sbr.rel (%p454) target = $region72
      $region71: #{tpu_custom_call.1} parent=5 // pred_region
        %s458 = ssub.s32 %s24, 1
        // Predicated region
        $region73: #{tpu_custom_call.1} parent=71 // pred_check
          %p459 = pneg %p118
        $region74: #{tpu_custom_call.1} parent=71 // pred_check_branch
          %461 = sbr.rel (%p459) target = $region76
        $region75: #{tpu_custom_call.1} parent=71 // pred_region
          %463 = dma.done [#allocation4], 32
        $region76: #{tpu_custom_call.1} parent=71 // pred_fallthru
          _
        // Predicated region
        $region77: #{tpu_custom_call.1} parent=71 // pred_check
          %p464 = pneg %p202
        $region78: #{tpu_custom_call.1} parent=71 // pred_check_branch
          %466 = sbr.rel (%p464) target = $region80
        $region79: #{tpu_custom_call.1} parent=71 // pred_region
          %468 = dma.done [#allocation6], 16384
        $region80: #{tpu_custom_call.1} parent=71 // pred_fallthru
          _
        // Predicated region
        $region81: #{tpu_custom_call.1} parent=71 // pred_check
          %p469 = pneg %p244
        $region82: #{tpu_custom_call.1} parent=71 // pred_check_branch
          %471 = sbr.rel (%p469) target = $region84
        $region83: #{tpu_custom_call.1} parent=71 // pred_region
          %473 = dma.done [#allocation6], 16384
        $region84: #{tpu_custom_call.1} parent=71 // pred_fallthru
          _
        // Predicated region
        $region85: #{tpu_custom_call.1} parent=71 // pred_check
          %p474 = pneg %p265
        $region86: #{tpu_custom_call.1} parent=71 // pred_check_branch
          %476 = sbr.rel (%p474) target = $region88
        $region87: #{tpu_custom_call.1} parent=71 // pred_region
          %478 = dma.done [#allocation9], 64
        $region88: #{tpu_custom_call.1} parent=71 // pred_fallthru
          _
        // Predicated region
        $region89: #{tpu_custom_call.1} parent=71 // pred_check
          %p479 = pneg %p286
        $region90: #{tpu_custom_call.1} parent=71 // pred_check_branch
          %481 = sbr.rel (%p479) target = $region92
        $region91: #{tpu_custom_call.1} parent=71 // pred_region
          %483 = dma.done [#allocation9], 64
        $region92: #{tpu_custom_call.1} parent=71 // pred_fallthru
          _
        %s484 = smul.u32 3, %s29
        %p485 = scmp.lt.s32.totalorder %s484, 5
        %s486 = scalar_select %p485, %s484, 5
        %s487 = smul.addr %s486, 4
        %s488 = scalar_lea.vmem %s0, %s487
        %p489 = pneg %p50
        %p490 = pneg %p47
        %s491 = smul.u32 3, %s29
        %p492 = scmp.lt.s32.totalorder %s491, 5
        %s493 = scalar_select %p492, %s491, 5
        %s494 = smul.addr %s493, 8
        %s495 = scalar_lea.vmem %s1, %s494
        %p496 = pneg %p76
        %p497 = pneg %p73
        %p498 = pneg %p97
        %p499 = pneg %p94
        %p500 = pneg %p118
        %p501 = pneg %p115
        %p502 = pneg %p139
        %p503 = pneg %p136
        %p504 = pneg %p160
        %p505 = pneg %p157
        %p506 = pneg %p181
        %p507 = pneg %p178
        %p508 = pneg %p202
        %p509 = pneg %p199
        %p510 = pneg %p223
        %p511 = pneg %p220
        %p512 = pneg %p244
        %p513 = pneg %p241
        %p514 = pneg %p265
        %p515 = pneg %p262
        %p516 = pneg %p286
        %p517 = pneg %p283
        %p518 = pneg %p307
        %p519 = pneg %p304
        %p520 = pneg %p333
        %p521 = pneg %p330
        %s522 = smul.u32 3, %s29
        %p523 = scmp.lt.s32.totalorder %s522, 5
        %s524 = scalar_select %p523, %s522, 5
        %s525 = smul.addr %s524, 8
        %s526 = scalar_lea.vmem %s13, %s525
        %s527 = smul.u32 3, %s29
        %p528 = scmp.lt.s32.totalorder %s527, 5
        %s529 = scalar_select %p528, %s527, 5
        %s530 = smul.addr %s529, 4
        %s531 = scalar_lea.vmem %s0, %s530
        %s532 = smul.u32 3, %s29
        %s533 = smul.u32 3, %s29
        %p534 = scmp.lt.s32.totalorder %s533, 5
        %s535 = scalar_select %p534, %s533, 5
        %s536 = smul.addr %s535, 8
        %s537 = scalar_lea.vmem %s1, %s536
        %s538 = smul.u32 3, %s29
        %s539 = smul.u32 3, %s29
        %p540 = scmp.lt.s32.totalorder %s539, 5
        %s541 = scalar_select %p540, %s539, 5
        %s542 = smul.addr %s541, 8
        %s543 = scalar_lea.vmem %s13, %s542
        %s544 = smul.u32 3, %s29
        %v546 = vld [vmem:[%s531] sm:$0xf]
        %v547 = vld [vmem:[%s531 + $0x4] sm:$0xf]
        %v548 = vld [vmem:[%s531 + $0x8] sm:$0xf]
        %v549 = vld [vmem:[%s2] sm:$0xff]
        %v550 = vld [vmem:[%s2 + $0x8] sm:$0xff]
        %v551 = vld [vmem:[%s2 + $0x10] sm:$0xff]
        %v552 = vld [vmem:[%s2 + $0x18] sm:$0xff]
        %v553 = vld [vmem:[%s2 + $0x20] sm:$0xff]
        %v554 = vld [vmem:[%s2 + $0x28] sm:$0xff]
        %v555 = vld [vmem:[%s2 + $0x30] sm:$0xff]
        %v556 = vld [vmem:[%s2 + $0x38] sm:$0xff]
        %v557 = vld [vmem:[%s2 + $0x40] sm:$0xff]
        %v558 = vld [vmem:[%s2 + $0x48] sm:$0xff]
        %v559 = vld [vmem:[%s2 + $0x50] sm:$0xff]
        %v560 = vld [vmem:[%s2 + $0x58] sm:$0xff]
        %v561 = vld [vmem:[%s2 + $0x60] sm:$0xff]
        %v562 = vld [vmem:[%s2 + $0x68] sm:$0xff]
        %v563 = vld [vmem:[%s2 + $0x70] sm:$0xff]
        %v564 = vld [vmem:[%s2 + $0x78] sm:$0xff]
        %v565 = vld [vmem:[#allocation3] sm:$0x3]
        %v567 = vperm.slane %v565, 0
        %v568 = vperm.slane %v565, 1
        %v574 = vunpack.c.l.b16 %v546
        %v575 = vunpack.c.l.b16 %v547
        %v576 = vunpack.c.l.b16 %v548
        %v577 = vpack.c.b16 %v575, %v574
        %v578 = vpack.c.b16 %v576, %v576
        %v597 = vunpack.c.l.b16 %v549
        %v598 = vunpack.c.h.b16 %v549
        %v599 = vunpack.c.l.b16 %v550
        %v600 = vunpack.c.h.b16 %v550
        %v601 = vunpack.c.l.b16 %v551
        %v602 = vunpack.c.h.b16 %v551
        %v603 = vunpack.c.l.b16 %v552
        %v604 = vunpack.c.h.b16 %v552
        %v605 = vunpack.c.l.b16 %v553
        %v606 = vunpack.c.h.b16 %v553
        %v607 = vunpack.c.l.b16 %v554
        %v608 = vunpack.c.h.b16 %v554
        %v609 = vunpack.c.l.b16 %v555
        %v610 = vunpack.c.h.b16 %v555
        %v611 = vunpack.c.l.b16 %v556
        %v612 = vunpack.c.h.b16 %v556
        %v613 = vunpack.c.l.b16 %v557
        %v614 = vunpack.c.h.b16 %v557
        %v615 = vunpack.c.l.b16 %v558
        %v616 = vunpack.c.h.b16 %v558
        %v617 = vunpack.c.l.b16 %v559
        %v618 = vunpack.c.h.b16 %v559
        %v619 = vunpack.c.l.b16 %v560
        %v620 = vunpack.c.h.b16 %v560
        %v621 = vunpack.c.l.b16 %v561
        %v622 = vunpack.c.h.b16 %v561
        %v623 = vunpack.c.l.b16 %v562
        %v624 = vunpack.c.h.b16 %v562
        %v625 = vunpack.c.l.b16 %v563
        %v626 = vunpack.c.h.b16 %v563
        %v627 = vunpack.c.l.b16 %v564
        %v628 = vunpack.c.h.b16 %v564
        %v629 = vpack.c.b16 %v599, %v597
        %v630 = vpack.c.b16 %v600, %v598
        %v631 = vpack.c.b16 %v603, %v601
        %v632 = vpack.c.b16 %v604, %v602
        %v633 = vpack.c.b16 %v607, %v605
        %v634 = vpack.c.b16 %v608, %v606
        %v635 = vpack.c.b16 %v611, %v609
        %v636 = vpack.c.b16 %v612, %v610
        %v637 = vpack.c.b16 %v615, %v613
        %v638 = vpack.c.b16 %v616, %v614
        %v639 = vpack.c.b16 %v619, %v617
        %v640 = vpack.c.b16 %v620, %v618
        %v641 = vpack.c.b16 %v623, %v621
        %v642 = vpack.c.b16 %v624, %v622
        %v643 = vpack.c.b16 %v627, %v625
        %v644 = vpack.c.b16 %v628, %v626
        %661 = vmatpush.bf16.msra.mxu0 %v643
        %662 = vmatpush.bf16.msra.mxu0 %v641
        %663 = vmatpush.bf16.msra.mxu0 %v639
        %664 = vmatpush.bf16.msra.mxu0 %v637
        %665 = vmatpush.bf16.msra.mxu0 %v635
        %666 = vmatpush.bf16.msra.mxu0 %v633
        %667 = vmatpush.bf16.msra.mxu0 %v631
        %668 = vmatpush.bf16.msra.mxu0 %v629
        %669 = vmatmul.bf16.gmra.mxu0 %v577
        %v670 = vpop.f32.mrf.mxu0
        %v671 = vadd.f32 %v567, %v670
        %v672 = vpop.f32.mrf.mxu0
        %v673 = vadd.f32 %v567, %v672
        %674 = vmatmul.bf16.gmra.mxu0 %v578
        %v675 = vpop.f32.mrf.mxu0
        %v676 = vadd.f32 %v567, %v675
        %v677 = vpop.f32.mrf.mxu0
        %678 = vdwg.mxu0
        %679 = vmatpush.bf16.msra.mxu0 %v644
        %680 = vmatpush.bf16.msra.mxu0 %v642
        %681 = vmatpush.bf16.msra.mxu0 %v640
        %682 = vmatpush.bf16.msra.mxu0 %v638
        %683 = vmatpush.bf16.msra.mxu0 %v636
        %684 = vmatpush.bf16.msra.mxu0 %v634
        %685 = vmatpush.bf16.msra.mxu0 %v632
        %686 = vmatpush.bf16.msra.mxu0 %v630
        %687 = vmatmul.bf16.gmra.mxu0 %v577
        %v688 = vpop.f32.mrf.mxu0
        %v689 = vadd.f32 %v568, %v688
        %v690 = vpop.f32.mrf.mxu0
        %v691 = vadd.f32 %v568, %v690
        %692 = vmatmul.bf16.gmra.mxu0 %v578
        %v693 = vpop.f32.mrf.mxu0
        %v694 = vadd.f32 %v568, %v693
        %v695 = vpop.f32.mrf.mxu0
        %696 = vdwg.mxu0
        %v697 = vxor.u32 %v671, 2147483648
        %v698 = vxor.u32 %v673, 2147483648
        %v699 = vxor.u32 %v676, 2147483648
        %v700 = vmul.f32 %v697, 1.442695
        %v701 = vpow.pop %v700
        %v702 = vmul.f32 %v698, 1.442695
        %v703 = vpow.pop %v702
        %v704 = vmul.f32 %v699, 1.442695
        %v705 = vpow.pop %v704
        %v706 = vadd.f32 %v701, 1.0
        %v707 = vadd.f32 %v703, 1.0
        %v708 = vadd.f32 %v705, 1.0
        %v709 = vrcp.pop %v706
        %v710 = vmul.f32 %v706, %v709
        %v711 = vsub.f32 1.0, %v710
        %v712 = vmul.f32 %v709, %v711
        %v713 = vadd.f32 %v709, %v712
        %vm714 = vweird.f32 %v706
        %vm715 = vweird.f32 %v709
        %vm716 = vmor %vm714, %vm715
        %v717 = vsel %vm716, %v709, %v713
        %v718 = vand.u32 2147483647, %v706
        %vm719 = vcmp.eq.f32.partialorder %v718, 8.507059e+37
        %v720 = vand.u32 %v706, 2147483648
        %v721 = vor.u32 1.1754944e-38, %v720
        %v722 = vsel %vm719, %v721, %v717
        %v723 = vmul.f32 1.0, %v722
        %v724 = vrcp.pop %v707
        %v725 = vmul.f32 %v707, %v724
        %v726 = vsub.f32 1.0, %v725
        %v727 = vmul.f32 %v724, %v726
        %v728 = vadd.f32 %v724, %v727
        %vm729 = vweird.f32 %v707
        %vm730 = vweird.f32 %v724
        %vm731 = vmor %vm729, %vm730
        %v732 = vsel %vm731, %v724, %v728
        %v733 = vand.u32 2147483647, %v707
        %vm734 = vcmp.eq.f32.partialorder %v733, 8.507059e+37
        %v735 = vand.u32 %v707, 2147483648
        %v736 = vor.u32 1.1754944e-38, %v735
        %v737 = vsel %vm734, %v736, %v732
        %v738 = vmul.f32 1.0, %v737
        %v739 = vrcp.pop %v708
        %v740 = vmul.f32 %v708, %v739
        %v741 = vsub.f32 1.0, %v740
        %v742 = vmul.f32 %v739, %v741
        %v743 = vadd.f32 %v739, %v742
        %vm744 = vweird.f32 %v708
        %vm745 = vweird.f32 %v739
        %vm746 = vmor %vm744, %vm745
        %v747 = vsel %vm746, %v739, %v743
        %v748 = vand.u32 2147483647, %v708
        %vm749 = vcmp.eq.f32.partialorder %v748, 8.507059e+37
        %v750 = vand.u32 %v708, 2147483648
        %v751 = vor.u32 1.1754944e-38, %v750
        %v752 = vsel %vm749, %v751, %v747
        %v753 = vmul.f32 1.0, %v752
        %v754 = vmul.f32 %v689, %v723
        %v755 = vmul.f32 %v691, %v738
        %v756 = vmul.f32 %v694, %v753
        %v757 = vmul.f32 %v754, %v754
        %v758 = vmul.f32 %v755, %v755
        %v759 = vmul.f32 %v756, %v756
        %v760 = vpack.c.bf16 %v755, %v754
        %v761 = vpack.c.bf16 %v758, %v757
        %v762 = vpack.c.bf16 %v756, %v756
        %v763 = vpack.c.bf16 %v759, %v759
        %v764 = vld [vmem:[%s4] sm:$0xf]
        %v765 = vld [vmem:[%s4 + $0x4] sm:$0xf]
        %v766 = vld [vmem:[%s4 + $0x8] sm:$0xf]
        %v767 = vld [vmem:[%s4 + $0xc] sm:$0xf]
        %v768 = vld [vmem:[%s4 + $0x10] sm:$0xf]
        %v769 = vld [vmem:[%s4 + $0x14] sm:$0xf]
        %v770 = vld [vmem:[%s4 + $0x18] sm:$0xf]
        %v771 = vld [vmem:[%s4 + $0x1c] sm:$0xf]
        %v772 = vld [vmem:[%s4 + $0x20] sm:$0xf]
        %v773 = vld [vmem:[%s4 + $0x24] sm:$0xf]
        %v774 = vld [vmem:[%s4 + $0x28] sm:$0xf]
        %v775 = vld [vmem:[%s4 + $0x2c] sm:$0xf]
        %v776 = vld [vmem:[%s4 + $0x30] sm:$0xf]
        %v777 = vld [vmem:[%s4 + $0x34] sm:$0xf]
        %v778 = vld [vmem:[%s4 + $0x38] sm:$0xf]
        %v779 = vld [vmem:[%s4 + $0x3c] sm:$0xf]
        %v780 = vld [vmem:[%s4 + $0x40] sm:$0xf]
        %v781 = vld [vmem:[%s4 + $0x44] sm:$0xf]
        %v782 = vld [vmem:[%s4 + $0x48] sm:$0xf]
        %v783 = vld [vmem:[%s4 + $0x4c] sm:$0xf]
        %v784 = vld [vmem:[%s4 + $0x50] sm:$0xf]
        %v785 = vld [vmem:[%s4 + $0x54] sm:$0xf]
        %v786 = vld [vmem:[%s4 + $0x58] sm:$0xf]
        %v787 = vld [vmem:[%s4 + $0x5c] sm:$0xf]
        %v788 = vld [vmem:[%s4 + $0x60] sm:$0xf]
        %v789 = vld [vmem:[%s4 + $0x64] sm:$0xf]
        %v790 = vld [vmem:[%s4 + $0x68] sm:$0xf]
        %v791 = vld [vmem:[%s4 + $0x6c] sm:$0xf]
        %v792 = vld [vmem:[%s4 + $0x70] sm:$0xf]
        %v793 = vld [vmem:[%s4 + $0x74] sm:$0xf]
        %v794 = vld [vmem:[%s4 + $0x78] sm:$0xf]
        %v795 = vld [vmem:[%s4 + $0x7c] sm:$0xf]
        %v828 = vunpack.c.l.b16 %v764
        %v829 = vunpack.c.l.b16 %v765
        %v830 = vunpack.c.l.b16 %v766
        %v831 = vunpack.c.l.b16 %v767
        %v832 = vunpack.c.l.b16 %v768
        %v833 = vunpack.c.l.b16 %v769
        %v834 = vunpack.c.l.b16 %v770
        %v835 = vunpack.c.l.b16 %v771
        %v836 = vunpack.c.l.b16 %v772
        %v837 = vunpack.c.l.b16 %v773
        %v838 = vunpack.c.l.b16 %v774
        %v839 = vunpack.c.l.b16 %v775
        %v840 = vunpack.c.l.b16 %v776
        %v841 = vunpack.c.l.b16 %v777
        %v842 = vunpack.c.l.b16 %v778
        %v843 = vunpack.c.l.b16 %v779
        %v844 = vunpack.c.l.b16 %v780
        %v845 = vunpack.c.l.b16 %v781
        %v846 = vunpack.c.l.b16 %v782
        %v847 = vunpack.c.l.b16 %v783
        %v848 = vunpack.c.l.b16 %v784
        %v849 = vunpack.c.l.b16 %v785
        %v850 = vunpack.c.l.b16 %v786
        %v851 = vunpack.c.l.b16 %v787
        %v852 = vunpack.c.l.b16 %v788
        %v853 = vunpack.c.l.b16 %v789
        %v854 = vunpack.c.l.b16 %v790
        %v855 = vunpack.c.l.b16 %v791
        %v856 = vunpack.c.l.b16 %v792
        %v857 = vunpack.c.l.b16 %v793
        %v858 = vunpack.c.l.b16 %v794
        %v859 = vunpack.c.l.b16 %v795
        %v860 = vpack.c.b16 %v829, %v828
        %v861 = vpack.c.b16 %v831, %v830
        %v862 = vpack.c.b16 %v833, %v832
        %v863 = vpack.c.b16 %v835, %v834
        %v864 = vpack.c.b16 %v837, %v836
        %v865 = vpack.c.b16 %v839, %v838
        %v866 = vpack.c.b16 %v841, %v840
        %v867 = vpack.c.b16 %v843, %v842
        %v868 = vpack.c.b16 %v845, %v844
        %v869 = vpack.c.b16 %v847, %v846
        %v870 = vpack.c.b16 %v849, %v848
        %v871 = vpack.c.b16 %v851, %v850
        %v872 = vpack.c.b16 %v853, %v852
        %v873 = vpack.c.b16 %v855, %v854
        %v874 = vpack.c.b16 %v857, %v856
        %v875 = vpack.c.b16 %v859, %v858
        %892 = vmatpush.bf16.msra.mxu0 %v867
        %893 = vmatpush.bf16.msra.mxu0 %v866
        %894 = vmatpush.bf16.msra.mxu0 %v865
        %895 = vmatpush.bf16.msra.mxu0 %v864
        %896 = vmatpush.bf16.msra.mxu0 %v863
        %897 = vmatpush.bf16.msra.mxu0 %v862
        %898 = vmatpush.bf16.msra.mxu0 %v861
        %899 = vmatpush.bf16.msra.mxu0 %v860
        %900 = vmatmul.bf16.gmra.mxu0 %v760
        %v901 = vpop.f32.mrf.mxu0
        %v902 = vadd.f32 0.0, %v901
        %v903 = vpop.f32.mrf.mxu0
        %v904 = vadd.f32 0.0, %v903
        %905 = vmatmul.bf16.gmra.mxu0 %v762
        %v906 = vpop.f32.mrf.mxu0
        %v907 = vadd.f32 0.0, %v906
        %v908 = vpop.f32.mrf.mxu0
        %909 = vdwg.mxu0
        %910 = vmatpush.bf16.msra.mxu0 %v875
        %911 = vmatpush.bf16.msra.mxu0 %v874
        %912 = vmatpush.bf16.msra.mxu0 %v873
        %913 = vmatpush.bf16.msra.mxu0 %v872
        %914 = vmatpush.bf16.msra.mxu0 %v871
        %915 = vmatpush.bf16.msra.mxu0 %v870
        %916 = vmatpush.bf16.msra.mxu0 %v869
        %917 = vmatpush.bf16.msra.mxu0 %v868
        %918 = vmatmul.bf16.gmra.mxu0 %v761
        %v919 = vpop.f32.mrf.mxu0
        %v920 = vadd.f32 %v902, %v919
        %v921 = vpop.f32.mrf.mxu0
        %v922 = vadd.f32 %v904, %v921
        %923 = vmatmul.bf16.gmra.mxu0 %v763
        %v924 = vpop.f32.mrf.mxu0
        %v925 = vadd.f32 %v907, %v924
        %v926 = vpop.f32.mrf.mxu0
        %927 = vdwg.mxu0
        %v928 = vmul.f32 %v920, %v920
        %v929 = vmul.f32 %v922, %v922
        %v930 = vmul.f32 %v925, %v925
        %934 = vrot.lane.b32.xlu0 %v920, 112
        %v935 = vpop.permute.xlu0 %934
        %936 = vrot.lane.b32.xlu0 %v922, 112
        %v937 = vpop.permute.xlu0 %936
        %938 = vrot.lane.b32.xlu0 %v925, 112
        %v939 = vpop.permute.xlu0 %938
        %v943 = vsub.f32 %v928, %v935
        %v944 = vsub.f32 %v929, %v937
        %v945 = vsub.f32 %v930, %v939
        %v946 = vmul.f32 %v943, 0.5
        %v947 = vmul.f32 %v944, 0.5
        %v948 = vmul.f32 %v945, 0.5
        %v949 = vpack.c.bf16 %v947, %v946
        %v950 = vpack.c.bf16 %v948, %v948
        %v951 = vld [vmem:[%s5] sm:$0xff]
        %v952 = vld [vmem:[%s5 + $0x8] sm:$0xff]
        %v953 = vld [vmem:[%s5 + $0x10] sm:$0xff]
        %v954 = vld [vmem:[%s5 + $0x18] sm:$0xff]
        %v955 = vld [vmem:[%s6] sm:$0xf]
        %v957 = vperm.slane %v955, 0
        %v958 = vperm.slane %v955, 1
        %v959 = vperm.slane %v955, 2
        %v960 = vperm.slane %v955, 3
        %v969 = vunpack.c.l.b16 %v951
        %v970 = vunpack.c.h.b16 %v951
        %v971 = vunpack.c.l.b16 %v952
        %v972 = vunpack.c.h.b16 %v952
        %v973 = vunpack.c.l.b16 %v953
        %v974 = vunpack.c.h.b16 %v953
        %v975 = vunpack.c.l.b16 %v954
        %v976 = vunpack.c.h.b16 %v954
        %v977 = vpack.c.b16 %v973, %v969
        %v978 = vpack.c.b16 %v974, %v970
        %v979 = vpack.c.b16 %v975, %v971
        %v980 = vpack.c.b16 %v976, %v972
        %vm985 = vcmask 130048
        %v987 = vsel %vm985, %v949, 0
        %v990 = vsel %vm985, %v950, 0
        %992 = vmatpush.bf16.msra.mxu0 0
        %993 = vmatpush.bf16.msra.mxu0 0
        %994 = vmatpush.bf16.msra.mxu0 0
        %995 = vmatpush.bf16.msra.mxu0 0
        %996 = vmatpush.bf16.msra.mxu0 0
        %997 = vmatpush.bf16.msra.mxu0 0
        %998 = vmatpush.bf16.msra.mxu0 0
        %999 = vmatpush.bf16.msra.mxu0 %v977
        %1000 = vmatmul.bf16.gmra.mxu0 %v987
        %v1001 = vpop.f32.mrf.mxu0
        %v1002 = vadd.f32 %v957, %v1001
        %v1003 = vpop.f32.mrf.mxu0
        %v1004 = vadd.f32 %v957, %v1003
        %1005 = vmatmul.bf16.gmra.mxu0 %v990
        %v1006 = vpop.f32.mrf.mxu0
        %v1007 = vadd.f32 %v957, %v1006
        %v1008 = vpop.f32.mrf.mxu0
        %1009 = vdwg.mxu0
        %1010 = vmatpush.bf16.msra.mxu0 0
        %1011 = vmatpush.bf16.msra.mxu0 0
        %1012 = vmatpush.bf16.msra.mxu0 0
        %1013 = vmatpush.bf16.msra.mxu0 0
        %1014 = vmatpush.bf16.msra.mxu0 0
        %1015 = vmatpush.bf16.msra.mxu0 0
        %1016 = vmatpush.bf16.msra.mxu0 0
        %1017 = vmatpush.bf16.msra.mxu0 %v978
        %1018 = vmatmul.bf16.gmra.mxu0 %v987
        %v1019 = vpop.f32.mrf.mxu0
        %v1020 = vadd.f32 %v958, %v1019
        %v1021 = vpop.f32.mrf.mxu0
        %v1022 = vadd.f32 %v958, %v1021
        %1023 = vmatmul.bf16.gmra.mxu0 %v990
        %v1024 = vpop.f32.mrf.mxu0
        %v1025 = vadd.f32 %v958, %v1024
        %v1026 = vpop.f32.mrf.mxu0
        %1027 = vdwg.mxu0
        %1028 = vmatpush.bf16.msra.mxu0 0
        %1029 = vmatpush.bf16.msra.mxu0 0
        %1030 = vmatpush.bf16.msra.mxu0 0
        %1031 = vmatpush.bf16.msra.mxu0 0
        %1032 = vmatpush.bf16.msra.mxu0 0
        %1033 = vmatpush.bf16.msra.mxu0 0
        %1034 = vmatpush.bf16.msra.mxu0 0
        %1035 = vmatpush.bf16.msra.mxu0 %v979
        %1036 = vmatmul.bf16.gmra.mxu0 %v987
        %v1037 = vpop.f32.mrf.mxu0
        %v1038 = vadd.f32 %v959, %v1037
        %v1039 = vpop.f32.mrf.mxu0
        %v1040 = vadd.f32 %v959, %v1039
        %1041 = vmatmul.bf16.gmra.mxu0 %v990
        %v1042 = vpop.f32.mrf.mxu0
        %v1043 = vadd.f32 %v959, %v1042
        %v1044 = vpop.f32.mrf.mxu0
        %1045 = vdwg.mxu0
        %1046 = vmatpush.bf16.msra.mxu0 0
        %1047 = vmatpush.bf16.msra.mxu0 0
        %1048 = vmatpush.bf16.msra.mxu0 0
        %1049 = vmatpush.bf16.msra.mxu0 0
        %1050 = vmatpush.bf16.msra.mxu0 0
        %1051 = vmatpush.bf16.msra.mxu0 0
        %1052 = vmatpush.bf16.msra.mxu0 0
        %1053 = vmatpush.bf16.msra.mxu0 %v980
        %1054 = vmatmul.bf16.gmra.mxu0 %v987
        %v1055 = vpop.f32.mrf.mxu0
        %v1056 = vadd.f32 %v960, %v1055
        %v1057 = vpop.f32.mrf.mxu0
        %v1058 = vadd.f32 %v960, %v1057
        %1059 = vmatmul.bf16.gmra.mxu0 %v990
        %v1060 = vpop.f32.mrf.mxu0
        %v1061 = vadd.f32 %v960, %v1060
        %v1062 = vpop.f32.mrf.mxu0
        %1063 = vdwg.mxu0
        %v1064 = vmax.f32 %v1002, 0.0
        %v1065 = vmax.f32 %v1020, 0.0
        %v1066 = vmax.f32 %v1038, 0.0
        %v1067 = vmax.f32 %v1056, 0.0
        %v1068 = vmax.f32 %v1004, 0.0
        %v1069 = vmax.f32 %v1022, 0.0
        %v1070 = vmax.f32 %v1040, 0.0
        %v1071 = vmax.f32 %v1058, 0.0
        %v1072 = vmax.f32 %v1007, 0.0
        %v1073 = vmax.f32 %v1025, 0.0
        %v1074 = vmax.f32 %v1043, 0.0
        %v1075 = vmax.f32 %v1061, 0.0
        %v1076 = vpack.c.bf16 %v1068, %v1064
        %v1077 = vpack.c.bf16 %v1069, %v1065
        %v1078 = vpack.c.bf16 %v1070, %v1066
        %v1079 = vpack.c.bf16 %v1071, %v1067
        %v1080 = vpack.c.bf16 %v1072, %v1072
        %v1081 = vpack.c.bf16 %v1073, %v1073
        %v1082 = vpack.c.bf16 %v1074, %v1074
        %v1083 = vpack.c.bf16 %v1075, %v1075
        %v1084 = vld [vmem:[#allocation5] sm:$0xff]
        %v1085 = vld [vmem:[#allocation5 + $0x8] sm:$0xff]
        %v1086 = vld [vmem:[#allocation5 + $0x10] sm:$0xff]
        %v1087 = vld [vmem:[#allocation5 + $0x18] sm:$0xff]
        %v1088 = vld [vmem:[#allocation5 + $0x20] sm:$0xff]
        %v1089 = vld [vmem:[#allocation5 + $0x28] sm:$0xff]
        %v1090 = vld [vmem:[#allocation5 + $0x30] sm:$0xff]
        %v1091 = vld [vmem:[#allocation5 + $0x38] sm:$0xff]
        %v1092 = vld [vmem:[#allocation5 + $0x40] sm:$0xff]
        %v1093 = vld [vmem:[#allocation5 + $0x48] sm:$0xff]
        %v1094 = vld [vmem:[#allocation5 + $0x50] sm:$0xff]
        %v1095 = vld [vmem:[#allocation5 + $0x58] sm:$0xff]
        %v1096 = vld [vmem:[#allocation5 + $0x60] sm:$0xff]
        %v1097 = vld [vmem:[#allocation5 + $0x68] sm:$0xff]
        %v1098 = vld [vmem:[#allocation5 + $0x70] sm:$0xff]
        %v1099 = vld [vmem:[#allocation5 + $0x78] sm:$0xff]
        %v1100 = vld [vmem:[#allocation5 + $0x80] sm:$0xff]
        %v1101 = vld [vmem:[#allocation5 + $0x88] sm:$0xff]
        %v1102 = vld [vmem:[#allocation5 + $0x90] sm:$0xff]
        %v1103 = vld [vmem:[#allocation5 + $0x98] sm:$0xff]
        %v1104 = vld [vmem:[#allocation5 + $0xa0] sm:$0xff]
        %v1105 = vld [vmem:[#allocation5 + $0xa8] sm:$0xff]
        %v1106 = vld [vmem:[#allocation5 + $0xb0] sm:$0xff]
        %v1107 = vld [vmem:[#allocation5 + $0xb8] sm:$0xff]
        %v1108 = vld [vmem:[#allocation5 + $0xc0] sm:$0xff]
        %v1109 = vld [vmem:[#allocation5 + $0xc8] sm:$0xff]
        %v1110 = vld [vmem:[#allocation5 + $0xd0] sm:$0xff]
        %v1111 = vld [vmem:[#allocation5 + $0xd8] sm:$0xff]
        %v1112 = vld [vmem:[#allocation5 + $0xe0] sm:$0xff]
        %v1113 = vld [vmem:[#allocation5 + $0xe8] sm:$0xff]
        %v1114 = vld [vmem:[#allocation5 + $0xf0] sm:$0xff]
        %v1115 = vld [vmem:[#allocation5 + $0xf8] sm:$0xff]
        %v1116 = vld [vmem:[#allocation5 + $0x100] sm:$0xff]
        %v1117 = vld [vmem:[#allocation5 + $0x108] sm:$0xff]
        %v1118 = vld [vmem:[#allocation5 + $0x110] sm:$0xff]
        %v1119 = vld [vmem:[#allocation5 + $0x118] sm:$0xff]
        %v1120 = vld [vmem:[#allocation5 + $0x120] sm:$0xff]
        %v1121 = vld [vmem:[#allocation5 + $0x128] sm:$0xff]
        %v1122 = vld [vmem:[#allocation5 + $0x130] sm:$0xff]
        %v1123 = vld [vmem:[#allocation5 + $0x138] sm:$0xff]
        %v1124 = vld [vmem:[#allocation5 + $0x140] sm:$0xff]
        %v1125 = vld [vmem:[#allocation5 + $0x148] sm:$0xff]
        %v1126 = vld [vmem:[#allocation5 + $0x150] sm:$0xff]
        %v1127 = vld [vmem:[#allocation5 + $0x158] sm:$0xff]
        %v1128 = vld [vmem:[#allocation5 + $0x160] sm:$0xff]
        %v1129 = vld [vmem:[#allocation5 + $0x168] sm:$0xff]
        %v1130 = vld [vmem:[#allocation5 + $0x170] sm:$0xff]
        %v1131 = vld [vmem:[#allocation5 + $0x178] sm:$0xff]
        %v1132 = vld [vmem:[#allocation5 + $0x180] sm:$0xff]
        %v1133 = vld [vmem:[#allocation5 + $0x188] sm:$0xff]
        %v1134 = vld [vmem:[#allocation5 + $0x190] sm:$0xff]
        %v1135 = vld [vmem:[#allocation5 + $0x198] sm:$0xff]
        %v1136 = vld [vmem:[#allocation5 + $0x1a0] sm:$0xff]
        %v1137 = vld [vmem:[#allocation5 + $0x1a8] sm:$0xff]
        %v1138 = vld [vmem:[#allocation5 + $0x1b0] sm:$0xff]
        %v1139 = vld [vmem:[#allocation5 + $0x1b8] sm:$0xff]
        %v1140 = vld [vmem:[#allocation5 + $0x1c0] sm:$0xff]
        %v1141 = vld [vmem:[#allocation5 + $0x1c8] sm:$0xff]
        %v1142 = vld [vmem:[#allocation5 + $0x1d0] sm:$0xff]
        %v1143 = vld [vmem:[#allocation5 + $0x1d8] sm:$0xff]
        %v1144 = vld [vmem:[#allocation5 + $0x1e0] sm:$0xff]
        %v1145 = vld [vmem:[#allocation5 + $0x1e8] sm:$0xff]
        %v1146 = vld [vmem:[#allocation5 + $0x1f0] sm:$0xff]
        %v1147 = vld [vmem:[#allocation5 + $0x1f8] sm:$0xff]
        %v1148 = vld [vmem:[#allocation5 + $0x200] sm:$0xff]
        %v1149 = vld [vmem:[#allocation5 + $0x208] sm:$0xff]
        %v1150 = vld [vmem:[#allocation5 + $0x210] sm:$0xff]
        %v1151 = vld [vmem:[#allocation5 + $0x218] sm:$0xff]
        %v1152 = vld [vmem:[#allocation5 + $0x220] sm:$0xff]
        %v1153 = vld [vmem:[#allocation5 + $0x228] sm:$0xff]
        %v1154 = vld [vmem:[#allocation5 + $0x230] sm:$0xff]
        %v1155 = vld [vmem:[#allocation5 + $0x238] sm:$0xff]
        %v1156 = vld [vmem:[#allocation5 + $0x240] sm:$0xff]
        %v1157 = vld [vmem:[#allocation5 + $0x248] sm:$0xff]
        %v1158 = vld [vmem:[#allocation5 + $0x250] sm:$0xff]
        %v1159 = vld [vmem:[#allocation5 + $0x258] sm:$0xff]
        %v1160 = vld [vmem:[#allocation5 + $0x260] sm:$0xff]
        %v1161 = vld [vmem:[#allocation5 + $0x268] sm:$0xff]
        %v1162 = vld [vmem:[#allocation5 + $0x270] sm:$0xff]
        %v1163 = vld [vmem:[#allocation5 + $0x278] sm:$0xff]
        %v1164 = vld [vmem:[#allocation5 + $0x280] sm:$0xff]
        %v1165 = vld [vmem:[#allocation5 + $0x288] sm:$0xff]
        %v1166 = vld [vmem:[#allocation5 + $0x290] sm:$0xff]
        %v1167 = vld [vmem:[#allocation5 + $0x298] sm:$0xff]
        %v1168 = vld [vmem:[#allocation5 + $0x2a0] sm:$0xff]
        %v1169 = vld [vmem:[#allocation5 + $0x2a8] sm:$0xff]
        %v1170 = vld [vmem:[#allocation5 + $0x2b0] sm:$0xff]
        %v1171 = vld [vmem:[#allocation5 + $0x2b8] sm:$0xff]
        %v1172 = vld [vmem:[#allocation5 + $0x2c0] sm:$0xff]
        %v1173 = vld [vmem:[#allocation5 + $0x2c8] sm:$0xff]
        %v1174 = vld [vmem:[#allocation5 + $0x2d0] sm:$0xff]
        %v1175 = vld [vmem:[#allocation5 + $0x2d8] sm:$0xff]
        %v1176 = vld [vmem:[#allocation5 + $0x2e0] sm:$0xff]
        %v1177 = vld [vmem:[#allocation5 + $0x2e8] sm:$0xff]
        %v1178 = vld [vmem:[#allocation5 + $0x2f0] sm:$0xff]
        %v1179 = vld [vmem:[#allocation5 + $0x2f8] sm:$0xff]
        %v1180 = vld [vmem:[#allocation5 + $0x300] sm:$0xff]
        %v1181 = vld [vmem:[#allocation5 + $0x308] sm:$0xff]
        %v1182 = vld [vmem:[#allocation5 + $0x310] sm:$0xff]
        %v1183 = vld [vmem:[#allocation5 + $0x318] sm:$0xff]
        %v1184 = vld [vmem:[#allocation5 + $0x320] sm:$0xff]
        %v1185 = vld [vmem:[#allocation5 + $0x328] sm:$0xff]
        %v1186 = vld [vmem:[#allocation5 + $0x330] sm:$0xff]
        %v1187 = vld [vmem:[#allocation5 + $0x338] sm:$0xff]
        %v1188 = vld [vmem:[#allocation5 + $0x340] sm:$0xff]
        %v1189 = vld [vmem:[#allocation5 + $0x348] sm:$0xff]
        %v1190 = vld [vmem:[#allocation5 + $0x350] sm:$0xff]
        %v1191 = vld [vmem:[#allocation5 + $0x358] sm:$0xff]
        %v1192 = vld [vmem:[#allocation5 + $0x360] sm:$0xff]
        %v1193 = vld [vmem:[#allocation5 + $0x368] sm:$0xff]
        %v1194 = vld [vmem:[#allocation5 + $0x370] sm:$0xff]
        %v1195 = vld [vmem:[#allocation5 + $0x378] sm:$0xff]
        %v1196 = vld [vmem:[#allocation5 + $0x380] sm:$0xff]
        %v1197 = vld [vmem:[#allocation5 + $0x388] sm:$0xff]
        %v1198 = vld [vmem:[#allocation5 + $0x390] sm:$0xff]
        %v1199 = vld [vmem:[#allocation5 + $0x398] sm:$0xff]
        %v1200 = vld [vmem:[#allocation5 + $0x3a0] sm:$0xff]
        %v1201 = vld [vmem:[#allocation5 + $0x3a8] sm:$0xff]
        %v1202 = vld [vmem:[#allocation5 + $0x3b0] sm:$0xff]
        %v1203 = vld [vmem:[#allocation5 + $0x3b8] sm:$0xff]
        %v1204 = vld [vmem:[#allocation5 + $0x3c0] sm:$0xff]
        %v1205 = vld [vmem:[#allocation5 + $0x3c8] sm:$0xff]
        %v1206 = vld [vmem:[#allocation5 + $0x3d0] sm:$0xff]
        %v1207 = vld [vmem:[#allocation5 + $0x3d8] sm:$0xff]
        %v1208 = vld [vmem:[#allocation5 + $0x3e0] sm:$0xff]
        %v1209 = vld [vmem:[#allocation5 + $0x3e8] sm:$0xff]
        %v1210 = vld [vmem:[#allocation5 + $0x3f0] sm:$0xff]
        %v1211 = vld [vmem:[#allocation5 + $0x3f8] sm:$0xff]
        %v1212 = vld [vmem:[%s8] sm:$0xf]
        %v1214 = vperm.slane %v1212, 0
        %v1215 = vperm.slane %v1212, 1
        %v1216 = vperm.slane %v1212, 2
        %v1217 = vperm.slane %v1212, 3
        %v1350 = vunpack.c.l.b16 %v1084
        %v1351 = vunpack.c.h.b16 %v1084
        %v1352 = vunpack.c.l.b16 %v1085
        %v1353 = vunpack.c.h.b16 %v1085
        %v1354 = vunpack.c.l.b16 %v1086
        %v1355 = vunpack.c.h.b16 %v1086
        %v1356 = vunpack.c.l.b16 %v1087
        %v1357 = vunpack.c.h.b16 %v1087
        %v1358 = vunpack.c.l.b16 %v1088
        %v1359 = vunpack.c.h.b16 %v1088
        %v1360 = vunpack.c.l.b16 %v1089
        %v1361 = vunpack.c.h.b16 %v1089
        %v1362 = vunpack.c.l.b16 %v1090
        %v1363 = vunpack.c.h.b16 %v1090
        %v1364 = vunpack.c.l.b16 %v1091
        %v1365 = vunpack.c.h.b16 %v1091
        %v1366 = vunpack.c.l.b16 %v1092
        %v1367 = vunpack.c.h.b16 %v1092
        %v1368 = vunpack.c.l.b16 %v1093
        %v1369 = vunpack.c.h.b16 %v1093
        %v1370 = vunpack.c.l.b16 %v1094
        %v1371 = vunpack.c.h.b16 %v1094
        %v1372 = vunpack.c.l.b16 %v1095
        %v1373 = vunpack.c.h.b16 %v1095
        %v1374 = vunpack.c.l.b16 %v1096
        %v1375 = vunpack.c.h.b16 %v1096
        %v1376 = vunpack.c.l.b16 %v1097
        %v1377 = vunpack.c.h.b16 %v1097
        %v1378 = vunpack.c.l.b16 %v1098
        %v1379 = vunpack.c.h.b16 %v1098
        %v1380 = vunpack.c.l.b16 %v1099
        %v1381 = vunpack.c.h.b16 %v1099
        %v1382 = vunpack.c.l.b16 %v1100
        %v1383 = vunpack.c.h.b16 %v1100
        %v1384 = vunpack.c.l.b16 %v1101
        %v1385 = vunpack.c.h.b16 %v1101
        %v1386 = vunpack.c.l.b16 %v1102
        %v1387 = vunpack.c.h.b16 %v1102
        %v1388 = vunpack.c.l.b16 %v1103
        %v1389 = vunpack.c.h.b16 %v1103
        %v1390 = vunpack.c.l.b16 %v1104
        %v1391 = vunpack.c.h.b16 %v1104
        %v1392 = vunpack.c.l.b16 %v1105
        %v1393 = vunpack.c.h.b16 %v1105
        %v1394 = vunpack.c.l.b16 %v1106
        %v1395 = vunpack.c.h.b16 %v1106
        %v1396 = vunpack.c.l.b16 %v1107
        %v1397 = vunpack.c.h.b16 %v1107
        %v1398 = vunpack.c.l.b16 %v1108
        %v1399 = vunpack.c.h.b16 %v1108
        %v1400 = vunpack.c.l.b16 %v1109
        %v1401 = vunpack.c.h.b16 %v1109
        %v1402 = vunpack.c.l.b16 %v1110
        %v1403 = vunpack.c.h.b16 %v1110
        %v1404 = vunpack.c.l.b16 %v1111
        %v1405 = vunpack.c.h.b16 %v1111
        %v1406 = vunpack.c.l.b16 %v1112
        %v1407 = vunpack.c.h.b16 %v1112
        %v1408 = vunpack.c.l.b16 %v1113
        %v1409 = vunpack.c.h.b16 %v1113
        %v1410 = vunpack.c.l.b16 %v1114
        %v1411 = vunpack.c.h.b16 %v1114
        %v1412 = vunpack.c.l.b16 %v1115
        %v1413 = vunpack.c.h.b16 %v1115
        %v1414 = vunpack.c.l.b16 %v1116
        %v1415 = vunpack.c.h.b16 %v1116
        %v1416 = vunpack.c.l.b16 %v1117
        %v1417 = vunpack.c.h.b16 %v1117
        %v1418 = vunpack.c.l.b16 %v1118
        %v1419 = vunpack.c.h.b16 %v1118
        %v1420 = vunpack.c.l.b16 %v1119
        %v1421 = vunpack.c.h.b16 %v1119
        %v1422 = vunpack.c.l.b16 %v1120
        %v1423 = vunpack.c.h.b16 %v1120
        %v1424 = vunpack.c.l.b16 %v1121
        %v1425 = vunpack.c.h.b16 %v1121
        %v1426 = vunpack.c.l.b16 %v1122
        %v1427 = vunpack.c.h.b16 %v1122
        %v1428 = vunpack.c.l.b16 %v1123
        %v1429 = vunpack.c.h.b16 %v1123
        %v1430 = vunpack.c.l.b16 %v1124
        %v1431 = vunpack.c.h.b16 %v1124
        %v1432 = vunpack.c.l.b16 %v1125
        %v1433 = vunpack.c.h.b16 %v1125
        %v1434 = vunpack.c.l.b16 %v1126
        %v1435 = vunpack.c.h.b16 %v1126
        %v1436 = vunpack.c.l.b16 %v1127
        %v1437 = vunpack.c.h.b16 %v1127
        %v1438 = vunpack.c.l.b16 %v1128
        %v1439 = vunpack.c.h.b16 %v1128
        %v1440 = vunpack.c.l.b16 %v1129
        %v1441 = vunpack.c.h.b16 %v1129
        %v1442 = vunpack.c.l.b16 %v1130
        %v1443 = vunpack.c.h.b16 %v1130
        %v1444 = vunpack.c.l.b16 %v1131
        %v1445 = vunpack.c.h.b16 %v1131
        %v1446 = vunpack.c.l.b16 %v1132
        %v1447 = vunpack.c.h.b16 %v1132
        %v1448 = vunpack.c.l.b16 %v1133
        %v1449 = vunpack.c.h.b16 %v1133
        %v1450 = vunpack.c.l.b16 %v1134
        %v1451 = vunpack.c.h.b16 %v1134
        %v1452 = vunpack.c.l.b16 %v1135
        %v1453 = vunpack.c.h.b16 %v1135
        %v1454 = vunpack.c.l.b16 %v1136
        %v1455 = vunpack.c.h.b16 %v1136
        %v1456 = vunpack.c.l.b16 %v1137
        %v1457 = vunpack.c.h.b16 %v1137
        %v1458 = vunpack.c.l.b16 %v1138
        %v1459 = vunpack.c.h.b16 %v1138
        %v1460 = vunpack.c.l.b16 %v1139
        %v1461 = vunpack.c.h.b16 %v1139
        %v1462 = vunpack.c.l.b16 %v1140
        %v1463 = vunpack.c.h.b16 %v1140
        %v1464 = vunpack.c.l.b16 %v1141
        %v1465 = vunpack.c.h.b16 %v1141
        %v1466 = vunpack.c.l.b16 %v1142
        %v1467 = vunpack.c.h.b16 %v1142
        %v1468 = vunpack.c.l.b16 %v1143
        %v1469 = vunpack.c.h.b16 %v1143
        %v1470 = vunpack.c.l.b16 %v1144
        %v1471 = vunpack.c.h.b16 %v1144
        %v1472 = vunpack.c.l.b16 %v1145
        %v1473 = vunpack.c.h.b16 %v1145
        %v1474 = vunpack.c.l.b16 %v1146
        %v1475 = vunpack.c.h.b16 %v1146
        %v1476 = vunpack.c.l.b16 %v1147
        %v1477 = vunpack.c.h.b16 %v1147
        %v1478 = vunpack.c.l.b16 %v1148
        %v1479 = vunpack.c.h.b16 %v1148
        %v1480 = vunpack.c.l.b16 %v1149
        %v1481 = vunpack.c.h.b16 %v1149
        %v1482 = vunpack.c.l.b16 %v1150
        %v1483 = vunpack.c.h.b16 %v1150
        %v1484 = vunpack.c.l.b16 %v1151
        %v1485 = vunpack.c.h.b16 %v1151
        %v1486 = vunpack.c.l.b16 %v1152
        %v1487 = vunpack.c.h.b16 %v1152
        %v1488 = vunpack.c.l.b16 %v1153
        %v1489 = vunpack.c.h.b16 %v1153
        %v1490 = vunpack.c.l.b16 %v1154
        %v1491 = vunpack.c.h.b16 %v1154
        %v1492 = vunpack.c.l.b16 %v1155
        %v1493 = vunpack.c.h.b16 %v1155
        %v1494 = vunpack.c.l.b16 %v1156
        %v1495 = vunpack.c.h.b16 %v1156
        %v1496 = vunpack.c.l.b16 %v1157
        %v1497 = vunpack.c.h.b16 %v1157
        %v1498 = vunpack.c.l.b16 %v1158
        %v1499 = vunpack.c.h.b16 %v1158
        %v1500 = vunpack.c.l.b16 %v1159
        %v1501 = vunpack.c.h.b16 %v1159
        %v1502 = vunpack.c.l.b16 %v1160
        %v1503 = vunpack.c.h.b16 %v1160
        %v1504 = vunpack.c.l.b16 %v1161
        %v1505 = vunpack.c.h.b16 %v1161
        %v1506 = vunpack.c.l.b16 %v1162
        %v1507 = vunpack.c.h.b16 %v1162
        %v1508 = vunpack.c.l.b16 %v1163
        %v1509 = vunpack.c.h.b16 %v1163
        %v1510 = vunpack.c.l.b16 %v1164
        %v1511 = vunpack.c.h.b16 %v1164
        %v1512 = vunpack.c.l.b16 %v1165
        %v1513 = vunpack.c.h.b16 %v1165
        %v1514 = vunpack.c.l.b16 %v1166
        %v1515 = vunpack.c.h.b16 %v1166
        %v1516 = vunpack.c.l.b16 %v1167
        %v1517 = vunpack.c.h.b16 %v1167
        %v1518 = vunpack.c.l.b16 %v1168
        %v1519 = vunpack.c.h.b16 %v1168
        %v1520 = vunpack.c.l.b16 %v1169
        %v1521 = vunpack.c.h.b16 %v1169
        %v1522 = vunpack.c.l.b16 %v1170
        %v1523 = vunpack.c.h.b16 %v1170
        %v1524 = vunpack.c.l.b16 %v1171
        %v1525 = vunpack.c.h.b16 %v1171
        %v1526 = vunpack.c.l.b16 %v1172
        %v1527 = vunpack.c.h.b16 %v1172
        %v1528 = vunpack.c.l.b16 %v1173
        %v1529 = vunpack.c.h.b16 %v1173
        %v1530 = vunpack.c.l.b16 %v1174
        %v1531 = vunpack.c.h.b16 %v1174
        %v1532 = vunpack.c.l.b16 %v1175
        %v1533 = vunpack.c.h.b16 %v1175
        %v1534 = vunpack.c.l.b16 %v1176
        %v1535 = vunpack.c.h.b16 %v1176
        %v1536 = vunpack.c.l.b16 %v1177
        %v1537 = vunpack.c.h.b16 %v1177
        %v1538 = vunpack.c.l.b16 %v1178
        %v1539 = vunpack.c.h.b16 %v1178
        %v1540 = vunpack.c.l.b16 %v1179
        %v1541 = vunpack.c.h.b16 %v1179
        %v1542 = vunpack.c.l.b16 %v1180
        %v1543 = vunpack.c.h.b16 %v1180
        %v1544 = vunpack.c.l.b16 %v1181
        %v1545 = vunpack.c.h.b16 %v1181
        %v1546 = vunpack.c.l.b16 %v1182
        %v1547 = vunpack.c.h.b16 %v1182
        %v1548 = vunpack.c.l.b16 %v1183
        %v1549 = vunpack.c.h.b16 %v1183
        %v1550 = vunpack.c.l.b16 %v1184
        %v1551 = vunpack.c.h.b16 %v1184
        %v1552 = vunpack.c.l.b16 %v1185
        %v1553 = vunpack.c.h.b16 %v1185
        %v1554 = vunpack.c.l.b16 %v1186
        %v1555 = vunpack.c.h.b16 %v1186
        %v1556 = vunpack.c.l.b16 %v1187
        %v1557 = vunpack.c.h.b16 %v1187
        %v1558 = vunpack.c.l.b16 %v1188
        %v1559 = vunpack.c.h.b16 %v1188
        %v1560 = vunpack.c.l.b16 %v1189
        %v1561 = vunpack.c.h.b16 %v1189
        %v1562 = vunpack.c.l.b16 %v1190
        %v1563 = vunpack.c.h.b16 %v1190
        %v1564 = vunpack.c.l.b16 %v1191
        %v1565 = vunpack.c.h.b16 %v1191
        %v1566 = vunpack.c.l.b16 %v1192
        %v1567 = vunpack.c.h.b16 %v1192
        %v1568 = vunpack.c.l.b16 %v1193
        %v1569 = vunpack.c.h.b16 %v1193
        %v1570 = vunpack.c.l.b16 %v1194
        %v1571 = vunpack.c.h.b16 %v1194
        %v1572 = vunpack.c.l.b16 %v1195
        %v1573 = vunpack.c.h.b16 %v1195
        %v1574 = vunpack.c.l.b16 %v1196
        %v1575 = vunpack.c.h.b16 %v1196
        %v1576 = vunpack.c.l.b16 %v1197
        %v1577 = vunpack.c.h.b16 %v1197
        %v1578 = vunpack.c.l.b16 %v1198
        %v1579 = vunpack.c.h.b16 %v1198
        %v1580 = vunpack.c.l.b16 %v1199
        %v1581 = vunpack.c.h.b16 %v1199
        %v1582 = vunpack.c.l.b16 %v1200
        %v1583 = vunpack.c.h.b16 %v1200
        %v1584 = vunpack.c.l.b16 %v1201
        %v1585 = vunpack.c.h.b16 %v1201
        %v1586 = vunpack.c.l.b16 %v1202
        %v1587 = vunpack.c.h.b16 %v1202
        %v1588 = vunpack.c.l.b16 %v1203
        %v1589 = vunpack.c.h.b16 %v1203
        %v1590 = vunpack.c.l.b16 %v1204
        %v1591 = vunpack.c.h.b16 %v1204
        %v1592 = vunpack.c.l.b16 %v1205
        %v1593 = vunpack.c.h.b16 %v1205
        %v1594 = vunpack.c.l.b16 %v1206
        %v1595 = vunpack.c.h.b16 %v1206
        %v1596 = vunpack.c.l.b16 %v1207
        %v1597 = vunpack.c.h.b16 %v1207
        %v1598 = vunpack.c.l.b16 %v1208
        %v1599 = vunpack.c.h.b16 %v1208
        %v1600 = vunpack.c.l.b16 %v1209
        %v1601 = vunpack.c.h.b16 %v1209
        %v1602 = vunpack.c.l.b16 %v1210
        %v1603 = vunpack.c.h.b16 %v1210
        %v1604 = vunpack.c.l.b16 %v1211
        %v1605 = vunpack.c.h.b16 %v1211
        %v1606 = vpack.c.b16 %v1354, %v1350
        %v1607 = vpack.c.b16 %v1355, %v1351
        %v1608 = vpack.c.b16 %v1356, %v1352
        %v1609 = vpack.c.b16 %v1357, %v1353
        %v1610 = vpack.c.b16 %v1362, %v1358
        %v1611 = vpack.c.b16 %v1363, %v1359
        %v1612 = vpack.c.b16 %v1364, %v1360
        %v1613 = vpack.c.b16 %v1365, %v1361
        %v1614 = vpack.c.b16 %v1370, %v1366
        %v1615 = vpack.c.b16 %v1371, %v1367
        %v1616 = vpack.c.b16 %v1372, %v1368
        %v1617 = vpack.c.b16 %v1373, %v1369
        %v1618 = vpack.c.b16 %v1378, %v1374
        %v1619 = vpack.c.b16 %v1379, %v1375
        %v1620 = vpack.c.b16 %v1380, %v1376
        %v1621 = vpack.c.b16 %v1381, %v1377
        %v1622 = vpack.c.b16 %v1386, %v1382
        %v1623 = vpack.c.b16 %v1387, %v1383
        %v1624 = vpack.c.b16 %v1388, %v1384
        %v1625 = vpack.c.b16 %v1389, %v1385
        %v1626 = vpack.c.b16 %v1394, %v1390
        %v1627 = vpack.c.b16 %v1395, %v1391
        %v1628 = vpack.c.b16 %v1396, %v1392
        %v1629 = vpack.c.b16 %v1397, %v1393
        %v1630 = vpack.c.b16 %v1402, %v1398
        %v1631 = vpack.c.b16 %v1403, %v1399
        %v1632 = vpack.c.b16 %v1404, %v1400
        %v1633 = vpack.c.b16 %v1405, %v1401
        %v1634 = vpack.c.b16 %v1410, %v1406
        %v1635 = vpack.c.b16 %v1411, %v1407
        %v1636 = vpack.c.b16 %v1412, %v1408
        %v1637 = vpack.c.b16 %v1413, %v1409
        %v1638 = vpack.c.b16 %v1418, %v1414
        %v1639 = vpack.c.b16 %v1419, %v1415
        %v1640 = vpack.c.b16 %v1420, %v1416
        %v1641 = vpack.c.b16 %v1421, %v1417
        %v1642 = vpack.c.b16 %v1426, %v1422
        %v1643 = vpack.c.b16 %v1427, %v1423
        %v1644 = vpack.c.b16 %v1428, %v1424
        %v1645 = vpack.c.b16 %v1429, %v1425
        %v1646 = vpack.c.b16 %v1434, %v1430
        %v1647 = vpack.c.b16 %v1435, %v1431
        %v1648 = vpack.c.b16 %v1436, %v1432
        %v1649 = vpack.c.b16 %v1437, %v1433
        %v1650 = vpack.c.b16 %v1442, %v1438
        %v1651 = vpack.c.b16 %v1443, %v1439
        %v1652 = vpack.c.b16 %v1444, %v1440
        %v1653 = vpack.c.b16 %v1445, %v1441
        %v1654 = vpack.c.b16 %v1450, %v1446
        %v1655 = vpack.c.b16 %v1451, %v1447
        %v1656 = vpack.c.b16 %v1452, %v1448
        %v1657 = vpack.c.b16 %v1453, %v1449
        %v1658 = vpack.c.b16 %v1458, %v1454
        %v1659 = vpack.c.b16 %v1459, %v1455
        %v1660 = vpack.c.b16 %v1460, %v1456
        %v1661 = vpack.c.b16 %v1461, %v1457
        %v1662 = vpack.c.b16 %v1466, %v1462
        %v1663 = vpack.c.b16 %v1467, %v1463
        %v1664 = vpack.c.b16 %v1468, %v1464
        %v1665 = vpack.c.b16 %v1469, %v1465
        %v1666 = vpack.c.b16 %v1474, %v1470
        %v1667 = vpack.c.b16 %v1475, %v1471
        %v1668 = vpack.c.b16 %v1476, %v1472
        %v1669 = vpack.c.b16 %v1477, %v1473
        %v1670 = vpack.c.b16 %v1482, %v1478
        %v1671 = vpack.c.b16 %v1483, %v1479
        %v1672 = vpack.c.b16 %v1484, %v1480
        %v1673 = vpack.c.b16 %v1485, %v1481
        %v1674 = vpack.c.b16 %v1490, %v1486
        %v1675 = vpack.c.b16 %v1491, %v1487
        %v1676 = vpack.c.b16 %v1492, %v1488
        %v1677 = vpack.c.b16 %v1493, %v1489
        %v1678 = vpack.c.b16 %v1498, %v1494
        %v1679 = vpack.c.b16 %v1499, %v1495
        %v1680 = vpack.c.b16 %v1500, %v1496
        %v1681 = vpack.c.b16 %v1501, %v1497
        %v1682 = vpack.c.b16 %v1506, %v1502
        %v1683 = vpack.c.b16 %v1507, %v1503
        %v1684 = vpack.c.b16 %v1508, %v1504
        %v1685 = vpack.c.b16 %v1509, %v1505
        %v1686 = vpack.c.b16 %v1514, %v1510
        %v1687 = vpack.c.b16 %v1515, %v1511
        %v1688 = vpack.c.b16 %v1516, %v1512
        %v1689 = vpack.c.b16 %v1517, %v1513
        %v1690 = vpack.c.b16 %v1522, %v1518
        %v1691 = vpack.c.b16 %v1523, %v1519
        %v1692 = vpack.c.b16 %v1524, %v1520
        %v1693 = vpack.c.b16 %v1525, %v1521
        %v1694 = vpack.c.b16 %v1530, %v1526
        %v1695 = vpack.c.b16 %v1531, %v1527
        %v1696 = vpack.c.b16 %v1532, %v1528
        %v1697 = vpack.c.b16 %v1533, %v1529
        %v1698 = vpack.c.b16 %v1538, %v1534
        %v1699 = vpack.c.b16 %v1539, %v1535
        %v1700 = vpack.c.b16 %v1540, %v1536
        %v1701 = vpack.c.b16 %v1541, %v1537
        %v1702 = vpack.c.b16 %v1546, %v1542
        %v1703 = vpack.c.b16 %v1547, %v1543
        %v1704 = vpack.c.b16 %v1548, %v1544
        %v1705 = vpack.c.b16 %v1549, %v1545
        %v1706 = vpack.c.b16 %v1554, %v1550
        %v1707 = vpack.c.b16 %v1555, %v1551
        %v1708 = vpack.c.b16 %v1556, %v1552
        %v1709 = vpack.c.b16 %v1557, %v1553
        %v1710 = vpack.c.b16 %v1562, %v1558
        %v1711 = vpack.c.b16 %v1563, %v1559
        %v1712 = vpack.c.b16 %v1564, %v1560
        %v1713 = vpack.c.b16 %v1565, %v1561
        %v1714 = vpack.c.b16 %v1570, %v1566
        %v1715 = vpack.c.b16 %v1571, %v1567
        %v1716 = vpack.c.b16 %v1572, %v1568
        %v1717 = vpack.c.b16 %v1573, %v1569
        %v1718 = vpack.c.b16 %v1578, %v1574
        %v1719 = vpack.c.b16 %v1579, %v1575
        %v1720 = vpack.c.b16 %v1580, %v1576
        %v1721 = vpack.c.b16 %v1581, %v1577
        %v1722 = vpack.c.b16 %v1586, %v1582
        %v1723 = vpack.c.b16 %v1587, %v1583
        %v1724 = vpack.c.b16 %v1588, %v1584
        %v1725 = vpack.c.b16 %v1589, %v1585
        %v1726 = vpack.c.b16 %v1594, %v1590
        %v1727 = vpack.c.b16 %v1595, %v1591
        %v1728 = vpack.c.b16 %v1596, %v1592
        %v1729 = vpack.c.b16 %v1597, %v1593
        %v1730 = vpack.c.b16 %v1602, %v1598
        %v1731 = vpack.c.b16 %v1603, %v1599
        %v1732 = vpack.c.b16 %v1604, %v1600
        %v1733 = vpack.c.b16 %v1605, %v1601
        %1862 = vmatpush.bf16.msra.mxu0 %v1634
        %1863 = vmatpush.bf16.msra.mxu0 %v1630
        %1864 = vmatpush.bf16.msra.mxu0 %v1626
        %1865 = vmatpush.bf16.msra.mxu0 %v1622
        %1866 = vmatpush.bf16.msra.mxu0 %v1618
        %1867 = vmatpush.bf16.msra.mxu0 %v1614
        %1868 = vmatpush.bf16.msra.mxu0 %v1610
        %1869 = vmatpush.bf16.msra.mxu0 %v1606
        %1870 = vmatmul.bf16.gmra.mxu0 %v1076
        %v1871 = vpop.f32.mrf.mxu0
        %v1872 = vadd.f32 %v1214, %v1871
        %v1873 = vpop.f32.mrf.mxu0
        %v1874 = vadd.f32 %v1214, %v1873
        %1875 = vmatmul.bf16.gmra.mxu0 %v1080
        %v1876 = vpop.f32.mrf.mxu0
        %v1877 = vadd.f32 %v1214, %v1876
        %v1878 = vpop.f32.mrf.mxu0
        %1879 = vdwg.mxu0
        %1880 = vmatpush.bf16.msra.mxu0 %v1666
        %1881 = vmatpush.bf16.msra.mxu0 %v1662
        %1882 = vmatpush.bf16.msra.mxu0 %v1658
        %1883 = vmatpush.bf16.msra.mxu0 %v1654
        %1884 = vmatpush.bf16.msra.mxu0 %v1650
        %1885 = vmatpush.bf16.msra.mxu0 %v1646
        %1886 = vmatpush.bf16.msra.mxu0 %v1642
        %1887 = vmatpush.bf16.msra.mxu0 %v1638
        %1888 = vmatmul.bf16.gmra.mxu0 %v1077
        %v1889 = vpop.f32.mrf.mxu0
        %v1890 = vadd.f32 %v1872, %v1889
        %v1891 = vpop.f32.mrf.mxu0
        %v1892 = vadd.f32 %v1874, %v1891
        %1893 = vmatmul.bf16.gmra.mxu0 %v1081
        %v1894 = vpop.f32.mrf.mxu0
        %v1895 = vadd.f32 %v1877, %v1894
        %v1896 = vpop.f32.mrf.mxu0
        %1897 = vdwg.mxu0
        %1898 = vmatpush.bf16.msra.mxu0 %v1698
        %1899 = vmatpush.bf16.msra.mxu0 %v1694
        %1900 = vmatpush.bf16.msra.mxu0 %v1690
        %1901 = vmatpush.bf16.msra.mxu0 %v1686
        %1902 = vmatpush.bf16.msra.mxu0 %v1682
        %1903 = vmatpush.bf16.msra.mxu0 %v1678
        %1904 = vmatpush.bf16.msra.mxu0 %v1674
        %1905 = vmatpush.bf16.msra.mxu0 %v1670
        %1906 = vmatmul.bf16.gmra.mxu0 %v1078
        %v1907 = vpop.f32.mrf.mxu0
        %v1908 = vadd.f32 %v1890, %v1907
        %v1909 = vpop.f32.mrf.mxu0
        %v1910 = vadd.f32 %v1892, %v1909
        %1911 = vmatmul.bf16.gmra.mxu0 %v1082
        %v1912 = vpop.f32.mrf.mxu0
        %v1913 = vadd.f32 %v1895, %v1912
        %v1914 = vpop.f32.mrf.mxu0
        %1915 = vdwg.mxu0
        %1916 = vmatpush.bf16.msra.mxu0 %v1730
        %1917 = vmatpush.bf16.msra.mxu0 %v1726
        %1918 = vmatpush.bf16.msra.mxu0 %v1722
        %1919 = vmatpush.bf16.msra.mxu0 %v1718
        %1920 = vmatpush.bf16.msra.mxu0 %v1714
        %1921 = vmatpush.bf16.msra.mxu0 %v1710
        %1922 = vmatpush.bf16.msra.mxu0 %v1706
        %1923 = vmatpush.bf16.msra.mxu0 %v1702
        %1924 = vmatmul.bf16.gmra.mxu0 %v1079
        %v1925 = vpop.f32.mrf.mxu0
        %v1926 = vadd.f32 %v1908, %v1925
        %v1927 = vpop.f32.mrf.mxu0
        %v1928 = vadd.f32 %v1910, %v1927
        %1929 = vmatmul.bf16.gmra.mxu0 %v1083
        %v1930 = vpop.f32.mrf.mxu0
        %v1931 = vadd.f32 %v1913, %v1930
        %v1932 = vpop.f32.mrf.mxu0
        %1933 = vdwg.mxu0
        %1934 = vmatpush.bf16.msra.mxu0 %v1635
        %1935 = vmatpush.bf16.msra.mxu0 %v1631
        %1936 = vmatpush.bf16.msra.mxu0 %v1627
        %1937 = vmatpush.bf16.msra.mxu0 %v1623
        %1938 = vmatpush.bf16.msra.mxu0 %v1619
        %1939 = vmatpush.bf16.msra.mxu0 %v1615
        %1940 = vmatpush.bf16.msra.mxu0 %v1611
        %1941 = vmatpush.bf16.msra.mxu0 %v1607
        %1942 = vmatmul.bf16.gmra.mxu0 %v1076
        %v1943 = vpop.f32.mrf.mxu0
        %v1944 = vadd.f32 %v1215, %v1943
        %v1945 = vpop.f32.mrf.mxu0
        %v1946 = vadd.f32 %v1215, %v1945
        %1947 = vmatmul.bf16.gmra.mxu0 %v1080
        %v1948 = vpop.f32.mrf.mxu0
        %v1949 = vadd.f32 %v1215, %v1948
        %v1950 = vpop.f32.mrf.mxu0
        %1951 = vdwg.mxu0
        %1952 = vmatpush.bf16.msra.mxu0 %v1667
        %1953 = vmatpush.bf16.msra.mxu0 %v1663
        %1954 = vmatpush.bf16.msra.mxu0 %v1659
        %1955 = vmatpush.bf16.msra.mxu0 %v1655
        %1956 = vmatpush.bf16.msra.mxu0 %v1651
        %1957 = vmatpush.bf16.msra.mxu0 %v1647
        %1958 = vmatpush.bf16.msra.mxu0 %v1643
        %1959 = vmatpush.bf16.msra.mxu0 %v1639
        %1960 = vmatmul.bf16.gmra.mxu0 %v1077
        %v1961 = vpop.f32.mrf.mxu0
        %v1962 = vadd.f32 %v1944, %v1961
        %v1963 = vpop.f32.mrf.mxu0
        %v1964 = vadd.f32 %v1946, %v1963
        %1965 = vmatmul.bf16.gmra.mxu0 %v1081
        %v1966 = vpop.f32.mrf.mxu0
        %v1967 = vadd.f32 %v1949, %v1966
        %v1968 = vpop.f32.mrf.mxu0
        %1969 = vdwg.mxu0
        %1970 = vmatpush.bf16.msra.mxu0 %v1699
        %1971 = vmatpush.bf16.msra.mxu0 %v1695
        %1972 = vmatpush.bf16.msra.mxu0 %v1691
        %1973 = vmatpush.bf16.msra.mxu0 %v1687
        %1974 = vmatpush.bf16.msra.mxu0 %v1683
        %1975 = vmatpush.bf16.msra.mxu0 %v1679
        %1976 = vmatpush.bf16.msra.mxu0 %v1675
        %1977 = vmatpush.bf16.msra.mxu0 %v1671
        %1978 = vmatmul.bf16.gmra.mxu0 %v1078
        %v1979 = vpop.f32.mrf.mxu0
        %v1980 = vadd.f32 %v1962, %v1979
        %v1981 = vpop.f32.mrf.mxu0
        %v1982 = vadd.f32 %v1964, %v1981
        %1983 = vmatmul.bf16.gmra.mxu0 %v1082
        %v1984 = vpop.f32.mrf.mxu0
        %v1985 = vadd.f32 %v1967, %v1984
        %v1986 = vpop.f32.mrf.mxu0
        %1987 = vdwg.mxu0
        %1988 = vmatpush.bf16.msra.mxu0 %v1731
        %1989 = vmatpush.bf16.msra.mxu0 %v1727
        %1990 = vmatpush.bf16.msra.mxu0 %v1723
        %1991 = vmatpush.bf16.msra.mxu0 %v1719
        %1992 = vmatpush.bf16.msra.mxu0 %v1715
        %1993 = vmatpush.bf16.msra.mxu0 %v1711
        %1994 = vmatpush.bf16.msra.mxu0 %v1707
        %1995 = vmatpush.bf16.msra.mxu0 %v1703
        %1996 = vmatmul.bf16.gmra.mxu0 %v1079
        %v1997 = vpop.f32.mrf.mxu0
        %v1998 = vadd.f32 %v1980, %v1997
        %v1999 = vpop.f32.mrf.mxu0
        %v2000 = vadd.f32 %v1982, %v1999
        %2001 = vmatmul.bf16.gmra.mxu0 %v1083
        %v2002 = vpop.f32.mrf.mxu0
        %v2003 = vadd.f32 %v1985, %v2002
        %v2004 = vpop.f32.mrf.mxu0
        %2005 = vdwg.mxu0
        %2006 = vmatpush.bf16.msra.mxu0 %v1636
        %2007 = vmatpush.bf16.msra.mxu0 %v1632
        %2008 = vmatpush.bf16.msra.mxu0 %v1628
        %2009 = vmatpush.bf16.msra.mxu0 %v1624
        %2010 = vmatpush.bf16.msra.mxu0 %v1620
        %2011 = vmatpush.bf16.msra.mxu0 %v1616
        %2012 = vmatpush.bf16.msra.mxu0 %v1612
        %2013 = vmatpush.bf16.msra.mxu0 %v1608
        %2014 = vmatmul.bf16.gmra.mxu0 %v1076
        %v2015 = vpop.f32.mrf.mxu0
        %v2016 = vadd.f32 %v1216, %v2015
        %v2017 = vpop.f32.mrf.mxu0
        %v2018 = vadd.f32 %v1216, %v2017
        %2019 = vmatmul.bf16.gmra.mxu0 %v1080
        %v2020 = vpop.f32.mrf.mxu0
        %v2021 = vadd.f32 %v1216, %v2020
        %v2022 = vpop.f32.mrf.mxu0
        %2023 = vdwg.mxu0
        %2024 = vmatpush.bf16.msra.mxu0 %v1668
        %2025 = vmatpush.bf16.msra.mxu0 %v1664
        %2026 = vmatpush.bf16.msra.mxu0 %v1660
        %2027 = vmatpush.bf16.msra.mxu0 %v1656
        %2028 = vmatpush.bf16.msra.mxu0 %v1652
        %2029 = vmatpush.bf16.msra.mxu0 %v1648
        %2030 = vmatpush.bf16.msra.mxu0 %v1644
        %2031 = vmatpush.bf16.msra.mxu0 %v1640
        %2032 = vmatmul.bf16.gmra.mxu0 %v1077
        %v2033 = vpop.f32.mrf.mxu0
        %v2034 = vadd.f32 %v2016, %v2033
        %v2035 = vpop.f32.mrf.mxu0
        %v2036 = vadd.f32 %v2018, %v2035
        %2037 = vmatmul.bf16.gmra.mxu0 %v1081
        %v2038 = vpop.f32.mrf.mxu0
        %v2039 = vadd.f32 %v2021, %v2038
        %v2040 = vpop.f32.mrf.mxu0
        %2041 = vdwg.mxu0
        %2042 = vmatpush.bf16.msra.mxu0 %v1700
        %2043 = vmatpush.bf16.msra.mxu0 %v1696
        %2044 = vmatpush.bf16.msra.mxu0 %v1692
        %2045 = vmatpush.bf16.msra.mxu0 %v1688
        %2046 = vmatpush.bf16.msra.mxu0 %v1684
        %2047 = vmatpush.bf16.msra.mxu0 %v1680
        %2048 = vmatpush.bf16.msra.mxu0 %v1676
        %2049 = vmatpush.bf16.msra.mxu0 %v1672
        %2050 = vmatmul.bf16.gmra.mxu0 %v1078
        %v2051 = vpop.f32.mrf.mxu0
        %v2052 = vadd.f32 %v2034, %v2051
        %v2053 = vpop.f32.mrf.mxu0
        %v2054 = vadd.f32 %v2036, %v2053
        %2055 = vmatmul.bf16.gmra.mxu0 %v1082
        %v2056 = vpop.f32.mrf.mxu0
        %v2057 = vadd.f32 %v2039, %v2056
        %v2058 = vpop.f32.mrf.mxu0
        %2059 = vdwg.mxu0
        %2060 = vmatpush.bf16.msra.mxu0 %v1732
        %2061 = vmatpush.bf16.msra.mxu0 %v1728
        %2062 = vmatpush.bf16.msra.mxu0 %v1724
        %2063 = vmatpush.bf16.msra.mxu0 %v1720
        %2064 = vmatpush.bf16.msra.mxu0 %v1716
        %2065 = vmatpush.bf16.msra.mxu0 %v1712
        %2066 = vmatpush.bf16.msra.mxu0 %v1708
        %2067 = vmatpush.bf16.msra.mxu0 %v1704
        %2068 = vmatmul.bf16.gmra.mxu0 %v1079
        %v2069 = vpop.f32.mrf.mxu0
        %v2070 = vadd.f32 %v2052, %v2069
        %v2071 = vpop.f32.mrf.mxu0
        %v2072 = vadd.f32 %v2054, %v2071
        %2073 = vmatmul.bf16.gmra.mxu0 %v1083
        %v2074 = vpop.f32.mrf.mxu0
        %v2075 = vadd.f32 %v2057, %v2074
        %v2076 = vpop.f32.mrf.mxu0
        %2077 = vdwg.mxu0
        %2078 = vmatpush.bf16.msra.mxu0 %v1637
        %2079 = vmatpush.bf16.msra.mxu0 %v1633
        %2080 = vmatpush.bf16.msra.mxu0 %v1629
        %2081 = vmatpush.bf16.msra.mxu0 %v1625
        %2082 = vmatpush.bf16.msra.mxu0 %v1621
        %2083 = vmatpush.bf16.msra.mxu0 %v1617
        %2084 = vmatpush.bf16.msra.mxu0 %v1613
        %2085 = vmatpush.bf16.msra.mxu0 %v1609
        %2086 = vmatmul.bf16.gmra.mxu0 %v1076
        %v2087 = vpop.f32.mrf.mxu0
        %v2088 = vadd.f32 %v1217, %v2087
        %v2089 = vpop.f32.mrf.mxu0
        %v2090 = vadd.f32 %v1217, %v2089
        %2091 = vmatmul.bf16.gmra.mxu0 %v1080
        %v2092 = vpop.f32.mrf.mxu0
        %v2093 = vadd.f32 %v1217, %v2092
        %v2094 = vpop.f32.mrf.mxu0
        %2095 = vdwg.mxu0
        %2096 = vmatpush.bf16.msra.mxu0 %v1669
        %2097 = vmatpush.bf16.msra.mxu0 %v1665
        %2098 = vmatpush.bf16.msra.mxu0 %v1661
        %2099 = vmatpush.bf16.msra.mxu0 %v1657
        %2100 = vmatpush.bf16.msra.mxu0 %v1653
        %2101 = vmatpush.bf16.msra.mxu0 %v1649
        %2102 = vmatpush.bf16.msra.mxu0 %v1645
        %2103 = vmatpush.bf16.msra.mxu0 %v1641
        %2104 = vmatmul.bf16.gmra.mxu0 %v1077
        %v2105 = vpop.f32.mrf.mxu0
        %v2106 = vadd.f32 %v2088, %v2105
        %v2107 = vpop.f32.mrf.mxu0
        %v2108 = vadd.f32 %v2090, %v2107
        %2109 = vmatmul.bf16.gmra.mxu0 %v1081
        %v2110 = vpop.f32.mrf.mxu0
        %v2111 = vadd.f32 %v2093, %v2110
        %v2112 = vpop.f32.mrf.mxu0
        %2113 = vdwg.mxu0
        %2114 = vmatpush.bf16.msra.mxu0 %v1701
        %2115 = vmatpush.bf16.msra.mxu0 %v1697
        %2116 = vmatpush.bf16.msra.mxu0 %v1693
        %2117 = vmatpush.bf16.msra.mxu0 %v1689
        %2118 = vmatpush.bf16.msra.mxu0 %v1685
        %2119 = vmatpush.bf16.msra.mxu0 %v1681
        %2120 = vmatpush.bf16.msra.mxu0 %v1677
        %2121 = vmatpush.bf16.msra.mxu0 %v1673
        %2122 = vmatmul.bf16.gmra.mxu0 %v1078
        %v2123 = vpop.f32.mrf.mxu0
        %v2124 = vadd.f32 %v2106, %v2123
        %v2125 = vpop.f32.mrf.mxu0
        %v2126 = vadd.f32 %v2108, %v2125
        %2127 = vmatmul.bf16.gmra.mxu0 %v1082
        %v2128 = vpop.f32.mrf.mxu0
        %v2129 = vadd.f32 %v2111, %v2128
        %v2130 = vpop.f32.mrf.mxu0
        %2131 = vdwg.mxu0
        %2132 = vmatpush.bf16.msra.mxu0 %v1733
        %2133 = vmatpush.bf16.msra.mxu0 %v1729
        %2134 = vmatpush.bf16.msra.mxu0 %v1725
        %2135 = vmatpush.bf16.msra.mxu0 %v1721
        %2136 = vmatpush.bf16.msra.mxu0 %v1717
        %2137 = vmatpush.bf16.msra.mxu0 %v1713
        %2138 = vmatpush.bf16.msra.mxu0 %v1709
        %2139 = vmatpush.bf16.msra.mxu0 %v1705
        %2140 = vmatmul.bf16.gmra.mxu0 %v1079
        %v2141 = vpop.f32.mrf.mxu0
        %v2142 = vadd.f32 %v2124, %v2141
        %v2143 = vpop.f32.mrf.mxu0
        %v2144 = vadd.f32 %v2126, %v2143
        %2145 = vmatmul.bf16.gmra.mxu0 %v1083
        %v2146 = vpop.f32.mrf.mxu0
        %v2147 = vadd.f32 %v2129, %v2146
        %v2148 = vpop.f32.mrf.mxu0
        %2149 = vdwg.mxu0
        %v2150 = vmax.f32 %v1926, 0.0
        %v2151 = vmax.f32 %v1998, 0.0
        %v2152 = vmax.f32 %v2070, 0.0
        %v2153 = vmax.f32 %v2142, 0.0
        %v2154 = vmax.f32 %v1928, 0.0
        %v2155 = vmax.f32 %v2000, 0.0
        %v2156 = vmax.f32 %v2072, 0.0
        %v2157 = vmax.f32 %v2144, 0.0
        %v2158 = vmax.f32 %v1931, 0.0
        %v2159 = vmax.f32 %v2003, 0.0
        %v2160 = vmax.f32 %v2075, 0.0
        %v2161 = vmax.f32 %v2147, 0.0
        %v2162 = vpack.c.bf16 %v2154, %v2150
        %v2163 = vpack.c.bf16 %v2155, %v2151
        %v2164 = vpack.c.bf16 %v2156, %v2152
        %v2165 = vpack.c.bf16 %v2157, %v2153
        %v2166 = vpack.c.bf16 %v2158, %v2158
        %v2167 = vpack.c.bf16 %v2159, %v2159
        %v2168 = vpack.c.bf16 %v2160, %v2160
        %v2169 = vpack.c.bf16 %v2161, %v2161
        %v2170 = vld [vmem:[#allocation7] sm:$0xff]
        %v2171 = vld [vmem:[#allocation7 + $0x8] sm:$0xff]
        %v2172 = vld [vmem:[#allocation7 + $0x10] sm:$0xff]
        %v2173 = vld [vmem:[#allocation7 + $0x18] sm:$0xff]
        %v2174 = vld [vmem:[#allocation7 + $0x20] sm:$0xff]
        %v2175 = vld [vmem:[#allocation7 + $0x28] sm:$0xff]
        %v2176 = vld [vmem:[#allocation7 + $0x30] sm:$0xff]
        %v2177 = vld [vmem:[#allocation7 + $0x38] sm:$0xff]
        %v2178 = vld [vmem:[#allocation7 + $0x40] sm:$0xff]
        %v2179 = vld [vmem:[#allocation7 + $0x48] sm:$0xff]
        %v2180 = vld [vmem:[#allocation7 + $0x50] sm:$0xff]
        %v2181 = vld [vmem:[#allocation7 + $0x58] sm:$0xff]
        %v2182 = vld [vmem:[#allocation7 + $0x60] sm:$0xff]
        %v2183 = vld [vmem:[#allocation7 + $0x68] sm:$0xff]
        %v2184 = vld [vmem:[#allocation7 + $0x70] sm:$0xff]
        %v2185 = vld [vmem:[#allocation7 + $0x78] sm:$0xff]
        %v2186 = vld [vmem:[#allocation7 + $0x80] sm:$0xff]
        %v2187 = vld [vmem:[#allocation7 + $0x88] sm:$0xff]
        %v2188 = vld [vmem:[#allocation7 + $0x90] sm:$0xff]
        %v2189 = vld [vmem:[#allocation7 + $0x98] sm:$0xff]
        %v2190 = vld [vmem:[#allocation7 + $0xa0] sm:$0xff]
        %v2191 = vld [vmem:[#allocation7 + $0xa8] sm:$0xff]
        %v2192 = vld [vmem:[#allocation7 + $0xb0] sm:$0xff]
        %v2193 = vld [vmem:[#allocation7 + $0xb8] sm:$0xff]
        %v2194 = vld [vmem:[#allocation7 + $0xc0] sm:$0xff]
        %v2195 = vld [vmem:[#allocation7 + $0xc8] sm:$0xff]
        %v2196 = vld [vmem:[#allocation7 + $0xd0] sm:$0xff]
        %v2197 = vld [vmem:[#allocation7 + $0xd8] sm:$0xff]
        %v2198 = vld [vmem:[#allocation7 + $0xe0] sm:$0xff]
        %v2199 = vld [vmem:[#allocation7 + $0xe8] sm:$0xff]
        %v2200 = vld [vmem:[#allocation7 + $0xf0] sm:$0xff]
        %v2201 = vld [vmem:[#allocation7 + $0xf8] sm:$0xff]
        %v2202 = vld [vmem:[#allocation7 + $0x100] sm:$0xff]
        %v2203 = vld [vmem:[#allocation7 + $0x108] sm:$0xff]
        %v2204 = vld [vmem:[#allocation7 + $0x110] sm:$0xff]
        %v2205 = vld [vmem:[#allocation7 + $0x118] sm:$0xff]
        %v2206 = vld [vmem:[#allocation7 + $0x120] sm:$0xff]
        %v2207 = vld [vmem:[#allocation7 + $0x128] sm:$0xff]
        %v2208 = vld [vmem:[#allocation7 + $0x130] sm:$0xff]
        %v2209 = vld [vmem:[#allocation7 + $0x138] sm:$0xff]
        %v2210 = vld [vmem:[#allocation7 + $0x140] sm:$0xff]
        %v2211 = vld [vmem:[#allocation7 + $0x148] sm:$0xff]
        %v2212 = vld [vmem:[#allocation7 + $0x150] sm:$0xff]
        %v2213 = vld [vmem:[#allocation7 + $0x158] sm:$0xff]
        %v2214 = vld [vmem:[#allocation7 + $0x160] sm:$0xff]
        %v2215 = vld [vmem:[#allocation7 + $0x168] sm:$0xff]
        %v2216 = vld [vmem:[#allocation7 + $0x170] sm:$0xff]
        %v2217 = vld [vmem:[#allocation7 + $0x178] sm:$0xff]
        %v2218 = vld [vmem:[#allocation7 + $0x180] sm:$0xff]
        %v2219 = vld [vmem:[#allocation7 + $0x188] sm:$0xff]
        %v2220 = vld [vmem:[#allocation7 + $0x190] sm:$0xff]
        %v2221 = vld [vmem:[#allocation7 + $0x198] sm:$0xff]
        %v2222 = vld [vmem:[#allocation7 + $0x1a0] sm:$0xff]
        %v2223 = vld [vmem:[#allocation7 + $0x1a8] sm:$0xff]
        %v2224 = vld [vmem:[#allocation7 + $0x1b0] sm:$0xff]
        %v2225 = vld [vmem:[#allocation7 + $0x1b8] sm:$0xff]
        %v2226 = vld [vmem:[#allocation7 + $0x1c0] sm:$0xff]
        %v2227 = vld [vmem:[#allocation7 + $0x1c8] sm:$0xff]
        %v2228 = vld [vmem:[#allocation7 + $0x1d0] sm:$0xff]
        %v2229 = vld [vmem:[#allocation7 + $0x1d8] sm:$0xff]
        %v2230 = vld [vmem:[#allocation7 + $0x1e0] sm:$0xff]
        %v2231 = vld [vmem:[#allocation7 + $0x1e8] sm:$0xff]
        %v2232 = vld [vmem:[#allocation7 + $0x1f0] sm:$0xff]
        %v2233 = vld [vmem:[#allocation7 + $0x1f8] sm:$0xff]
        %v2234 = vld [vmem:[#allocation7 + $0x200] sm:$0xff]
        %v2235 = vld [vmem:[#allocation7 + $0x208] sm:$0xff]
        %v2236 = vld [vmem:[#allocation7 + $0x210] sm:$0xff]
        %v2237 = vld [vmem:[#allocation7 + $0x218] sm:$0xff]
        %v2238 = vld [vmem:[#allocation7 + $0x220] sm:$0xff]
        %v2239 = vld [vmem:[#allocation7 + $0x228] sm:$0xff]
        %v2240 = vld [vmem:[#allocation7 + $0x230] sm:$0xff]
        %v2241 = vld [vmem:[#allocation7 + $0x238] sm:$0xff]
        %v2242 = vld [vmem:[#allocation7 + $0x240] sm:$0xff]
        %v2243 = vld [vmem:[#allocation7 + $0x248] sm:$0xff]
        %v2244 = vld [vmem:[#allocation7 + $0x250] sm:$0xff]
        %v2245 = vld [vmem:[#allocation7 + $0x258] sm:$0xff]
        %v2246 = vld [vmem:[#allocation7 + $0x260] sm:$0xff]
        %v2247 = vld [vmem:[#allocation7 + $0x268] sm:$0xff]
        %v2248 = vld [vmem:[#allocation7 + $0x270] sm:$0xff]
        %v2249 = vld [vmem:[#allocation7 + $0x278] sm:$0xff]
        %v2250 = vld [vmem:[#allocation7 + $0x280] sm:$0xff]
        %v2251 = vld [vmem:[#allocation7 + $0x288] sm:$0xff]
        %v2252 = vld [vmem:[#allocation7 + $0x290] sm:$0xff]
        %v2253 = vld [vmem:[#allocation7 + $0x298] sm:$0xff]
        %v2254 = vld [vmem:[#allocation7 + $0x2a0] sm:$0xff]
        %v2255 = vld [vmem:[#allocation7 + $0x2a8] sm:$0xff]
        %v2256 = vld [vmem:[#allocation7 + $0x2b0] sm:$0xff]
        %v2257 = vld [vmem:[#allocation7 + $0x2b8] sm:$0xff]
        %v2258 = vld [vmem:[#allocation7 + $0x2c0] sm:$0xff]
        %v2259 = vld [vmem:[#allocation7 + $0x2c8] sm:$0xff]
        %v2260 = vld [vmem:[#allocation7 + $0x2d0] sm:$0xff]
        %v2261 = vld [vmem:[#allocation7 + $0x2d8] sm:$0xff]
        %v2262 = vld [vmem:[#allocation7 + $0x2e0] sm:$0xff]
        %v2263 = vld [vmem:[#allocation7 + $0x2e8] sm:$0xff]
        %v2264 = vld [vmem:[#allocation7 + $0x2f0] sm:$0xff]
        %v2265 = vld [vmem:[#allocation7 + $0x2f8] sm:$0xff]
        %v2266 = vld [vmem:[#allocation7 + $0x300] sm:$0xff]
        %v2267 = vld [vmem:[#allocation7 + $0x308] sm:$0xff]
        %v2268 = vld [vmem:[#allocation7 + $0x310] sm:$0xff]
        %v2269 = vld [vmem:[#allocation7 + $0x318] sm:$0xff]
        %v2270 = vld [vmem:[#allocation7 + $0x320] sm:$0xff]
        %v2271 = vld [vmem:[#allocation7 + $0x328] sm:$0xff]
        %v2272 = vld [vmem:[#allocation7 + $0x330] sm:$0xff]
        %v2273 = vld [vmem:[#allocation7 + $0x338] sm:$0xff]
        %v2274 = vld [vmem:[#allocation7 + $0x340] sm:$0xff]
        %v2275 = vld [vmem:[#allocation7 + $0x348] sm:$0xff]
        %v2276 = vld [vmem:[#allocation7 + $0x350] sm:$0xff]
        %v2277 = vld [vmem:[#allocation7 + $0x358] sm:$0xff]
        %v2278 = vld [vmem:[#allocation7 + $0x360] sm:$0xff]
        %v2279 = vld [vmem:[#allocation7 + $0x368] sm:$0xff]
        %v2280 = vld [vmem:[#allocation7 + $0x370] sm:$0xff]
        %v2281 = vld [vmem:[#allocation7 + $0x378] sm:$0xff]
        %v2282 = vld [vmem:[#allocation7 + $0x380] sm:$0xff]
        %v2283 = vld [vmem:[#allocation7 + $0x388] sm:$0xff]
        %v2284 = vld [vmem:[#allocation7 + $0x390] sm:$0xff]
        %v2285 = vld [vmem:[#allocation7 + $0x398] sm:$0xff]
        %v2286 = vld [vmem:[#allocation7 + $0x3a0] sm:$0xff]
        %v2287 = vld [vmem:[#allocation7 + $0x3a8] sm:$0xff]
        %v2288 = vld [vmem:[#allocation7 + $0x3b0] sm:$0xff]
        %v2289 = vld [vmem:[#allocation7 + $0x3b8] sm:$0xff]
        %v2290 = vld [vmem:[#allocation7 + $0x3c0] sm:$0xff]
        %v2291 = vld [vmem:[#allocation7 + $0x3c8] sm:$0xff]
        %v2292 = vld [vmem:[#allocation7 + $0x3d0] sm:$0xff]
        %v2293 = vld [vmem:[#allocation7 + $0x3d8] sm:$0xff]
        %v2294 = vld [vmem:[#allocation7 + $0x3e0] sm:$0xff]
        %v2295 = vld [vmem:[#allocation7 + $0x3e8] sm:$0xff]
        %v2296 = vld [vmem:[#allocation7 + $0x3f0] sm:$0xff]
        %v2297 = vld [vmem:[#allocation7 + $0x3f8] sm:$0xff]
        %v2298 = vld [vmem:[#allocation8] sm:$0xf]
        %v2300 = vperm.slane %v2298, 0
        %v2301 = vperm.slane %v2298, 1
        %v2302 = vperm.slane %v2298, 2
        %v2303 = vperm.slane %v2298, 3
        %v2436 = vunpack.c.l.b16 %v2170
        %v2437 = vunpack.c.h.b16 %v2170
        %v2438 = vunpack.c.l.b16 %v2171
        %v2439 = vunpack.c.h.b16 %v2171
        %v2440 = vunpack.c.l.b16 %v2172
        %v2441 = vunpack.c.h.b16 %v2172
        %v2442 = vunpack.c.l.b16 %v2173
        %v2443 = vunpack.c.h.b16 %v2173
        %v2444 = vunpack.c.l.b16 %v2174
        %v2445 = vunpack.c.h.b16 %v2174
        %v2446 = vunpack.c.l.b16 %v2175
        %v2447 = vunpack.c.h.b16 %v2175
        %v2448 = vunpack.c.l.b16 %v2176
        %v2449 = vunpack.c.h.b16 %v2176
        %v2450 = vunpack.c.l.b16 %v2177
        %v2451 = vunpack.c.h.b16 %v2177
        %v2452 = vunpack.c.l.b16 %v2178
        %v2453 = vunpack.c.h.b16 %v2178
        %v2454 = vunpack.c.l.b16 %v2179
        %v2455 = vunpack.c.h.b16 %v2179
        %v2456 = vunpack.c.l.b16 %v2180
        %v2457 = vunpack.c.h.b16 %v2180
        %v2458 = vunpack.c.l.b16 %v2181
        %v2459 = vunpack.c.h.b16 %v2181
        %v2460 = vunpack.c.l.b16 %v2182
        %v2461 = vunpack.c.h.b16 %v2182
        %v2462 = vunpack.c.l.b16 %v2183
        %v2463 = vunpack.c.h.b16 %v2183
        %v2464 = vunpack.c.l.b16 %v2184
        %v2465 = vunpack.c.h.b16 %v2184
        %v2466 = vunpack.c.l.b16 %v2185
        %v2467 = vunpack.c.h.b16 %v2185
        %v2468 = vunpack.c.l.b16 %v2186
        %v2469 = vunpack.c.h.b16 %v2186
        %v2470 = vunpack.c.l.b16 %v2187
        %v2471 = vunpack.c.h.b16 %v2187
        %v2472 = vunpack.c.l.b16 %v2188
        %v2473 = vunpack.c.h.b16 %v2188
        %v2474 = vunpack.c.l.b16 %v2189
        %v2475 = vunpack.c.h.b16 %v2189
        %v2476 = vunpack.c.l.b16 %v2190
        %v2477 = vunpack.c.h.b16 %v2190
        %v2478 = vunpack.c.l.b16 %v2191
        %v2479 = vunpack.c.h.b16 %v2191
        %v2480 = vunpack.c.l.b16 %v2192
        %v2481 = vunpack.c.h.b16 %v2192
        %v2482 = vunpack.c.l.b16 %v2193
        %v2483 = vunpack.c.h.b16 %v2193
        %v2484 = vunpack.c.l.b16 %v2194
        %v2485 = vunpack.c.h.b16 %v2194
        %v2486 = vunpack.c.l.b16 %v2195
        %v2487 = vunpack.c.h.b16 %v2195
        %v2488 = vunpack.c.l.b16 %v2196
        %v2489 = vunpack.c.h.b16 %v2196
        %v2490 = vunpack.c.l.b16 %v2197
        %v2491 = vunpack.c.h.b16 %v2197
        %v2492 = vunpack.c.l.b16 %v2198
        %v2493 = vunpack.c.h.b16 %v2198
        %v2494 = vunpack.c.l.b16 %v2199
        %v2495 = vunpack.c.h.b16 %v2199
        %v2496 = vunpack.c.l.b16 %v2200
        %v2497 = vunpack.c.h.b16 %v2200
        %v2498 = vunpack.c.l.b16 %v2201
        %v2499 = vunpack.c.h.b16 %v2201
        %v2500 = vunpack.c.l.b16 %v2202
        %v2501 = vunpack.c.h.b16 %v2202
        %v2502 = vunpack.c.l.b16 %v2203
        %v2503 = vunpack.c.h.b16 %v2203
        %v2504 = vunpack.c.l.b16 %v2204
        %v2505 = vunpack.c.h.b16 %v2204
        %v2506 = vunpack.c.l.b16 %v2205
        %v2507 = vunpack.c.h.b16 %v2205
        %v2508 = vunpack.c.l.b16 %v2206
        %v2509 = vunpack.c.h.b16 %v2206
        %v2510 = vunpack.c.l.b16 %v2207
        %v2511 = vunpack.c.h.b16 %v2207
        %v2512 = vunpack.c.l.b16 %v2208
        %v2513 = vunpack.c.h.b16 %v2208
        %v2514 = vunpack.c.l.b16 %v2209
        %v2515 = vunpack.c.h.b16 %v2209
        %v2516 = vunpack.c.l.b16 %v2210
        %v2517 = vunpack.c.h.b16 %v2210
        %v2518 = vunpack.c.l.b16 %v2211
        %v2519 = vunpack.c.h.b16 %v2211
        %v2520 = vunpack.c.l.b16 %v2212
        %v2521 = vunpack.c.h.b16 %v2212
        %v2522 = vunpack.c.l.b16 %v2213
        %v2523 = vunpack.c.h.b16 %v2213
        %v2524 = vunpack.c.l.b16 %v2214
        %v2525 = vunpack.c.h.b16 %v2214
        %v2526 = vunpack.c.l.b16 %v2215
        %v2527 = vunpack.c.h.b16 %v2215
        %v2528 = vunpack.c.l.b16 %v2216
        %v2529 = vunpack.c.h.b16 %v2216
        %v2530 = vunpack.c.l.b16 %v2217
        %v2531 = vunpack.c.h.b16 %v2217
        %v2532 = vunpack.c.l.b16 %v2218
        %v2533 = vunpack.c.h.b16 %v2218
        %v2534 = vunpack.c.l.b16 %v2219
        %v2535 = vunpack.c.h.b16 %v2219
        %v2536 = vunpack.c.l.b16 %v2220
        %v2537 = vunpack.c.h.b16 %v2220
        %v2538 = vunpack.c.l.b16 %v2221
        %v2539 = vunpack.c.h.b16 %v2221
        %v2540 = vunpack.c.l.b16 %v2222
        %v2541 = vunpack.c.h.b16 %v2222
        %v2542 = vunpack.c.l.b16 %v2223
        %v2543 = vunpack.c.h.b16 %v2223
        %v2544 = vunpack.c.l.b16 %v2224
        %v2545 = vunpack.c.h.b16 %v2224
        %v2546 = vunpack.c.l.b16 %v2225
        %v2547 = vunpack.c.h.b16 %v2225
        %v2548 = vunpack.c.l.b16 %v2226
        %v2549 = vunpack.c.h.b16 %v2226
        %v2550 = vunpack.c.l.b16 %v2227
        %v2551 = vunpack.c.h.b16 %v2227
        %v2552 = vunpack.c.l.b16 %v2228
        %v2553 = vunpack.c.h.b16 %v2228
        %v2554 = vunpack.c.l.b16 %v2229
        %v2555 = vunpack.c.h.b16 %v2229
        %v2556 = vunpack.c.l.b16 %v2230
        %v2557 = vunpack.c.h.b16 %v2230
        %v2558 = vunpack.c.l.b16 %v2231
        %v2559 = vunpack.c.h.b16 %v2231
        %v2560 = vunpack.c.l.b16 %v2232
        %v2561 = vunpack.c.h.b16 %v2232
        %v2562 = vunpack.c.l.b16 %v2233
        %v2563 = vunpack.c.h.b16 %v2233
        %v2564 = vunpack.c.l.b16 %v2234
        %v2565 = vunpack.c.h.b16 %v2234
        %v2566 = vunpack.c.l.b16 %v2235
        %v2567 = vunpack.c.h.b16 %v2235
        %v2568 = vunpack.c.l.b16 %v2236
        %v2569 = vunpack.c.h.b16 %v2236
        %v2570 = vunpack.c.l.b16 %v2237
        %v2571 = vunpack.c.h.b16 %v2237
        %v2572 = vunpack.c.l.b16 %v2238
        %v2573 = vunpack.c.h.b16 %v2238
        %v2574 = vunpack.c.l.b16 %v2239
        %v2575 = vunpack.c.h.b16 %v2239
        %v2576 = vunpack.c.l.b16 %v2240
        %v2577 = vunpack.c.h.b16 %v2240
        %v2578 = vunpack.c.l.b16 %v2241
        %v2579 = vunpack.c.h.b16 %v2241
        %v2580 = vunpack.c.l.b16 %v2242
        %v2581 = vunpack.c.h.b16 %v2242
        %v2582 = vunpack.c.l.b16 %v2243
        %v2583 = vunpack.c.h.b16 %v2243
        %v2584 = vunpack.c.l.b16 %v2244
        %v2585 = vunpack.c.h.b16 %v2244
        %v2586 = vunpack.c.l.b16 %v2245
        %v2587 = vunpack.c.h.b16 %v2245
        %v2588 = vunpack.c.l.b16 %v2246
        %v2589 = vunpack.c.h.b16 %v2246
        %v2590 = vunpack.c.l.b16 %v2247
        %v2591 = vunpack.c.h.b16 %v2247
        %v2592 = vunpack.c.l.b16 %v2248
        %v2593 = vunpack.c.h.b16 %v2248
        %v2594 = vunpack.c.l.b16 %v2249
        %v2595 = vunpack.c.h.b16 %v2249
        %v2596 = vunpack.c.l.b16 %v2250
        %v2597 = vunpack.c.h.b16 %v2250
        %v2598 = vunpack.c.l.b16 %v2251
        %v2599 = vunpack.c.h.b16 %v2251
        %v2600 = vunpack.c.l.b16 %v2252
        %v2601 = vunpack.c.h.b16 %v2252
        %v2602 = vunpack.c.l.b16 %v2253
        %v2603 = vunpack.c.h.b16 %v2253
        %v2604 = vunpack.c.l.b16 %v2254
        %v2605 = vunpack.c.h.b16 %v2254
        %v2606 = vunpack.c.l.b16 %v2255
        %v2607 = vunpack.c.h.b16 %v2255
        %v2608 = vunpack.c.l.b16 %v2256
        %v2609 = vunpack.c.h.b16 %v2256
        %v2610 = vunpack.c.l.b16 %v2257
        %v2611 = vunpack.c.h.b16 %v2257
        %v2612 = vunpack.c.l.b16 %v2258
        %v2613 = vunpack.c.h.b16 %v2258
        %v2614 = vunpack.c.l.b16 %v2259
        %v2615 = vunpack.c.h.b16 %v2259
        %v2616 = vunpack.c.l.b16 %v2260
        %v2617 = vunpack.c.h.b16 %v2260
        %v2618 = vunpack.c.l.b16 %v2261
        %v2619 = vunpack.c.h.b16 %v2261
        %v2620 = vunpack.c.l.b16 %v2262
        %v2621 = vunpack.c.h.b16 %v2262
        %v2622 = vunpack.c.l.b16 %v2263
        %v2623 = vunpack.c.h.b16 %v2263
        %v2624 = vunpack.c.l.b16 %v2264
        %v2625 = vunpack.c.h.b16 %v2264
        %v2626 = vunpack.c.l.b16 %v2265
        %v2627 = vunpack.c.h.b16 %v2265
        %v2628 = vunpack.c.l.b16 %v2266
        %v2629 = vunpack.c.h.b16 %v2266
        %v2630 = vunpack.c.l.b16 %v2267
        %v2631 = vunpack.c.h.b16 %v2267
        %v2632 = vunpack.c.l.b16 %v2268
        %v2633 = vunpack.c.h.b16 %v2268
        %v2634 = vunpack.c.l.b16 %v2269
        %v2635 = vunpack.c.h.b16 %v2269
        %v2636 = vunpack.c.l.b16 %v2270
        %v2637 = vunpack.c.h.b16 %v2270
        %v2638 = vunpack.c.l.b16 %v2271
        %v2639 = vunpack.c.h.b16 %v2271
        %v2640 = vunpack.c.l.b16 %v2272
        %v2641 = vunpack.c.h.b16 %v2272
        %v2642 = vunpack.c.l.b16 %v2273
        %v2643 = vunpack.c.h.b16 %v2273
        %v2644 = vunpack.c.l.b16 %v2274
        %v2645 = vunpack.c.h.b16 %v2274
        %v2646 = vunpack.c.l.b16 %v2275
        %v2647 = vunpack.c.h.b16 %v2275
        %v2648 = vunpack.c.l.b16 %v2276
        %v2649 = vunpack.c.h.b16 %v2276
        %v2650 = vunpack.c.l.b16 %v2277
        %v2651 = vunpack.c.h.b16 %v2277
        %v2652 = vunpack.c.l.b16 %v2278
        %v2653 = vunpack.c.h.b16 %v2278
        %v2654 = vunpack.c.l.b16 %v2279
        %v2655 = vunpack.c.h.b16 %v2279
        %v2656 = vunpack.c.l.b16 %v2280
        %v2657 = vunpack.c.h.b16 %v2280
        %v2658 = vunpack.c.l.b16 %v2281
        %v2659 = vunpack.c.h.b16 %v2281
        %v2660 = vunpack.c.l.b16 %v2282
        %v2661 = vunpack.c.h.b16 %v2282
        %v2662 = vunpack.c.l.b16 %v2283
        %v2663 = vunpack.c.h.b16 %v2283
        %v2664 = vunpack.c.l.b16 %v2284
        %v2665 = vunpack.c.h.b16 %v2284
        %v2666 = vunpack.c.l.b16 %v2285
        %v2667 = vunpack.c.h.b16 %v2285
        %v2668 = vunpack.c.l.b16 %v2286
        %v2669 = vunpack.c.h.b16 %v2286
        %v2670 = vunpack.c.l.b16 %v2287
        %v2671 = vunpack.c.h.b16 %v2287
        %v2672 = vunpack.c.l.b16 %v2288
        %v2673 = vunpack.c.h.b16 %v2288
        %v2674 = vunpack.c.l.b16 %v2289
        %v2675 = vunpack.c.h.b16 %v2289
        %v2676 = vunpack.c.l.b16 %v2290
        %v2677 = vunpack.c.h.b16 %v2290
        %v2678 = vunpack.c.l.b16 %v2291
        %v2679 = vunpack.c.h.b16 %v2291
        %v2680 = vunpack.c.l.b16 %v2292
        %v2681 = vunpack.c.h.b16 %v2292
        %v2682 = vunpack.c.l.b16 %v2293
        %v2683 = vunpack.c.h.b16 %v2293
        %v2684 = vunpack.c.l.b16 %v2294
        %v2685 = vunpack.c.h.b16 %v2294
        %v2686 = vunpack.c.l.b16 %v2295
        %v2687 = vunpack.c.h.b16 %v2295
        %v2688 = vunpack.c.l.b16 %v2296
        %v2689 = vunpack.c.h.b16 %v2296
        %v2690 = vunpack.c.l.b16 %v2297
        %v2691 = vunpack.c.h.b16 %v2297
        %v2692 = vpack.c.b16 %v2440, %v2436
        %v2693 = vpack.c.b16 %v2441, %v2437
        %v2694 = vpack.c.b16 %v2442, %v2438
        %v2695 = vpack.c.b16 %v2443, %v2439
        %v2696 = vpack.c.b16 %v2448, %v2444
        %v2697 = vpack.c.b16 %v2449, %v2445
        %v2698 = vpack.c.b16 %v2450, %v2446
        %v2699 = vpack.c.b16 %v2451, %v2447
        %v2700 = vpack.c.b16 %v2456, %v2452
        %v2701 = vpack.c.b16 %v2457, %v2453
        %v2702 = vpack.c.b16 %v2458, %v2454
        %v2703 = vpack.c.b16 %v2459, %v2455
        %v2704 = vpack.c.b16 %v2464, %v2460
        %v2705 = vpack.c.b16 %v2465, %v2461
        %v2706 = vpack.c.b16 %v2466, %v2462
        %v2707 = vpack.c.b16 %v2467, %v2463
        %v2708 = vpack.c.b16 %v2472, %v2468
        %v2709 = vpack.c.b16 %v2473, %v2469
        %v2710 = vpack.c.b16 %v2474, %v2470
        %v2711 = vpack.c.b16 %v2475, %v2471
        %v2712 = vpack.c.b16 %v2480, %v2476
        %v2713 = vpack.c.b16 %v2481, %v2477
        %v2714 = vpack.c.b16 %v2482, %v2478
        %v2715 = vpack.c.b16 %v2483, %v2479
        %v2716 = vpack.c.b16 %v2488, %v2484
        %v2717 = vpack.c.b16 %v2489, %v2485
        %v2718 = vpack.c.b16 %v2490, %v2486
        %v2719 = vpack.c.b16 %v2491, %v2487
        %v2720 = vpack.c.b16 %v2496, %v2492
        %v2721 = vpack.c.b16 %v2497, %v2493
        %v2722 = vpack.c.b16 %v2498, %v2494
        %v2723 = vpack.c.b16 %v2499, %v2495
        %v2724 = vpack.c.b16 %v2504, %v2500
        %v2725 = vpack.c.b16 %v2505, %v2501
        %v2726 = vpack.c.b16 %v2506, %v2502
        %v2727 = vpack.c.b16 %v2507, %v2503
        %v2728 = vpack.c.b16 %v2512, %v2508
        %v2729 = vpack.c.b16 %v2513, %v2509
        %v2730 = vpack.c.b16 %v2514, %v2510
        %v2731 = vpack.c.b16 %v2515, %v2511
        %v2732 = vpack.c.b16 %v2520, %v2516
        %v2733 = vpack.c.b16 %v2521, %v2517
        %v2734 = vpack.c.b16 %v2522, %v2518
        %v2735 = vpack.c.b16 %v2523, %v2519
        %v2736 = vpack.c.b16 %v2528, %v2524
        %v2737 = vpack.c.b16 %v2529, %v2525
        %v2738 = vpack.c.b16 %v2530, %v2526
        %v2739 = vpack.c.b16 %v2531, %v2527
        %v2740 = vpack.c.b16 %v2536, %v2532
        %v2741 = vpack.c.b16 %v2537, %v2533
        %v2742 = vpack.c.b16 %v2538, %v2534
        %v2743 = vpack.c.b16 %v2539, %v2535
        %v2744 = vpack.c.b16 %v2544, %v2540
        %v2745 = vpack.c.b16 %v2545, %v2541
        %v2746 = vpack.c.b16 %v2546, %v2542
        %v2747 = vpack.c.b16 %v2547, %v2543
        %v2748 = vpack.c.b16 %v2552, %v2548
        %v2749 = vpack.c.b16 %v2553, %v2549
        %v2750 = vpack.c.b16 %v2554, %v2550
        %v2751 = vpack.c.b16 %v2555, %v2551
        %v2752 = vpack.c.b16 %v2560, %v2556
        %v2753 = vpack.c.b16 %v2561, %v2557
        %v2754 = vpack.c.b16 %v2562, %v2558
        %v2755 = vpack.c.b16 %v2563, %v2559
        %v2756 = vpack.c.b16 %v2568, %v2564
        %v2757 = vpack.c.b16 %v2569, %v2565
        %v2758 = vpack.c.b16 %v2570, %v2566
        %v2759 = vpack.c.b16 %v2571, %v2567
        %v2760 = vpack.c.b16 %v2576, %v2572
        %v2761 = vpack.c.b16 %v2577, %v2573
        %v2762 = vpack.c.b16 %v2578, %v2574
        %v2763 = vpack.c.b16 %v2579, %v2575
        %v2764 = vpack.c.b16 %v2584, %v2580
        %v2765 = vpack.c.b16 %v2585, %v2581
        %v2766 = vpack.c.b16 %v2586, %v2582
        %v2767 = vpack.c.b16 %v2587, %v2583
        %v2768 = vpack.c.b16 %v2592, %v2588
        %v2769 = vpack.c.b16 %v2593, %v2589
        %v2770 = vpack.c.b16 %v2594, %v2590
        %v2771 = vpack.c.b16 %v2595, %v2591
        %v2772 = vpack.c.b16 %v2600, %v2596
        %v2773 = vpack.c.b16 %v2601, %v2597
        %v2774 = vpack.c.b16 %v2602, %v2598
        %v2775 = vpack.c.b16 %v2603, %v2599
        %v2776 = vpack.c.b16 %v2608, %v2604
        %v2777 = vpack.c.b16 %v2609, %v2605
        %v2778 = vpack.c.b16 %v2610, %v2606
        %v2779 = vpack.c.b16 %v2611, %v2607
        %v2780 = vpack.c.b16 %v2616, %v2612
        %v2781 = vpack.c.b16 %v2617, %v2613
        %v2782 = vpack.c.b16 %v2618, %v2614
        %v2783 = vpack.c.b16 %v2619, %v2615
        %v2784 = vpack.c.b16 %v2624, %v2620
        %v2785 = vpack.c.b16 %v2625, %v2621
        %v2786 = vpack.c.b16 %v2626, %v2622
        %v2787 = vpack.c.b16 %v2627, %v2623
        %v2788 = vpack.c.b16 %v2632, %v2628
        %v2789 = vpack.c.b16 %v2633, %v2629
        %v2790 = vpack.c.b16 %v2634, %v2630
        %v2791 = vpack.c.b16 %v2635, %v2631
        %v2792 = vpack.c.b16 %v2640, %v2636
        %v2793 = vpack.c.b16 %v2641, %v2637
        %v2794 = vpack.c.b16 %v2642, %v2638
        %v2795 = vpack.c.b16 %v2643, %v2639
        %v2796 = vpack.c.b16 %v2648, %v2644
        %v2797 = vpack.c.b16 %v2649, %v2645
        %v2798 = vpack.c.b16 %v2650, %v2646
        %v2799 = vpack.c.b16 %v2651, %v2647
        %v2800 = vpack.c.b16 %v2656, %v2652
        %v2801 = vpack.c.b16 %v2657, %v2653
        %v2802 = vpack.c.b16 %v2658, %v2654
        %v2803 = vpack.c.b16 %v2659, %v2655
        %v2804 = vpack.c.b16 %v2664, %v2660
        %v2805 = vpack.c.b16 %v2665, %v2661
        %v2806 = vpack.c.b16 %v2666, %v2662
        %v2807 = vpack.c.b16 %v2667, %v2663
        %v2808 = vpack.c.b16 %v2672, %v2668
        %v2809 = vpack.c.b16 %v2673, %v2669
        %v2810 = vpack.c.b16 %v2674, %v2670
        %v2811 = vpack.c.b16 %v2675, %v2671
        %v2812 = vpack.c.b16 %v2680, %v2676
        %v2813 = vpack.c.b16 %v2681, %v2677
        %v2814 = vpack.c.b16 %v2682, %v2678
        %v2815 = vpack.c.b16 %v2683, %v2679
        %v2816 = vpack.c.b16 %v2688, %v2684
        %v2817 = vpack.c.b16 %v2689, %v2685
        %v2818 = vpack.c.b16 %v2690, %v2686
        %v2819 = vpack.c.b16 %v2691, %v2687
        %2948 = vmatpush.bf16.msra.mxu0 %v2720
        %2949 = vmatpush.bf16.msra.mxu0 %v2716
        %2950 = vmatpush.bf16.msra.mxu0 %v2712
        %2951 = vmatpush.bf16.msra.mxu0 %v2708
        %2952 = vmatpush.bf16.msra.mxu0 %v2704
        %2953 = vmatpush.bf16.msra.mxu0 %v2700
        %2954 = vmatpush.bf16.msra.mxu0 %v2696
        %2955 = vmatpush.bf16.msra.mxu0 %v2692
        %2956 = vmatmul.bf16.gmra.mxu0 %v2162
        %v2957 = vpop.f32.mrf.mxu0
        %v2958 = vadd.f32 %v2300, %v2957
        %v2959 = vpop.f32.mrf.mxu0
        %v2960 = vadd.f32 %v2300, %v2959
        %2961 = vmatmul.bf16.gmra.mxu0 %v2166
        %v2962 = vpop.f32.mrf.mxu0
        %v2963 = vadd.f32 %v2300, %v2962
        %v2964 = vpop.f32.mrf.mxu0
        %2965 = vdwg.mxu0
        %2966 = vmatpush.bf16.msra.mxu0 %v2752
        %2967 = vmatpush.bf16.msra.mxu0 %v2748
        %2968 = vmatpush.bf16.msra.mxu0 %v2744
        %2969 = vmatpush.bf16.msra.mxu0 %v2740
        %2970 = vmatpush.bf16.msra.mxu0 %v2736
        %2971 = vmatpush.bf16.msra.mxu0 %v2732
        %2972 = vmatpush.bf16.msra.mxu0 %v2728
        %2973 = vmatpush.bf16.msra.mxu0 %v2724
        %2974 = vmatmul.bf16.gmra.mxu0 %v2163
        %v2975 = vpop.f32.mrf.mxu0
        %v2976 = vadd.f32 %v2958, %v2975
        %v2977 = vpop.f32.mrf.mxu0
        %v2978 = vadd.f32 %v2960, %v2977
        %2979 = vmatmul.bf16.gmra.mxu0 %v2167
        %v2980 = vpop.f32.mrf.mxu0
        %v2981 = vadd.f32 %v2963, %v2980
        %v2982 = vpop.f32.mrf.mxu0
        %2983 = vdwg.mxu0
        %2984 = vmatpush.bf16.msra.mxu0 %v2784
        %2985 = vmatpush.bf16.msra.mxu0 %v2780
        %2986 = vmatpush.bf16.msra.mxu0 %v2776
        %2987 = vmatpush.bf16.msra.mxu0 %v2772
        %2988 = vmatpush.bf16.msra.mxu0 %v2768
        %2989 = vmatpush.bf16.msra.mxu0 %v2764
        %2990 = vmatpush.bf16.msra.mxu0 %v2760
        %2991 = vmatpush.bf16.msra.mxu0 %v2756
        %2992 = vmatmul.bf16.gmra.mxu0 %v2164
        %v2993 = vpop.f32.mrf.mxu0
        %v2994 = vadd.f32 %v2976, %v2993
        %v2995 = vpop.f32.mrf.mxu0
        %v2996 = vadd.f32 %v2978, %v2995
        %2997 = vmatmul.bf16.gmra.mxu0 %v2168
        %v2998 = vpop.f32.mrf.mxu0
        %v2999 = vadd.f32 %v2981, %v2998
        %v3000 = vpop.f32.mrf.mxu0
        %3001 = vdwg.mxu0
        %3002 = vmatpush.bf16.msra.mxu0 %v2816
        %3003 = vmatpush.bf16.msra.mxu0 %v2812
        %3004 = vmatpush.bf16.msra.mxu0 %v2808
        %3005 = vmatpush.bf16.msra.mxu0 %v2804
        %3006 = vmatpush.bf16.msra.mxu0 %v2800
        %3007 = vmatpush.bf16.msra.mxu0 %v2796
        %3008 = vmatpush.bf16.msra.mxu0 %v2792
        %3009 = vmatpush.bf16.msra.mxu0 %v2788
        %3010 = vmatmul.bf16.gmra.mxu0 %v2165
        %v3011 = vpop.f32.mrf.mxu0
        %v3012 = vadd.f32 %v2994, %v3011
        %v3013 = vpop.f32.mrf.mxu0
        %v3014 = vadd.f32 %v2996, %v3013
        %3015 = vmatmul.bf16.gmra.mxu0 %v2169
        %v3016 = vpop.f32.mrf.mxu0
        %v3017 = vadd.f32 %v2999, %v3016
        %v3018 = vpop.f32.mrf.mxu0
        %3019 = vdwg.mxu0
        %3020 = vmatpush.bf16.msra.mxu0 %v2721
        %3021 = vmatpush.bf16.msra.mxu0 %v2717
        %3022 = vmatpush.bf16.msra.mxu0 %v2713
        %3023 = vmatpush.bf16.msra.mxu0 %v2709
        %3024 = vmatpush.bf16.msra.mxu0 %v2705
        %3025 = vmatpush.bf16.msra.mxu0 %v2701
        %3026 = vmatpush.bf16.msra.mxu0 %v2697
        %3027 = vmatpush.bf16.msra.mxu0 %v2693
        %3028 = vmatmul.bf16.gmra.mxu0 %v2162
        %v3029 = vpop.f32.mrf.mxu0
        %v3030 = vadd.f32 %v2301, %v3029
        %v3031 = vpop.f32.mrf.mxu0
        %v3032 = vadd.f32 %v2301, %v3031
        %3033 = vmatmul.bf16.gmra.mxu0 %v2166
        %v3034 = vpop.f32.mrf.mxu0
        %v3035 = vadd.f32 %v2301, %v3034
        %v3036 = vpop.f32.mrf.mxu0
        %3037 = vdwg.mxu0
        %3038 = vmatpush.bf16.msra.mxu0 %v2753
        %3039 = vmatpush.bf16.msra.mxu0 %v2749
        %3040 = vmatpush.bf16.msra.mxu0 %v2745
        %3041 = vmatpush.bf16.msra.mxu0 %v2741
        %3042 = vmatpush.bf16.msra.mxu0 %v2737
        %3043 = vmatpush.bf16.msra.mxu0 %v2733
        %3044 = vmatpush.bf16.msra.mxu0 %v2729
        %3045 = vmatpush.bf16.msra.mxu0 %v2725
        %3046 = vmatmul.bf16.gmra.mxu0 %v2163
        %v3047 = vpop.f32.mrf.mxu0
        %v3048 = vadd.f32 %v3030, %v3047
        %v3049 = vpop.f32.mrf.mxu0
        %v3050 = vadd.f32 %v3032, %v3049
        %3051 = vmatmul.bf16.gmra.mxu0 %v2167
        %v3052 = vpop.f32.mrf.mxu0
        %v3053 = vadd.f32 %v3035, %v3052
        %v3054 = vpop.f32.mrf.mxu0
        %3055 = vdwg.mxu0
        %3056 = vmatpush.bf16.msra.mxu0 %v2785
        %3057 = vmatpush.bf16.msra.mxu0 %v2781
        %3058 = vmatpush.bf16.msra.mxu0 %v2777
        %3059 = vmatpush.bf16.msra.mxu0 %v2773
        %3060 = vmatpush.bf16.msra.mxu0 %v2769
        %3061 = vmatpush.bf16.msra.mxu0 %v2765
        %3062 = vmatpush.bf16.msra.mxu0 %v2761
        %3063 = vmatpush.bf16.msra.mxu0 %v2757
        %3064 = vmatmul.bf16.gmra.mxu0 %v2164
        %v3065 = vpop.f32.mrf.mxu0
        %v3066 = vadd.f32 %v3048, %v3065
        %v3067 = vpop.f32.mrf.mxu0
        %v3068 = vadd.f32 %v3050, %v3067
        %3069 = vmatmul.bf16.gmra.mxu0 %v2168
        %v3070 = vpop.f32.mrf.mxu0
        %v3071 = vadd.f32 %v3053, %v3070
        %v3072 = vpop.f32.mrf.mxu0
        %3073 = vdwg.mxu0
        %3074 = vmatpush.bf16.msra.mxu0 %v2817
        %3075 = vmatpush.bf16.msra.mxu0 %v2813
        %3076 = vmatpush.bf16.msra.mxu0 %v2809
        %3077 = vmatpush.bf16.msra.mxu0 %v2805
        %3078 = vmatpush.bf16.msra.mxu0 %v2801
        %3079 = vmatpush.bf16.msra.mxu0 %v2797
        %3080 = vmatpush.bf16.msra.mxu0 %v2793
        %3081 = vmatpush.bf16.msra.mxu0 %v2789
        %3082 = vmatmul.bf16.gmra.mxu0 %v2165
        %v3083 = vpop.f32.mrf.mxu0
        %v3084 = vadd.f32 %v3066, %v3083
        %v3085 = vpop.f32.mrf.mxu0
        %v3086 = vadd.f32 %v3068, %v3085
        %3087 = vmatmul.bf16.gmra.mxu0 %v2169
        %v3088 = vpop.f32.mrf.mxu0
        %v3089 = vadd.f32 %v3071, %v3088
        %v3090 = vpop.f32.mrf.mxu0
        %3091 = vdwg.mxu0
        %3092 = vmatpush.bf16.msra.mxu0 %v2722
        %3093 = vmatpush.bf16.msra.mxu0 %v2718
        %3094 = vmatpush.bf16.msra.mxu0 %v2714
        %3095 = vmatpush.bf16.msra.mxu0 %v2710
        %3096 = vmatpush.bf16.msra.mxu0 %v2706
        %3097 = vmatpush.bf16.msra.mxu0 %v2702
        %3098 = vmatpush.bf16.msra.mxu0 %v2698
        %3099 = vmatpush.bf16.msra.mxu0 %v2694
        %3100 = vmatmul.bf16.gmra.mxu0 %v2162
        %v3101 = vpop.f32.mrf.mxu0
        %v3102 = vadd.f32 %v2302, %v3101
        %v3103 = vpop.f32.mrf.mxu0
        %v3104 = vadd.f32 %v2302, %v3103
        %3105 = vmatmul.bf16.gmra.mxu0 %v2166
        %v3106 = vpop.f32.mrf.mxu0
        %v3107 = vadd.f32 %v2302, %v3106
        %v3108 = vpop.f32.mrf.mxu0
        %3109 = vdwg.mxu0
        %3110 = vmatpush.bf16.msra.mxu0 %v2754
        %3111 = vmatpush.bf16.msra.mxu0 %v2750
        %3112 = vmatpush.bf16.msra.mxu0 %v2746
        %3113 = vmatpush.bf16.msra.mxu0 %v2742
        %3114 = vmatpush.bf16.msra.mxu0 %v2738
        %3115 = vmatpush.bf16.msra.mxu0 %v2734
        %3116 = vmatpush.bf16.msra.mxu0 %v2730
        %3117 = vmatpush.bf16.msra.mxu0 %v2726
        %3118 = vmatmul.bf16.gmra.mxu0 %v2163
        %v3119 = vpop.f32.mrf.mxu0
        %v3120 = vadd.f32 %v3102, %v3119
        %v3121 = vpop.f32.mrf.mxu0
        %v3122 = vadd.f32 %v3104, %v3121
        %3123 = vmatmul.bf16.gmra.mxu0 %v2167
        %v3124 = vpop.f32.mrf.mxu0
        %v3125 = vadd.f32 %v3107, %v3124
        %v3126 = vpop.f32.mrf.mxu0
        %3127 = vdwg.mxu0
        %3128 = vmatpush.bf16.msra.mxu0 %v2786
        %3129 = vmatpush.bf16.msra.mxu0 %v2782
        %3130 = vmatpush.bf16.msra.mxu0 %v2778
        %3131 = vmatpush.bf16.msra.mxu0 %v2774
        %3132 = vmatpush.bf16.msra.mxu0 %v2770
        %3133 = vmatpush.bf16.msra.mxu0 %v2766
        %3134 = vmatpush.bf16.msra.mxu0 %v2762
        %3135 = vmatpush.bf16.msra.mxu0 %v2758
        %3136 = vmatmul.bf16.gmra.mxu0 %v2164
        %v3137 = vpop.f32.mrf.mxu0
        %v3138 = vadd.f32 %v3120, %v3137
        %v3139 = vpop.f32.mrf.mxu0
        %v3140 = vadd.f32 %v3122, %v3139
        %3141 = vmatmul.bf16.gmra.mxu0 %v2168
        %v3142 = vpop.f32.mrf.mxu0
        %v3143 = vadd.f32 %v3125, %v3142
        %v3144 = vpop.f32.mrf.mxu0
        %3145 = vdwg.mxu0
        %3146 = vmatpush.bf16.msra.mxu0 %v2818
        %3147 = vmatpush.bf16.msra.mxu0 %v2814
        %3148 = vmatpush.bf16.msra.mxu0 %v2810
        %3149 = vmatpush.bf16.msra.mxu0 %v2806
        %3150 = vmatpush.bf16.msra.mxu0 %v2802
        %3151 = vmatpush.bf16.msra.mxu0 %v2798
        %3152 = vmatpush.bf16.msra.mxu0 %v2794
        %3153 = vmatpush.bf16.msra.mxu0 %v2790
        %3154 = vmatmul.bf16.gmra.mxu0 %v2165
        %v3155 = vpop.f32.mrf.mxu0
        %v3156 = vadd.f32 %v3138, %v3155
        %v3157 = vpop.f32.mrf.mxu0
        %v3158 = vadd.f32 %v3140, %v3157
        %3159 = vmatmul.bf16.gmra.mxu0 %v2169
        %v3160 = vpop.f32.mrf.mxu0
        %v3161 = vadd.f32 %v3143, %v3160
        %v3162 = vpop.f32.mrf.mxu0
        %3163 = vdwg.mxu0
        %3164 = vmatpush.bf16.msra.mxu0 %v2723
        %3165 = vmatpush.bf16.msra.mxu0 %v2719
        %3166 = vmatpush.bf16.msra.mxu0 %v2715
        %3167 = vmatpush.bf16.msra.mxu0 %v2711
        %3168 = vmatpush.bf16.msra.mxu0 %v2707
        %3169 = vmatpush.bf16.msra.mxu0 %v2703
        %3170 = vmatpush.bf16.msra.mxu0 %v2699
        %3171 = vmatpush.bf16.msra.mxu0 %v2695
        %3172 = vmatmul.bf16.gmra.mxu0 %v2162
        %v3173 = vpop.f32.mrf.mxu0
        %v3174 = vadd.f32 %v2303, %v3173
        %v3175 = vpop.f32.mrf.mxu0
        %v3176 = vadd.f32 %v2303, %v3175
        %3177 = vmatmul.bf16.gmra.mxu0 %v2166
        %v3178 = vpop.f32.mrf.mxu0
        %v3179 = vadd.f32 %v2303, %v3178
        %v3180 = vpop.f32.mrf.mxu0
        %3181 = vdwg.mxu0
        %3182 = vmatpush.bf16.msra.mxu0 %v2755
        %3183 = vmatpush.bf16.msra.mxu0 %v2751
        %3184 = vmatpush.bf16.msra.mxu0 %v2747
        %3185 = vmatpush.bf16.msra.mxu0 %v2743
        %3186 = vmatpush.bf16.msra.mxu0 %v2739
        %3187 = vmatpush.bf16.msra.mxu0 %v2735
        %3188 = vmatpush.bf16.msra.mxu0 %v2731
        %3189 = vmatpush.bf16.msra.mxu0 %v2727
        %3190 = vmatmul.bf16.gmra.mxu0 %v2163
        %v3191 = vpop.f32.mrf.mxu0
        %v3192 = vadd.f32 %v3174, %v3191
        %v3193 = vpop.f32.mrf.mxu0
        %v3194 = vadd.f32 %v3176, %v3193
        %3195 = vmatmul.bf16.gmra.mxu0 %v2167
        %v3196 = vpop.f32.mrf.mxu0
        %v3197 = vadd.f32 %v3179, %v3196
        %v3198 = vpop.f32.mrf.mxu0
        %3199 = vdwg.mxu0
        %3200 = vmatpush.bf16.msra.mxu0 %v2787
        %3201 = vmatpush.bf16.msra.mxu0 %v2783
        %3202 = vmatpush.bf16.msra.mxu0 %v2779
        %3203 = vmatpush.bf16.msra.mxu0 %v2775
        %3204 = vmatpush.bf16.msra.mxu0 %v2771
        %3205 = vmatpush.bf16.msra.mxu0 %v2767
        %3206 = vmatpush.bf16.msra.mxu0 %v2763
        %3207 = vmatpush.bf16.msra.mxu0 %v2759
        %3208 = vmatmul.bf16.gmra.mxu0 %v2164
        %v3209 = vpop.f32.mrf.mxu0
        %v3210 = vadd.f32 %v3192, %v3209
        %v3211 = vpop.f32.mrf.mxu0
        %v3212 = vadd.f32 %v3194, %v3211
        %3213 = vmatmul.bf16.gmra.mxu0 %v2168
        %v3214 = vpop.f32.mrf.mxu0
        %v3215 = vadd.f32 %v3197, %v3214
        %v3216 = vpop.f32.mrf.mxu0
        %3217 = vdwg.mxu0
        %3218 = vmatpush.bf16.msra.mxu0 %v2819
        %3219 = vmatpush.bf16.msra.mxu0 %v2815
        %3220 = vmatpush.bf16.msra.mxu0 %v2811
        %3221 = vmatpush.bf16.msra.mxu0 %v2807
        %3222 = vmatpush.bf16.msra.mxu0 %v2803
        %3223 = vmatpush.bf16.msra.mxu0 %v2799
        %3224 = vmatpush.bf16.msra.mxu0 %v2795
        %3225 = vmatpush.bf16.msra.mxu0 %v2791
        %3226 = vmatmul.bf16.gmra.mxu0 %v2165
        %v3227 = vpop.f32.mrf.mxu0
        %v3228 = vadd.f32 %v3210, %v3227
        %v3229 = vpop.f32.mrf.mxu0
        %v3230 = vadd.f32 %v3212, %v3229
        %3231 = vmatmul.bf16.gmra.mxu0 %v2169
        %v3232 = vpop.f32.mrf.mxu0
        %v3233 = vadd.f32 %v3215, %v3232
        %v3234 = vpop.f32.mrf.mxu0
        %3235 = vdwg.mxu0
        %v3236 = vmax.f32 %v3012, 0.0
        %v3237 = vmax.f32 %v3084, 0.0
        %v3238 = vmax.f32 %v3156, 0.0
        %v3239 = vmax.f32 %v3228, 0.0
        %v3240 = vmax.f32 %v3014, 0.0
        %v3241 = vmax.f32 %v3086, 0.0
        %v3242 = vmax.f32 %v3158, 0.0
        %v3243 = vmax.f32 %v3230, 0.0
        %v3244 = vmax.f32 %v3017, 0.0
        %v3245 = vmax.f32 %v3089, 0.0
        %v3246 = vmax.f32 %v3161, 0.0
        %v3247 = vmax.f32 %v3233, 0.0
        %v3248 = vld [vmem:[#allocation10] sm:$0xf]
        %v3250 = vperm.slane %v3248, 0
        %v3251 = vperm.slane %v3248, 1
        %v3252 = vperm.slane %v3248, 2
        %v3253 = vperm.slane %v3248, 3
        %v3258 = vmul.f32 %v3236, %v3250
        %v3259 = vmul.f32 %v3237, %v3251
        %v3260 = vmul.f32 %v3238, %v3252
        %v3261 = vmul.f32 %v3239, %v3253
        %v3262 = vmul.f32 %v3240, %v3250
        %v3263 = vmul.f32 %v3241, %v3251
        %v3264 = vmul.f32 %v3242, %v3252
        %v3265 = vmul.f32 %v3243, %v3253
        %v3266 = vmul.f32 %v3244, %v3250
        %v3267 = vmul.f32 %v3245, %v3251
        %v3268 = vmul.f32 %v3246, %v3252
        %v3269 = vmul.f32 %v3247, %v3253
        %v3270 = vadd.f32 %v3258, %v3259
        %v3271 = vadd.f32 %v3270, %v3260
        %v3272 = vadd.f32 %v3271, %v3261
        %3273 = vadd.xlane.f32.xlu0 %v3272
        %v3274 = vpop.xlane.xlu0 %3273
        %v3275 = vadd.f32 %v3262, %v3263
        %v3276 = vadd.f32 %v3275, %v3264
        %v3277 = vadd.f32 %v3276, %v3265
        %3278 = vadd.xlane.f32.xlu0 %v3277
        %v3279 = vpop.xlane.xlu0 %3278
        %v3280 = vadd.f32 %v3266, %v3267
        %v3281 = vadd.f32 %v3280, %v3268
        %v3282 = vadd.f32 %v3281, %v3269
        %3283 = vadd.xlane.f32.xlu0 %v3282
        %v3284 = vpop.xlane.xlu0 %3283
        %v3285 = vld [vmem:[%s537] sm:$0xff]
        %v3286 = vld [vmem:[%s537 + $0x8] sm:$0xff]
        %v3287 = vld [vmem:[%s537 + $0x10] sm:$0xff]
        %vm3288 = vcmask 64512
        %v3289 = vsel %vm3288, %v3285, 0.0
        %3290 = vadd.xlane.f32.xlu0 %v3289
        %v3291 = vpop.xlane.xlu0 %3290
        %v3292 = vsel %vm3288, %v3286, 0.0
        %3293 = vadd.xlane.f32.xlu0 %v3292
        %v3294 = vpop.xlane.xlu0 %3293
        %v3295 = vsel %vm3288, %v3287, 0.0
        %3296 = vadd.xlane.f32.xlu0 %v3295
        %v3297 = vpop.xlane.xlu0 %3296
        %v3298 = vadd.f32 %v3291, %v3274
        %v3299 = vadd.f32 %v3294, %v3279
        %v3300 = vadd.f32 %v3297, %v3284
        %v3301 = vld [vmem:[#allocation2] sm:$0x1]
        %v3303 = vperm.slane %v3301, 0
        %v3305 = vadd.f32 %v3298, %v3303
        %v3306 = vadd.f32 %v3299, %v3303
        %v3307 = vadd.f32 %v3300, %v3303
        %vm3308 = vcmask 7168
        %3309 = vst.msk [vmem:[%s543] sm:$0xff] %vm3308, %v3305
        %3310 = vst.msk [vmem:[%s543 + $0x8] sm:$0xff] %vm3308, %v3306
        %3311 = vst.msk [vmem:[%s543 + $0x10] sm:$0xff] %vm3308, %v3307
        %s3312 = smul.u32 3, %s29
        %p3313 = scmp.lt.s32.totalorder %s3312, 5
        %s3314 = scalar_select %p3313, %s3312, 5
        %s3315 = smul.addr %s3314, 8
        %s3316 = scalar_lea.vmem %s13, %s3315
        // Predicated region
        $region93: #{tpu_custom_call.1} parent=71 // pred_check
          %p3317 = pneg %p330
        $region94: #{tpu_custom_call.1} parent=71 // pred_check_branch
          %3319 = sbr.rel (%p3317) target = $region96
        $region95: #{tpu_custom_call.1} parent=71 // pred_region
          %s3320 = smul.u32 3, %s29
        $region96: #{tpu_custom_call.1} parent=71 // pred_fallthru
          _
      $region72: #{tpu_custom_call.1} parent=5 // pred_fallthru
        _
      %p3321 = scmp.le.s32.totalorder 2, %s24
      // Predicated region
      $region97: #{tpu_custom_call.1} parent=5 // pred_check
        %p3322 = pneg %p3321
      $region98: #{tpu_custom_call.1} parent=5 // pred_check_branch
        %3324 = sbr.rel (%p3322) target = $region100
      $region99: #{tpu_custom_call.1} parent=5 // pred_region
        %s3325 = ssub.s32 %s24, 2
        // Predicated region
        $region101: #{tpu_custom_call.1} parent=99 // pred_check
          %p3326 = pneg %p336
        $region102: #{tpu_custom_call.1} parent=99 // pred_check_branch
          %3328 = sbr.rel (%p3326) target = $region104
        $region103: #{tpu_custom_call.1} parent=99 // pred_region
          %s3329 = smul.u32 3, %s30
          %p3330 = scmp.lt.s32.totalorder %s3329, 5
          %s3331 = scalar_select %p3330, %s3329, 5
          %s3332 = smul.addr %s3331, 8
          %s3333 = scalar_lea.vmem %s13, %s3332
        $region104: #{tpu_custom_call.1} parent=99 // pred_fallthru
          _
      $region100: #{tpu_custom_call.1} parent=5 // pred_fallthru
        _
    $region6: #{tpu_custom_call.1} parent=1 // loop_footer
      %s28 = sadd.s32 1, %s24
    $region7: #{tpu_custom_call.1} parent=1 // loop_footer_branch
      %23 = sbr.rel target = $region3
    $region8: #{tpu_custom_call.1} parent=1 // loop_exit
      _
    %3334 = vsyncpa [#allocation4], 1
    %s3335 = scalar_lea.sflag [#allocation4], 1
    %3336 = vsyncpa %s3335, 1
    %3337 = vsyncpa [#allocation6], 1
    %3338 = vsyncpa [#allocation9], 1

</llo_original>
